<compile_context>
chip_gen: v7x
topology: tpu7x:2x2x1
jax: 0.10.0
libtpu: 0.0.40
codegen_flags: <defaults>
</compile_context>

<pallas_src>
import functools

import jax
import jax.numpy as jnp
from jax import lax
from jax.experimental import pallas as pl
from jax.experimental.pallas import tpu as pltpu


def _mhsa_kernel(x_ref, gamma_ref, beta_ref,
                 wq_ref, bq_ref, wk_ref, bk_ref, wv_ref, bv_ref, wo_ref, bo_ref,
                 o_ref,
                 xn_ref, k_ref, v_ref, ctx_ref,
                 *, num_heads, head_pad, eps):
    qi = pl.program_id(1)
    tq = o_ref.shape[1]
    Dp = head_pad

    # ---- once per batch: LayerNorm over the full sequence + fused K/V projection ----
    @pl.when(qi == 0)
    def _():
        x = x_ref[0].astype(jnp.float32)                         # (S, E)
        mean = jnp.mean(x, axis=-1, keepdims=True)
        xc = x - mean
        var = jnp.mean(xc * xc, axis=-1, keepdims=True)          # biased var (PyTorch LN)
        xn = (xc * lax.rsqrt(var + eps)) * gamma_ref[...] + beta_ref[...]
        xn_bf = xn.astype(jnp.bfloat16)
        xn_ref[...] = xn_bf
        # Separate K and V dots keep only one (S, H*Dp) f32 temporary live at a time.
        k_ref[...] = (jnp.dot(xn_bf, wk_ref[...], preferred_element_type=jnp.float32)
                      + bk_ref[...]).astype(jnp.bfloat16)
        v_ref[...] = (jnp.dot(xn_bf, wv_ref[...], preferred_element_type=jnp.float32)
                      + bv_ref[...]).astype(jnp.bfloat16)

    # ---- per query tile ----
    row0 = qi * tq
    if tq % 8 == 0:
        row0 = pl.multiple_of(row0, 8)
    xq = xn_ref[pl.ds(row0, tq), :]                              # (tq, E) bf16, already LN'd
    # 1/sqrt(Dh) is already folded into wq / bq.
    q = (jnp.dot(xq, wq_ref[...], preferred_element_type=jnp.float32)
         + bq_ref[...]).astype(jnp.bfloat16)                     # (tq, H*Dp)

    k = k_ref[...]                                               # (S, H*Dp) bf16
    v = v_ref[...]

    qkt_dims = (((1,), (1,)), ((), ()))                          # q @ k^T (contract over Dp)
    # Static loop: num_heads is small; every slab below is a 128-lane-aligned slice.
    # (For very large num_heads, switch to lax.fori_loop to bound score/prob live ranges.)
    for h in range(num_heads):
        sl = slice(h * Dp, (h + 1) * Dp)
        s = lax.dot_general(q[:, sl], k[:, sl], qkt_dims,
                            preferred_element_type=jnp.float32)  # (tq, S) f32
        s = s - jnp.max(s, axis=-1, keepdims=True)
        p = jnp.exp(s)
        p = p * pl.reciprocal(jnp.sum(p, axis=-1, keepdims=True), approx=True)
        ctx_ref[:, sl] = jnp.dot(p.astype(jnp.bfloat16), v[:, sl],
                                 preferred_element_type=jnp.float32
                                 ).astype(jnp.bfloat16)          # full-128-lane store

    # Single full-width output projection (padded rows of wo are zero).
    y = jnp.dot(ctx_ref[...], wo_ref[...],
                preferred_element_type=jnp.float32) + bo_ref[...]  # (tq, E) f32
    o_ref[0] = y.astype(o_ref.dtype)
    # TODO(synk): attention dropout (attn_dropout > 0, training mode) is not modeled;
    # the module default is dropout=0 / eval, which this matches.


def _pad_heads(w_t, b, num_heads, Dh, Dp):
    """(E, H*Dh) weight + (H*Dh,) bias -> head-major, per-head zero-padded to Dp lanes."""
    E_in = w_t.shape[0]
    w4 = w_t.reshape(E_in, num_heads, Dh)
    w_p = jnp.zeros((E_in, num_heads, Dp), w_t.dtype).at[:, :, :Dh].set(w4)
    b4 = b.reshape(num_heads, Dh)
    b_p = jnp.zeros((num_heads, Dp), b.dtype).at[:, :Dh].set(b4)
    return w_p.reshape(E_in, num_heads * Dp), b_p.reshape(1, num_heads * Dp)


def _pad_out_rows(wo_t, num_heads, Dh, Dp):
    """(H*Dh, E) output-projection weight -> rows re-laid head-major with Dp-padded heads."""
    E_out = wo_t.shape[1]
    w4 = wo_t.reshape(num_heads, Dh, E_out)
    w_p = jnp.zeros((num_heads, Dp, E_out), wo_t.dtype).at[:, :Dh, :].set(w4)
    return w_p.reshape(num_heads * Dp, E_out)


def _pick_q_tile(S, max_tq):
    """Largest query tile <= max_tq dividing S, preferring multiples of 128 (MXU-friendly)."""
    if S <= max_tq:
        return S
    best8 = None
    for t in range(max_tq, 7, -1):
        if S % t:
            continue
        if t % 128 == 0:
            return t
        if best8 is None and t % 8 == 0:
            best8 = t
    if best8 is not None:
        return best8
    if S <= 1024:
        return S
    raise ValueError(f"S={S} has no multiple-of-8 tile <= {max_tq}; pad S to a multiple of 8.")


def _vmem_bytes_estimate(S, E, HDp, tq, weight_bufs):
    bf, f32 = 2, 4
    io_blocks = 2 * S * E * bf + 2 * tq * E * f32                 # x block + out block (2 bufs)
    weights = weight_bufs * ((4 * E * HDp) * bf + (3 * HDp + 3 * E) * f32)
    scratch = (S * E + 2 * S * HDp + tq * HDp) * bf               # xn + K + V + ctx
    temps = S * HDp * f32 + tq * (3 * S + E + HDp) * f32          # projection / score temps
    return int(1.25 * (io_blocks + weights + scratch + temps))


def multiheaded_self_attention(x, params, num_heads, eps=1e-5):
    """x: (B, S, E) float32. params: LayerNorm + nn.MultiheadAttention weights (PyTorch layout)."""
    B, S, E = x.shape
    assert E % num_heads == 0
    Dh = E // num_heads
    Dp = ((Dh + 127) // 128) * 128            # 128-lane-aligned per-head slab
    HDp = num_heads * Dp
    f32, bf16 = jnp.float32, jnp.bfloat16

    # --- hardware-aware knobs (VMEM capacity -> tile cap + explicit VMEM budget) ---
    try:
        vmem_cap = int(pltpu.get_tpu_info().vmem_capacity_bytes)
    except Exception:
        vmem_cap = 64 * 1024 * 1024           # conservative (v7x-sized) fallback
    max_tq = 512 if vmem_cap >= 96 * 1024 * 1024 else 256
    tq = _pick_q_tile(S, max_tq)

    # --- parameter packing (PyTorch layout -> lane-dense, head-major, Dp-padded) ---
    gamma = params["ln_weight"].reshape(1, E).astype(f32)
    beta = params["ln_bias"].reshape(1, E).astype(f32)
    in_w = params["in_proj_weight"]           # (3E, E), used as y = x @ W^T + b
    in_b = params["in_proj_bias"]             # (3E,)
    out_w = params["out_proj_weight"]         # (E, E)
    out_b = params["out_proj_bias"]           # (E,)

    scale = 1.0 / (Dh ** 0.5)
    wq, bq = _pad_heads(in_w[:E].T * scale, in_b[:E] * scale, num_heads, Dh, Dp)
    wk, bk = _pad_heads(in_w[E:2 * E].T, in_b[E:2 * E], num_heads, Dh, Dp)
    wv, bv = _pad_heads(in_w[2 * E:].T, in_b[2 * E:], num_heads, Dh, Dp)
    wo = _pad_out_rows(out_w.T, num_heads, Dh, Dp)
    bo = out_b.reshape(1, E)

    wq, wk, wv, wo = (w.astype(bf16) for w in (wq, wk, wv, wo))
    bq, bk, bv, bo = (b.astype(f32) for b in (bq, bk, bv, bo))

    x_bf = x.astype(bf16)                     # halves the resident sequence block + its DMA

    kernel = functools.partial(_mhsa_kernel, num_heads=num_heads, head_pad=Dp, eps=eps)
    grid = (B, S // tq)

    cost = pl.CostEstimate(
        flops=int(8 * B * S * E * HDp + 4 * B * num_heads * S * S * Dp),
        transcendentals=int(B * num_heads * S * S),
        bytes_accessed=int(B * S * E * (2 + 4) + 4 * E * HDp * 2 + (3 * HDp + 3 * E) * 4))

    def build_and_run(single_buffer_consts):
        const_kwargs = dict(pipeline_mode=pl.Buffered(1)) if single_buffer_consts else {}

        def const(shape):
            return pl.BlockSpec(shape, lambda b, qi: (0,) * len(shape), **const_kwargs)

        weight_bufs = 1 if single_buffer_consts else 2
        vmem_limit = int(min(max(_vmem_bytes_estimate(S, E, HDp, tq, weight_bufs),
                                 32 * 1024 * 1024),
                             0.8 * vmem_cap))

        return pl.pallas_call(
            kernel,
            out_shape=jax.ShapeDtypeStruct((B, S, E), x.dtype),
            grid=grid,
            in_specs=[
                # Full sequence block; index changes only with b, so it is DMA'd once per
                # batch (kept double-buffered so the next batch's fetch overlaps compute).
                pl.BlockSpec((1, S, E), lambda b, qi: (b, 0, 0)),
                const((1, E)), const((1, E)),                     # gamma, beta
                const((E, HDp)), const((1, HDp)),                 # Wq (scale folded), bq
                const((E, HDp)), const((1, HDp)),                 # Wk, bk
                const((E, HDp)), const((1, HDp)),                 # Wv, bv
                const((HDp, E)), const((1, E)),                   # Wo, bo
            ],
            out_specs=pl.BlockSpec((1, tq, E), lambda b, qi: (b, qi, 0)),
            scratch_shapes=[
                pltpu.VMEM((S, E), bf16),                         # LN'd sequence
                pltpu.VMEM((S, HDp), bf16),                       # K (head-major, padded)
                pltpu.VMEM((S, HDp), bf16),                       # V
                pltpu.VMEM((tq, HDp), bf16),                      # concatenated head contexts
            ],
            compiler_params=pltpu.CompilerParams(
                dimension_semantics=("parallel", "arbitrary"),
                vmem_limit_bytes=vmem_limit),
            cost_estimate=cost,
        )(x_bf, gamma, beta, wq, bq, wk, bk, wv, bv, wo, bo)

    try:
        return build_and_run(single_buffer_consts=True)
    except Exception:
        # Fallback for JAX versions where BlockSpec(pipeline_mode=pl.Buffered(1)) is not
        # supported by the TPU grid pipeline; only costs the extra constant buffers.
        return build_and_run(single_buffer_consts=False)


def _reference(x, params, num_heads, eps=1e-5):
    """Pure-JAX f32 reference mirroring PyTorch LayerNorm + nn.MultiheadAttention."""
    B, S, E = x.shape
    H, Dh = num_heads, E // num_heads
    gamma, beta = params["ln_weight"], params["ln_bias"]
    mean = x.mean(-1, keepdims=True)
    var = ((x - mean) ** 2).mean(-1, keepdims=True)
    xn = (x - mean) / jnp.sqrt(var + eps) * gamma + beta
    qkv = xn @ params["in_proj_weight"].T + params["in_proj_bias"]
    q, k, v = jnp.split(qkv, 3, axis=-1)

    def sh(t):
        return t.reshape(B, S, H, Dh).transpose(0, 2, 1, 3)

    q, k, v = sh(q), sh(k), sh(v)
    s = (q @ k.transpose(0, 1, 3, 2)) / jnp.sqrt(Dh)
    p = jax.nn.softmax(s, axis=-1)
    o = (p @ v).transpose(0, 2, 1, 3).reshape(B, S, E)
    return o @ params["out_proj_weight"].T + params["out_proj_bias"]


if __name__ == "__main__":
    B, S, E, H = 2, 8, 32, 4

    key = jax.random.PRNGKey(0)
    kx, k1, k2, k3, k4 = jax.random.split(key, 5)

    x = jax.random.normal(kx, (B, S, E), dtype=jnp.float32)

    params = {
        "ln_weight": jnp.ones((E,), jnp.float32),
        "ln_bias": jnp.zeros((E,), jnp.float32),
        "in_proj_weight": 0.1 * jax.random.normal(k1, (3 * E, E), dtype=jnp.float32),
        "in_proj_bias": 0.05 * jax.random.normal(k2, (3 * E,), dtype=jnp.float32),
        "out_proj_weight": 0.1 * jax.random.normal(k3, (E, E), dtype=jnp.float32),
        "out_proj_bias": 0.05 * jax.random.normal(k4, (E,), dtype=jnp.float32),
    }

    out = multiheaded_self_attention(x, params, num_heads=H)
    out = jax.block_until_ready(out)

    ref = _reference(x, params, num_heads=H)
    assert out.shape == (B, S, E)
    # bf16 input / MXU operands (f32 accumulation) => bf16-appropriate tolerance.
    err = float(jnp.abs(out - ref).max())
    assert jnp.allclose(out, ref, atol=2e-2, rtol=2e-2), err

    print("KERNEL_OK")
</pallas_src>

<mosaic_0001>
module attributes {stable_mosaic.version = 11 : i64} {
  func.func @_mhsa_kernel(%arg0: i32, %arg1: i32, %arg2: memref<1x8x32xbf16, #tpu.memory_space<vmem>>, %arg3: memref<1x32xf32, #tpu.memory_space<vmem>>, %arg4: memref<1x32xf32, #tpu.memory_space<vmem>>, %arg5: memref<32x512xbf16, #tpu.memory_space<vmem>>, %arg6: memref<1x512xf32, #tpu.memory_space<vmem>>, %arg7: memref<32x512xbf16, #tpu.memory_space<vmem>>, %arg8: memref<1x512xf32, #tpu.memory_space<vmem>>, %arg9: memref<32x512xbf16, #tpu.memory_space<vmem>>, %arg10: memref<1x512xf32, #tpu.memory_space<vmem>>, %arg11: memref<512x32xbf16, #tpu.memory_space<vmem>>, %arg12: memref<1x32xf32, #tpu.memory_space<vmem>>, %arg13: memref<1x8x32xf32, #tpu.memory_space<vmem>>, %arg14: memref<8x32xbf16, #tpu.memory_space<vmem>>, %arg15: memref<8x512xbf16, #tpu.memory_space<vmem>>, %arg16: memref<8x512xbf16, #tpu.memory_space<vmem>>, %arg17: memref<8x512xbf16, #tpu.memory_space<vmem>>) attributes {dimension_semantics = [#tpu.dimension_semantics<parallel>, #tpu.dimension_semantics<arbitrary>], iteration_bounds = array<i64: 2, 1>, scalar_prefetch = 0 : i64, scratch_operands = 4 : i64, tpu.core_type = #tpu.core_type<tc>, window_params = [{transform_indices = @transform_0, window_bounds = array<i64: 1, 8, 32>}, {pipeline_mode = #tpu.pipeline_mode<synchronous>, transform_indices = @transform_1, window_bounds = array<i64: 1, 32>}, {pipeline_mode = #tpu.pipeline_mode<synchronous>, transform_indices = @transform_2, window_bounds = array<i64: 1, 32>}, {pipeline_mode = #tpu.pipeline_mode<synchronous>, transform_indices = @transform_3, window_bounds = array<i64: 32, 512>}, {pipeline_mode = #tpu.pipeline_mode<synchronous>, transform_indices = @transform_4, window_bounds = array<i64: 1, 512>}, {pipeline_mode = #tpu.pipeline_mode<synchronous>, transform_indices = @transform_5, window_bounds = array<i64: 32, 512>}, {pipeline_mode = #tpu.pipeline_mode<synchronous>, transform_indices = @transform_6, window_bounds = array<i64: 1, 512>}, {pipeline_mode = #tpu.pipeline_mode<synchronous>, transform_indices = @transform_7, window_bounds = array<i64: 32, 512>}, {pipeline_mode = #tpu.pipeline_mode<synchronous>, transform_indices = @transform_8, window_bounds = array<i64: 1, 512>}, {pipeline_mode = #tpu.pipeline_mode<synchronous>, transform_indices = @transform_9, window_bounds = array<i64: 512, 32>}, {pipeline_mode = #tpu.pipeline_mode<synchronous>, transform_indices = @transform_10, window_bounds = array<i64: 1, 32>}, {transform_indices = @transform_11, window_bounds = array<i64: 1, 8, 32>}]} {
    %c0_i32 = arith.constant 0 : i32
    %0 = arith.cmpi eq, %arg1, %c0_i32 : i32
    %1 = arith.extui %0 : i1 to i32
    %c0_i32_0 = arith.constant 0 : i32
    %2 = arith.cmpi ne, %1, %c0_i32_0 : i32
    scf.if %2 {
      %c0_40 = arith.constant 0 : index
      %c0_41 = arith.constant 0 : index
      %c0_42 = arith.constant 0 : index
      %96 = vector.load %arg2[%c0_40, %c0_41, %c0_42] : memref<1x8x32xbf16, #tpu.memory_space<vmem>>, vector<1x8x32xbf16>
      %97 = vector.shape_cast %96 : vector<1x8x32xbf16> to vector<8x32xbf16>
      %98 = arith.extf %97 : vector<8x32xbf16> to vector<8x32xf32>
      %cst_43 = arith.constant dense<0.000000e+00> : vector<8xf32>
      %99 = vector.multi_reduction <add>, %98, %cst_43 [1] : vector<8x32xf32> to vector<8xf32>
      %100 = vector.shape_cast %99 : vector<8xf32> to vector<8x1xf32>
      %cst_44 = arith.constant 3.200000e+01 : f32
      %101 = vector.broadcast %cst_44 : f32 to vector<8x1xf32>
      %102 = arith.divf %100, %101 : vector<8x1xf32>
      %103 = vector.broadcast %102 : vector<8x1xf32> to vector<8x32xf32>
      %104 = arith.subf %98, %103 : vector<8x32xf32>
      %105 = arith.mulf %104, %104 : vector<8x32xf32>
      %cst_45 = arith.constant dense<0.000000e+00> : vector<8xf32>
      %106 = vector.multi_reduction <add>, %105, %cst_45 [1] : vector<8x32xf32> to vector<8xf32>
      %107 = vector.shape_cast %106 : vector<8xf32> to vector<8x1xf32>
      %cst_46 = arith.constant 3.200000e+01 : f32
      %108 = vector.broadcast %cst_46 : f32 to vector<8x1xf32>
      %109 = arith.divf %107, %108 : vector<8x1xf32>
      %cst_47 = arith.constant 9.99999974E-6 : f32
      %110 = vector.broadcast %cst_47 : f32 to vector<8x1xf32>
      %111 = arith.addf %109, %110 : vector<8x1xf32>
      %112 = math.rsqrt %111 : vector<8x1xf32>
      %113 = vector.broadcast %112 : vector<8x1xf32> to vector<8x32xf32>
      %114 = arith.mulf %104, %113 : vector<8x32xf32>
      %c0_48 = arith.constant 0 : index
      %c0_49 = arith.constant 0 : index
      %115 = vector.load %arg3[%c0_48, %c0_49] : memref<1x32xf32, #tpu.memory_space<vmem>>, vector<1x32xf32>
      %116 = vector.broadcast %115 : vector<1x32xf32> to vector<8x32xf32>
      %117 = arith.mulf %114, %116 : vector<8x32xf32>
      %c0_50 = arith.constant 0 : index
      %c0_51 = arith.constant 0 : index
      %118 = vector.load %arg4[%c0_50, %c0_51] : memref<1x32xf32, #tpu.memory_space<vmem>>, vector<1x32xf32>
      %119 = vector.broadcast %118 : vector<1x32xf32> to vector<8x32xf32>
      %120 = arith.addf %117, %119 : vector<8x32xf32>
      %121 = arith.truncf %120 : vector<8x32xf32> to vector<8x32xbf16>
      %c0_52 = arith.constant 0 : index
      %c0_53 = arith.constant 0 : index
      %122 = vector.load %arg14[%c0_52, %c0_53] : memref<8x32xbf16, #tpu.memory_space<vmem>>, vector<8x32xbf16>
      tpu.vector_store %arg14[%c0_52, %c0_53], %121 {strides = array<i32>} : memref<8x32xbf16, #tpu.memory_space<vmem>>, vector<8x32xbf16>,
      %c0_54 = arith.constant 0 : index
      %c0_55 = arith.constant 0 : index
      %123 = vector.load %arg7[%c0_54, %c0_55] : memref<32x512xbf16, #tpu.memory_space<vmem>>, vector<32x512xbf16>
      %cst_56 = arith.constant dense<0.000000e+00> : vector<8x512xf32>
      %124 = tpu.matmul %121, %123, %cst_56 {dimension_numbers = #tpu.dot_dimension_numbers<[1], [0], [0], [1], [0, 0, 1, 1], [], []>} : vector<8x32xbf16>, vector<32x512xbf16>, vector<8x512xf32> -> vector<8x512xf32>
      %c0_57 = arith.constant 0 : index
      %c0_58 = arith.constant 0 : index
      %125 = vector.load %arg8[%c0_57, %c0_58] : memref<1x512xf32, #tpu.memory_space<vmem>>, vector<1x512xf32>
      %126 = vector.broadcast %125 : vector<1x512xf32> to vector<8x512xf32>
      %127 = arith.addf %124, %126 : vector<8x512xf32>
      %128 = arith.truncf %127 : vector<8x512xf32> to vector<8x512xbf16>
      %c0_59 = arith.constant 0 : index
      %c0_60 = arith.constant 0 : index
      %129 = vector.load %arg15[%c0_59, %c0_60] : memref<8x512xbf16, #tpu.memory_space<vmem>>, vector<8x512xbf16>
      tpu.vector_store %arg15[%c0_59, %c0_60], %128 {strides = array<i32>} : memref<8x512xbf16, #tpu.memory_space<vmem>>, vector<8x512xbf16>,
      %c0_61 = arith.constant 0 : index
      %c0_62 = arith.constant 0 : index
      %130 = vector.load %arg9[%c0_61, %c0_62] : memref<32x512xbf16, #tpu.memory_space<vmem>>, vector<32x512xbf16>
      %cst_63 = arith.constant dense<0.000000e+00> : vector<8x512xf32>
      %131 = tpu.matmul %121, %130, %cst_63 {dimension_numbers = #tpu.dot_dimension_numbers<[1], [0], [0], [1], [0, 0, 1, 1], [], []>} : vector<8x32xbf16>, vector<32x512xbf16>, vector<8x512xf32> -> vector<8x512xf32>
      %c0_64 = arith.constant 0 : index
      %c0_65 = arith.constant 0 : index
      %132 = vector.load %arg10[%c0_64, %c0_65] : memref<1x512xf32, #tpu.memory_space<vmem>>, vector<1x512xf32>
      %133 = vector.broadcast %132 : vector<1x512xf32> to vector<8x512xf32>
      %134 = arith.addf %131, %133 : vector<8x512xf32>
      %135 = arith.truncf %134 : vector<8x512xf32> to vector<8x512xbf16>
      %c0_66 = arith.constant 0 : index
      %c0_67 = arith.constant 0 : index
      %136 = vector.load %arg16[%c0_66, %c0_67] : memref<8x512xbf16, #tpu.memory_space<vmem>>, vector<8x512xbf16>
      tpu.vector_store %arg16[%c0_66, %c0_67], %135 {strides = array<i32>} : memref<8x512xbf16, #tpu.memory_space<vmem>>, vector<8x512xbf16>,
    } else {
    }
    %c8_i32 = arith.constant 8 : i32
    %3 = arith.muli %arg1, %c8_i32 : i32
    %4 = tpu.assume_multiple %3, 8 : i32
    %5 = arith.index_cast %4 : i32 to index
    %c0 = arith.constant 0 : index
    %6 = vector.load %arg14[%5, %c0] : memref<8x32xbf16, #tpu.memory_space<vmem>>, vector<8x32xbf16>
    %c0_1 = arith.constant 0 : index
    %c0_2 = arith.constant 0 : index
    %7 = vector.load %arg5[%c0_1, %c0_2] : memref<32x512xbf16, #tpu.memory_space<vmem>>, vector<32x512xbf16>
    %cst = arith.constant dense<0.000000e+00> : vector<8x512xf32>
    %8 = tpu.matmul %6, %7, %cst {dimension_numbers = #tpu.dot_dimension_numbers<[1], [0], [0], [1], [0, 0, 1, 1], [], []>} : vector<8x32xbf16>, vector<32x512xbf16>, vector<8x512xf32> -> vector<8x512xf32>
    %c0_3 = arith.constant 0 : index
    %c0_4 = arith.constant 0 : index
    %9 = vector.load %arg6[%c0_3, %c0_4] : memref<1x512xf32, #tpu.memory_space<vmem>>, vector<1x512xf32>
    %10 = vector.broadcast %9 : vector<1x512xf32> to vector<8x512xf32>
    %11 = arith.addf %8, %10 : vector<8x512xf32>
    %12 = arith.truncf %11 : vector<8x512xf32> to vector<8x512xbf16>
    %c0_5 = arith.constant 0 : index
    %c0_6 = arith.constant 0 : index
    %13 = vector.load %arg15[%c0_5, %c0_6] : memref<8x512xbf16, #tpu.memory_space<vmem>>, vector<8x512xbf16>
    %c0_7 = arith.constant 0 : index
    %c0_8 = arith.constant 0 : index
    %14 = vector.load %arg16[%c0_7, %c0_8] : memref<8x512xbf16, #tpu.memory_space<vmem>>, vector<8x512xbf16>
    %15 = vector.extract_strided_slice %12 {offsets = [0, 0], sizes = [8, 128], strides = [1, 1]} : vector<8x512xbf16> to vector<8x128xbf16>
    %16 = vector.extract_strided_slice %13 {offsets = [0, 0], sizes = [8, 128], strides = [1, 1]} : vector<8x512xbf16> to vector<8x128xbf16>
    %cst_9 = arith.constant dense<0.000000e+00> : vector<8x8xf32>
    %17 = tpu.matmul %15, %16, %cst_9 {dimension_numbers = #tpu.dot_dimension_numbers<[1], [1], [0], [0], [0, 0, 1, 0], [], []>} : vector<8x128xbf16>, vector<8x128xbf16>, vector<8x8xf32> -> vector<8x8xf32>
    %cst_10 = arith.constant dense<0xFF800000> : vector<8xf32>
    %18 = vector.multi_reduction <maximumf>, %17, %cst_10 [1] : vector<8x8xf32> to vector<8xf32>
    %19 = vector.shape_cast %18 : vector<8xf32> to vector<8x1xf32>
    %20 = vector.broadcast %19 : vector<8x1xf32> to vector<8x8xf32>
    %21 = arith.subf %17, %20 : vector<8x8xf32>
    %22 = math.exp %21 : vector<8x8xf32>
    %cst_11 = arith.constant dense<0.000000e+00> : vector<8xf32>
    %23 = vector.multi_reduction <add>, %22, %cst_11 [1] : vector<8x8xf32> to vector<8xf32>
    %24 = vector.shape_cast %23 : vector<8xf32> to vector<8x1xf32>
    %25 = tpu.reciprocal %24 {approx = true} : vector<8x1xf32> -> vector<8x1xf32>
    %26 = vector.broadcast %25 : vector<8x1xf32> to vector<8x8xf32>
    %27 = arith.mulf %22, %26 : vector<8x8xf32>
    %28 = arith.truncf %27 : vector<8x8xf32> to vector<8x8xbf16>
    %29 = vector.extract_strided_slice %14 {offsets = [0, 0], sizes = [8, 128], strides = [1, 1]} : vector<8x512xbf16> to vector<8x128xbf16>
    %cst_12 = arith.constant dense<0.000000e+00> : vector<8x128xf32>
    %30 = tpu.matmul %28, %29, %cst_12 {dimension_numbers = #tpu.dot_dimension_numbers<[1], [0], [0], [1], [0, 0, 1, 1], [], []>} : vector<8x8xbf16>, vector<8x128xbf16>, vector<8x128xf32> -> vector<8x128xf32>
    %31 = arith.truncf %30 : vector<8x128xf32> to vector<8x128xbf16>
    %c0_13 = arith.constant 0 : index
    %c0_14 = arith.constant 0 : index
    %32 = vector.load %arg17[%c0_13, %c0_14] : memref<8x512xbf16, #tpu.memory_space<vmem>>, vector<8x128xbf16>
    tpu.vector_store %arg17[%c0_13, %c0_14], %31 {strides = array<i32>} : memref<8x512xbf16, #tpu.memory_space<vmem>>, vector<8x128xbf16>,
    %33 = vector.extract_strided_slice %12 {offsets = [0, 128], sizes = [8, 128], strides = [1, 1]} : vector<8x512xbf16> to vector<8x128xbf16>
    %34 = vector.extract_strided_slice %13 {offsets = [0, 128], sizes = [8, 128], strides = [1, 1]} : vector<8x512xbf16> to vector<8x128xbf16>
    %cst_15 = arith.constant dense<0.000000e+00> : vector<8x8xf32>
    %35 = tpu.matmul %33, %34, %cst_15 {dimension_numbers = #tpu.dot_dimension_numbers<[1], [1], [0], [0], [0, 0, 1, 0], [], []>} : vector<8x128xbf16>, vector<8x128xbf16>, vector<8x8xf32> -> vector<8x8xf32>
    %cst_16 = arith.constant dense<0xFF800000> : vector<8xf32>
    %36 = vector.multi_reduction <maximumf>, %35, %cst_16 [1] : vector<8x8xf32> to vector<8xf32>
    %37 = vector.shape_cast %36 : vector<8xf32> to vector<8x1xf32>
    %38 = vector.broadcast %37 : vector<8x1xf32> to vector<8x8xf32>
    %39 = arith.subf %35, %38 : vector<8x8xf32>
    %40 = math.exp %39 : vector<8x8xf32>
    %cst_17 = arith.constant dense<0.000000e+00> : vector<8xf32>
    %41 = vector.multi_reduction <add>, %40, %cst_17 [1] : vector<8x8xf32> to vector<8xf32>
    %42 = vector.shape_cast %41 : vector<8xf32> to vector<8x1xf32>
    %43 = tpu.reciprocal %42 {approx = true} : vector<8x1xf32> -> vector<8x1xf32>
    %44 = vector.broadcast %43 : vector<8x1xf32> to vector<8x8xf32>
    %45 = arith.mulf %40, %44 : vector<8x8xf32>
    %46 = arith.truncf %45 : vector<8x8xf32> to vector<8x8xbf16>
    %47 = vector.extract_strided_slice %14 {offsets = [0, 128], sizes = [8, 128], strides = [1, 1]} : vector<8x512xbf16> to vector<8x128xbf16>
    %cst_18 = arith.constant dense<0.000000e+00> : vector<8x128xf32>
    %48 = tpu.matmul %46, %47, %cst_18 {dimension_numbers = #tpu.dot_dimension_numbers<[1], [0], [0], [1], [0, 0, 1, 1], [], []>} : vector<8x8xbf16>, vector<8x128xbf16>, vector<8x128xf32> -> vector<8x128xf32>
    %49 = arith.truncf %48 : vector<8x128xf32> to vector<8x128xbf16>
    %c0_19 = arith.constant 0 : index
    %c128 = arith.constant 128 : index
    %50 = vector.load %arg17[%c0_19, %c128] : memref<8x512xbf16, #tpu.memory_space<vmem>>, vector<8x128xbf16>
    tpu.vector_store %arg17[%c0_19, %c128], %49 {strides = array<i32>} : memref<8x512xbf16, #tpu.memory_space<vmem>>, vector<8x128xbf16>,
    %51 = vector.extract_strided_slice %12 {offsets = [0, 256], sizes = [8, 128], strides = [1, 1]} : vector<8x512xbf16> to vector<8x128xbf16>
    %52 = vector.extract_strided_slice %13 {offsets = [0, 256], sizes = [8, 128], strides = [1, 1]} : vector<8x512xbf16> to vector<8x128xbf16>
    %cst_20 = arith.constant dense<0.000000e+00> : vector<8x8xf32>
    %53 = tpu.matmul %51, %52, %cst_20 {dimension_numbers = #tpu.dot_dimension_numbers<[1], [1], [0], [0], [0, 0, 1, 0], [], []>} : vector<8x128xbf16>, vector<8x128xbf16>, vector<8x8xf32> -> vector<8x8xf32>
    %cst_21 = arith.constant dense<0xFF800000> : vector<8xf32>
    %54 = vector.multi_reduction <maximumf>, %53, %cst_21 [1] : vector<8x8xf32> to vector<8xf32>
    %55 = vector.shape_cast %54 : vector<8xf32> to vector<8x1xf32>
    %56 = vector.broadcast %55 : vector<8x1xf32> to vector<8x8xf32>
    %57 = arith.subf %53, %56 : vector<8x8xf32>
    %58 = math.exp %57 : vector<8x8xf32>
    %cst_22 = arith.constant dense<0.000000e+00> : vector<8xf32>
    %59 = vector.multi_reduction <add>, %58, %cst_22 [1] : vector<8x8xf32> to vector<8xf32>
    %60 = vector.shape_cast %59 : vector<8xf32> to vector<8x1xf32>
    %61 = tpu.reciprocal %60 {approx = true} : vector<8x1xf32> -> vector<8x1xf32>
    %62 = vector.broadcast %61 : vector<8x1xf32> to vector<8x8xf32>
    %63 = arith.mulf %58, %62 : vector<8x8xf32>
    %64 = arith.truncf %63 : vector<8x8xf32> to vector<8x8xbf16>
    %65 = vector.extract_strided_slice %14 {offsets = [0, 256], sizes = [8, 128], strides = [1, 1]} : vector<8x512xbf16> to vector<8x128xbf16>
    %cst_23 = arith.constant dense<0.000000e+00> : vector<8x128xf32>
    %66 = tpu.matmul %64, %65, %cst_23 {dimension_numbers = #tpu.dot_dimension_numbers<[1], [0], [0], [1], [0, 0, 1, 1], [], []>} : vector<8x8xbf16>, vector<8x128xbf16>, vector<8x128xf32> -> vector<8x128xf32>
    %67 = arith.truncf %66 : vector<8x128xf32> to vector<8x128xbf16>
    %c0_24 = arith.constant 0 : index
    %c256 = arith.constant 256 : index
    %68 = vector.load %arg17[%c0_24, %c256] : memref<8x512xbf16, #tpu.memory_space<vmem>>, vector<8x128xbf16>
    tpu.vector_store %arg17[%c0_24, %c256], %67 {strides = array<i32>} : memref<8x512xbf16, #tpu.memory_space<vmem>>, vector<8x128xbf16>,
    %69 = vector.extract_strided_slice %12 {offsets = [0, 384], sizes = [8, 128], strides = [1, 1]} : vector<8x512xbf16> to vector<8x128xbf16>
    %70 = vector.extract_strided_slice %13 {offsets = [0, 384], sizes = [8, 128], strides = [1, 1]} : vector<8x512xbf16> to vector<8x128xbf16>
    %cst_25 = arith.constant dense<0.000000e+00> : vector<8x8xf32>
    %71 = tpu.matmul %69, %70, %cst_25 {dimension_numbers = #tpu.dot_dimension_numbers<[1], [1], [0], [0], [0, 0, 1, 0], [], []>} : vector<8x128xbf16>, vector<8x128xbf16>, vector<8x8xf32> -> vector<8x8xf32>
    %cst_26 = arith.constant dense<0xFF800000> : vector<8xf32>
    %72 = vector.multi_reduction <maximumf>, %71, %cst_26 [1] : vector<8x8xf32> to vector<8xf32>
    %73 = vector.shape_cast %72 : vector<8xf32> to vector<8x1xf32>
    %74 = vector.broadcast %73 : vector<8x1xf32> to vector<8x8xf32>
    %75 = arith.subf %71, %74 : vector<8x8xf32>
    %76 = math.exp %75 : vector<8x8xf32>
    %cst_27 = arith.constant dense<0.000000e+00> : vector<8xf32>
    %77 = vector.multi_reduction <add>, %76, %cst_27 [1] : vector<8x8xf32> to vector<8xf32>
    %78 = vector.shape_cast %77 : vector<8xf32> to vector<8x1xf32>
    %79 = tpu.reciprocal %78 {approx = true} : vector<8x1xf32> -> vector<8x1xf32>
    %80 = vector.broadcast %79 : vector<8x1xf32> to vector<8x8xf32>
    %81 = arith.mulf %76, %80 : vector<8x8xf32>
    %82 = arith.truncf %81 : vector<8x8xf32> to vector<8x8xbf16>
    %83 = vector.extract_strided_slice %14 {offsets = [0, 384], sizes = [8, 128], strides = [1, 1]} : vector<8x512xbf16> to vector<8x128xbf16>
    %cst_28 = arith.constant dense<0.000000e+00> : vector<8x128xf32>
    %84 = tpu.matmul %82, %83, %cst_28 {dimension_numbers = #tpu.dot_dimension_numbers<[1], [0], [0], [1], [0, 0, 1, 1], [], []>} : vector<8x8xbf16>, vector<8x128xbf16>, vector<8x128xf32> -> vector<8x128xf32>
    %85 = arith.truncf %84 : vector<8x128xf32> to vector<8x128xbf16>
    %c0_29 = arith.constant 0 : index
    %c384 = arith.constant 384 : index
    %86 = vector.load %arg17[%c0_29, %c384] : memref<8x512xbf16, #tpu.memory_space<vmem>>, vector<8x128xbf16>
    tpu.vector_store %arg17[%c0_29, %c384], %85 {strides = array<i32>} : memref<8x512xbf16, #tpu.memory_space<vmem>>, vector<8x128xbf16>,
    %c0_30 = arith.constant 0 : index
    %c0_31 = arith.constant 0 : index
    %87 = vector.load %arg17[%c0_30, %c0_31] : memref<8x512xbf16, #tpu.memory_space<vmem>>, vector<8x512xbf16>
    %c0_32 = arith.constant 0 : index
    %c0_33 = arith.constant 0 : index
    %88 = vector.load %arg11[%c0_32, %c0_33] : memref<512x32xbf16, #tpu.memory_space<vmem>>, vector<512x32xbf16>
    %cst_34 = arith.constant dense<0.000000e+00> : vector<8x32xf32>
    %89 = tpu.matmul %87, %88, %cst_34 {dimension_numbers = #tpu.dot_dimension_numbers<[1], [0], [0], [1], [0, 0, 1, 1], [], []>} : vector<8x512xbf16>, vector<512x32xbf16>, vector<8x32xf32> -> vector<8x32xf32>
    %c0_35 = arith.constant 0 : index
    %c0_36 = arith.constant 0 : index
    %90 = vector.load %arg12[%c0_35, %c0_36] : memref<1x32xf32, #tpu.memory_space<vmem>>, vector<1x32xf32>
    %91 = vector.broadcast %90 : vector<1x32xf32> to vector<8x32xf32>
    %92 = arith.addf %89, %91 : vector<8x32xf32>
    %c0_37 = arith.constant 0 : index
    %c0_38 = arith.constant 0 : index
    %c0_39 = arith.constant 0 : index
    %93 = vector.load %arg13[%c0_37, %c0_38, %c0_39] : memref<1x8x32xf32, #tpu.memory_space<vmem>>, vector<1x8x32xf32>
    %94 = vector.shape_cast %93 : vector<1x8x32xf32> to vector<8x32xf32>
    %95 = vector.shape_cast %92 : vector<8x32xf32> to vector<1x8x32xf32>
    tpu.vector_store %arg13[%c0_37, %c0_38, %c0_39], %95 {strides = array<i32>} : memref<1x8x32xf32, #tpu.memory_space<vmem>>, vector<1x8x32xf32>,
    return
  }
  func.func @transform_0(%arg0: i32, %arg1: i32) -> (i32, i32, i32) {
    %c0_i32 = arith.constant 0 : i32
    %c0_i32_0 = arith.constant 0 : i32
    %c0_i32_1 = arith.constant 0 : i32
    return %arg0, %c0_i32, %c0_i32_0 : i32, i32, i32
  }
  func.func @transform_1(%arg0: i32, %arg1: i32) -> (i32, i32) {
    %c0_i32 = arith.constant 0 : i32
    %c0_i32_0 = arith.constant 0 : i32
    %c0_i32_1 = arith.constant 0 : i32
    return %c0_i32, %c0_i32_0 : i32, i32
  }
  func.func @transform_2(%arg0: i32, %arg1: i32) -> (i32, i32) {
    %c0_i32 = arith.constant 0 : i32
    %c0_i32_0 = arith.constant 0 : i32
    %c0_i32_1 = arith.constant 0 : i32
    return %c0_i32, %c0_i32_0 : i32, i32
  }
  func.func @transform_3(%arg0: i32, %arg1: i32) -> (i32, i32) {
    %c0_i32 = arith.constant 0 : i32
    %c0_i32_0 = arith.constant 0 : i32
    %c0_i32_1 = arith.constant 0 : i32
    return %c0_i32, %c0_i32_0 : i32, i32
  }
  func.func @transform_4(%arg0: i32, %arg1: i32) -> (i32, i32) {
    %c0_i32 = arith.constant 0 : i32
    %c0_i32_0 = arith.constant 0 : i32
    %c0_i32_1 = arith.constant 0 : i32
    return %c0_i32, %c0_i32_0 : i32, i32
  }
  func.func @transform_5(%arg0: i32, %arg1: i32) -> (i32, i32) {
    %c0_i32 = arith.constant 0 : i32
    %c0_i32_0 = arith.constant 0 : i32
    %c0_i32_1 = arith.constant 0 : i32
    return %c0_i32, %c0_i32_0 : i32, i32
  }
  func.func @transform_6(%arg0: i32, %arg1: i32) -> (i32, i32) {
    %c0_i32 = arith.constant 0 : i32
    %c0_i32_0 = arith.constant 0 : i32
    %c0_i32_1 = arith.constant 0 : i32
    return %c0_i32, %c0_i32_0 : i32, i32
  }
  func.func @transform_7(%arg0: i32, %arg1: i32) -> (i32, i32) {
    %c0_i32 = arith.constant 0 : i32
    %c0_i32_0 = arith.constant 0 : i32
    %c0_i32_1 = arith.constant 0 : i32
    return %c0_i32, %c0_i32_0 : i32, i32
  }
  func.func @transform_8(%arg0: i32, %arg1: i32) -> (i32, i32) {
    %c0_i32 = arith.constant 0 : i32
    %c0_i32_0 = arith.constant 0 : i32
    %c0_i32_1 = arith.constant 0 : i32
    return %c0_i32, %c0_i32_0 : i32, i32
  }
  func.func @transform_9(%arg0: i32, %arg1: i32) -> (i32, i32) {
    %c0_i32 = arith.constant 0 : i32
    %c0_i32_0 = arith.constant 0 : i32
    %c0_i32_1 = arith.constant 0 : i32
    return %c0_i32, %c0_i32_0 : i32, i32
  }
  func.func @transform_10(%arg0: i32, %arg1: i32) -> (i32, i32) {
    %c0_i32 = arith.constant 0 : i32
    %c0_i32_0 = arith.constant 0 : i32
    %c0_i32_1 = arith.constant 0 : i32
    return %c0_i32, %c0_i32_0 : i32, i32
  }
  func.func @transform_11(%arg0: i32, %arg1: i32) -> (i32, i32, i32) {
    %c0_i32 = arith.constant 0 : i32
    %c0_i32_0 = arith.constant 0 : i32
    return %arg0, %arg1, %c0_i32 : i32, i32, i32
  }
}

module attributes {stable_mosaic.version = 11 : i64} {
  func.func @_mhsa_kernel(%arg0: i32, %arg1: i32, %arg2: memref<1x8x32xbf16, #tpu.memory_space<vmem>>, %arg3: memref<1x32xf32, #tpu.memory_space<vmem>>, %arg4: memref<1x32xf32, #tpu.memory_space<vmem>>, %arg5: memref<32x512xbf16, #tpu.memory_space<vmem>>, %arg6: memref<1x512xf32, #tpu.memory_space<vmem>>, %arg7: memref<32x512xbf16, #tpu.memory_space<vmem>>, %arg8: memref<1x512xf32, #tpu.memory_space<vmem>>, %arg9: memref<32x512xbf16, #tpu.memory_space<vmem>>, %arg10: memref<1x512xf32, #tpu.memory_space<vmem>>, %arg11: memref<512x32xbf16, #tpu.memory_space<vmem>>, %arg12: memref<1x32xf32, #tpu.memory_space<vmem>>, %arg13: memref<1x8x32xf32, #tpu.memory_space<vmem>>, %arg14: memref<8x32xbf16, #tpu.memory_space<vmem>>, %arg15: memref<8x512xbf16, #tpu.memory_space<vmem>>, %arg16: memref<8x512xbf16, #tpu.memory_space<vmem>>, %arg17: memref<8x512xbf16, #tpu.memory_space<vmem>>) attributes {dimension_semantics = [#tpu.dimension_semantics<parallel>, #tpu.dimension_semantics<arbitrary>], iteration_bounds = array<i64: 2, 1>, scalar_prefetch = 0 : i64, scratch_operands = 4 : i64, tpu.core_type = #tpu.core_type<tc>, window_params = [{transform_indices = @transform_0, window_bounds = array<i64: 1, 8, 32>}, {pipeline_mode = #tpu.pipeline_mode<synchronous>, transform_indices = @transform_1, window_bounds = array<i64: 1, 32>}, {pipeline_mode = #tpu.pipeline_mode<synchronous>, transform_indices = @transform_2, window_bounds = array<i64: 1, 32>}, {pipeline_mode = #tpu.pipeline_mode<synchronous>, transform_indices = @transform_3, window_bounds = array<i64: 32, 512>}, {pipeline_mode = #tpu.pipeline_mode<synchronous>, transform_indices = @transform_4, window_bounds = array<i64: 1, 512>}, {pipeline_mode = #tpu.pipeline_mode<synchronous>, transform_indices = @transform_5, window_bounds = array<i64: 32, 512>}, {pipeline_mode = #tpu.pipeline_mode<synchronous>, transform_indices = @transform_6, window_bounds = array<i64: 1, 512>}, {pipeline_mode = #tpu.pipeline_mode<synchronous>, transform_indices = @transform_7, window_bounds = array<i64: 32, 512>}, {pipeline_mode = #tpu.pipeline_mode<synchronous>, transform_indices = @transform_8, window_bounds = array<i64: 1, 512>}, {pipeline_mode = #tpu.pipeline_mode<synchronous>, transform_indices = @transform_9, window_bounds = array<i64: 512, 32>}, {pipeline_mode = #tpu.pipeline_mode<synchronous>, transform_indices = @transform_10, window_bounds = array<i64: 1, 32>}, {transform_indices = @transform_11, window_bounds = array<i64: 1, 8, 32>}]} {
    %c0_i32 = arith.constant 0 : i32
    %0 = arith.cmpi eq, %arg1, %c0_i32 : i32
    %1 = arith.extui %0 : i1 to i32
    %c0_i32_0 = arith.constant 0 : i32
    %2 = arith.cmpi ne, %1, %c0_i32_0 : i32
    scf.if %2 {
      %c0_40 = arith.constant 0 : index
      %c0_41 = arith.constant 0 : index
      %c0_42 = arith.constant 0 : index
      %96 = vector.load %arg2[%c0_40, %c0_41, %c0_42] : memref<1x8x32xbf16, #tpu.memory_space<vmem>>, vector<1x8x32xbf16>
      %97 = vector.shape_cast %96 : vector<1x8x32xbf16> to vector<8x32xbf16>
      %98 = arith.extf %97 : vector<8x32xbf16> to vector<8x32xf32>
      %cst_43 = arith.constant dense<0.000000e+00> : vector<8xf32>
      %99 = vector.multi_reduction <add>, %98, %cst_43 [1] : vector<8x32xf32> to vector<8xf32>
      %100 = vector.shape_cast %99 : vector<8xf32> to vector<8x1xf32>
      %cst_44 = arith.constant 3.200000e+01 : f32
      %101 = vector.broadcast %cst_44 : f32 to vector<8x1xf32>
      %102 = arith.divf %100, %101 : vector<8x1xf32>
      %103 = vector.broadcast %102 : vector<8x1xf32> to vector<8x32xf32>
      %104 = arith.subf %98, %103 : vector<8x32xf32>
      %105 = arith.mulf %104, %104 : vector<8x32xf32>
      %cst_45 = arith.constant dense<0.000000e+00> : vector<8xf32>
      %106 = vector.multi_reduction <add>, %105, %cst_45 [1] : vector<8x32xf32> to vector<8xf32>
      %107 = vector.shape_cast %106 : vector<8xf32> to vector<8x1xf32>
      %cst_46 = arith.constant 3.200000e+01 : f32
      %108 = vector.broadcast %cst_46 : f32 to vector<8x1xf32>
      %109 = arith.divf %107, %108 : vector<8x1xf32>
      %cst_47 = arith.constant 9.99999974E-6 : f32
      %110 = vector.broadcast %cst_47 : f32 to vector<8x1xf32>
      %111 = arith.addf %109, %110 : vector<8x1xf32>
      %112 = math.rsqrt %111 : vector<8x1xf32>
      %113 = vector.broadcast %112 : vector<8x1xf32> to vector<8x32xf32>
      %114 = arith.mulf %104, %113 : vector<8x32xf32>
      %c0_48 = arith.constant 0 : index
      %c0_49 = arith.constant 0 : index
      %115 = vector.load %arg3[%c0_48, %c0_49] : memref<1x32xf32, #tpu.memory_space<vmem>>, vector<1x32xf32>
      %116 = vector.broadcast %115 : vector<1x32xf32> to vector<8x32xf32>
      %117 = arith.mulf %114, %116 : vector<8x32xf32>
      %c0_50 = arith.constant 0 : index
      %c0_51 = arith.constant 0 : index
      %118 = vector.load %arg4[%c0_50, %c0_51] : memref<1x32xf32, #tpu.memory_space<vmem>>, vector<1x32xf32>
      %119 = vector.broadcast %118 : vector<1x32xf32> to vector<8x32xf32>
      %120 = arith.addf %117, %119 : vector<8x32xf32>
      %121 = arith.truncf %120 : vector<8x32xf32> to vector<8x32xbf16>
      %c0_52 = arith.constant 0 : index
      %c0_53 = arith.constant 0 : index
      %122 = vector.load %arg14[%c0_52, %c0_53] : memref<8x32xbf16, #tpu.memory_space<vmem>>, vector<8x32xbf16>
      tpu.vector_store %arg14[%c0_52, %c0_53], %121 {strides = array<i32>} : memref<8x32xbf16, #tpu.memory_space<vmem>>, vector<8x32xbf16>,
      %c0_54 = arith.constant 0 : index
      %c0_55 = arith.constant 0 : index
      %123 = vector.load %arg7[%c0_54, %c0_55] : memref<32x512xbf16, #tpu.memory_space<vmem>>, vector<32x512xbf16>
      %cst_56 = arith.constant dense<0.000000e+00> : vector<8x512xf32>
      %124 = tpu.matmul %121, %123, %cst_56 {dimension_numbers = #tpu.dot_dimension_numbers<[1], [0], [0], [1], [0, 0, 1, 1], [], []>} : vector<8x32xbf16>, vector<32x512xbf16>, vector<8x512xf32> -> vector<8x512xf32>
      %c0_57 = arith.constant 0 : index
      %c0_58 = arith.constant 0 : index
      %125 = vector.load %arg8[%c0_57, %c0_58] : memref<1x512xf32, #tpu.memory_space<vmem>>, vector<1x512xf32>
      %126 = vector.broadcast %125 : vector<1x512xf32> to vector<8x512xf32>
      %127 = arith.addf %124, %126 : vector<8x512xf32>
      %128 = arith.truncf %127 : vector<8x512xf32> to vector<8x512xbf16>
      %c0_59 = arith.constant 0 : index
      %c0_60 = arith.constant 0 : index
      %129 = vector.load %arg15[%c0_59, %c0_60] : memref<8x512xbf16, #tpu.memory_space<vmem>>, vector<8x512xbf16>
      tpu.vector_store %arg15[%c0_59, %c0_60], %128 {strides = array<i32>} : memref<8x512xbf16, #tpu.memory_space<vmem>>, vector<8x512xbf16>,
      %c0_61 = arith.constant 0 : index
      %c0_62 = arith.constant 0 : index
      %130 = vector.load %arg9[%c0_61, %c0_62] : memref<32x512xbf16, #tpu.memory_space<vmem>>, vector<32x512xbf16>
      %cst_63 = arith.constant dense<0.000000e+00> : vector<8x512xf32>
      %131 = tpu.matmul %121, %130, %cst_63 {dimension_numbers = #tpu.dot_dimension_numbers<[1], [0], [0], [1], [0, 0, 1, 1], [], []>} : vector<8x32xbf16>, vector<32x512xbf16>, vector<8x512xf32> -> vector<8x512xf32>
      %c0_64 = arith.constant 0 : index
      %c0_65 = arith.constant 0 : index
      %132 = vector.load %arg10[%c0_64, %c0_65] : memref<1x512xf32, #tpu.memory_space<vmem>>, vector<1x512xf32>
      %133 = vector.broadcast %132 : vector<1x512xf32> to vector<8x512xf32>
      %134 = arith.addf %131, %133 : vector<8x512xf32>
      %135 = arith.truncf %134 : vector<8x512xf32> to vector<8x512xbf16>
      %c0_66 = arith.constant 0 : index
      %c0_67 = arith.constant 0 : index
      %136 = vector.load %arg16[%c0_66, %c0_67] : memref<8x512xbf16, #tpu.memory_space<vmem>>, vector<8x512xbf16>
      tpu.vector_store %arg16[%c0_66, %c0_67], %135 {strides = array<i32>} : memref<8x512xbf16, #tpu.memory_space<vmem>>, vector<8x512xbf16>,
    } else {
    }
    %c8_i32 = arith.constant 8 : i32
    %3 = arith.muli %arg1, %c8_i32 : i32
    %4 = tpu.assume_multiple %3, 8 : i32
    %5 = arith.index_cast %4 : i32 to index
    %c0 = arith.constant 0 : index
    %6 = vector.load %arg14[%5, %c0] : memref<8x32xbf16, #tpu.memory_space<vmem>>, vector<8x32xbf16>
    %c0_1 = arith.constant 0 : index
    %c0_2 = arith.constant 0 : index
    %7 = vector.load %arg5[%c0_1, %c0_2] : memref<32x512xbf16, #tpu.memory_space<vmem>>, vector<32x512xbf16>
    %cst = arith.constant dense<0.000000e+00> : vector<8x512xf32>
    %8 = tpu.matmul %6, %7, %cst {dimension_numbers = #tpu.dot_dimension_numbers<[1], [0], [0], [1], [0, 0, 1, 1], [], []>} : vector<8x32xbf16>, vector<32x512xbf16>, vector<8x512xf32> -> vector<8x512xf32>
    %c0_3 = arith.constant 0 : index
    %c0_4 = arith.constant 0 : index
    %9 = vector.load %arg6[%c0_3, %c0_4] : memref<1x512xf32, #tpu.memory_space<vmem>>, vector<1x512xf32>
    %10 = vector.broadcast %9 : vector<1x512xf32> to vector<8x512xf32>
    %11 = arith.addf %8, %10 : vector<8x512xf32>
    %12 = arith.truncf %11 : vector<8x512xf32> to vector<8x512xbf16>
    %c0_5 = arith.constant 0 : index
    %c0_6 = arith.constant 0 : index
    %13 = vector.load %arg15[%c0_5, %c0_6] : memref<8x512xbf16, #tpu.memory_space<vmem>>, vector<8x512xbf16>
    %c0_7 = arith.constant 0 : index
    %c0_8 = arith.constant 0 : index
    %14 = vector.load %arg16[%c0_7, %c0_8] : memref<8x512xbf16, #tpu.memory_space<vmem>>, vector<8x512xbf16>
    %15 = vector.extract_strided_slice %12 {offsets = [0, 0], sizes = [8, 128], strides = [1, 1]} : vector<8x512xbf16> to vector<8x128xbf16>
    %16 = vector.extract_strided_slice %13 {offsets = [0, 0], sizes = [8, 128], strides = [1, 1]} : vector<8x512xbf16> to vector<8x128xbf16>
    %cst_9 = arith.constant dense<0.000000e+00> : vector<8x8xf32>
    %17 = tpu.matmul %15, %16, %cst_9 {dimension_numbers = #tpu.dot_dimension_numbers<[1], [1], [0], [0], [0, 0, 1, 0], [], []>} : vector<8x128xbf16>, vector<8x128xbf16>, vector<8x8xf32> -> vector<8x8xf32>
    %cst_10 = arith.constant dense<0xFF800000> : vector<8xf32>
    %18 = vector.multi_reduction <maximumf>, %17, %cst_10 [1] : vector<8x8xf32> to vector<8xf32>
    %19 = vector.shape_cast %18 : vector<8xf32> to vector<8x1xf32>
    %20 = vector.broadcast %19 : vector<8x1xf32> to vector<8x8xf32>
    %21 = arith.subf %17, %20 : vector<8x8xf32>
    %22 = math.exp %21 : vector<8x8xf32>
    %cst_11 = arith.constant dense<0.000000e+00> : vector<8xf32>
    %23 = vector.multi_reduction <add>, %22, %cst_11 [1] : vector<8x8xf32> to vector<8xf32>
    %24 = vector.shape_cast %23 : vector<8xf32> to vector<8x1xf32>
    %25 = tpu.reciprocal %24 {approx = true} : vector<8x1xf32> -> vector<8x1xf32>
    %26 = vector.broadcast %25 : vector<8x1xf32> to vector<8x8xf32>
    %27 = arith.mulf %22, %26 : vector<8x8xf32>
    %28 = arith.truncf %27 : vector<8x8xf32> to vector<8x8xbf16>
    %29 = vector.extract_strided_slice %14 {offsets = [0, 0], sizes = [8, 128], strides = [1, 1]} : vector<8x512xbf16> to vector<8x128xbf16>
    %cst_12 = arith.constant dense<0.000000e+00> : vector<8x128xf32>
    %30 = tpu.matmul %28, %29, %cst_12 {dimension_numbers = #tpu.dot_dimension_numbers<[1], [0], [0], [1], [0, 0, 1, 1], [], []>} : vector<8x8xbf16>, vector<8x128xbf16>, vector<8x128xf32> -> vector<8x128xf32>
    %31 = arith.truncf %30 : vector<8x128xf32> to vector<8x128xbf16>
    %c0_13 = arith.constant 0 : index
    %c0_14 = arith.constant 0 : index
    %32 = vector.load %arg17[%c0_13, %c0_14] : memref<8x512xbf16, #tpu.memory_space<vmem>>, vector<8x128xbf16>
    tpu.vector_store %arg17[%c0_13, %c0_14], %31 {strides = array<i32>} : memref<8x512xbf16, #tpu.memory_space<vmem>>, vector<8x128xbf16>,
    %33 = vector.extract_strided_slice %12 {offsets = [0, 128], sizes = [8, 128], strides = [1, 1]} : vector<8x512xbf16> to vector<8x128xbf16>
    %34 = vector.extract_strided_slice %13 {offsets = [0, 128], sizes = [8, 128], strides = [1, 1]} : vector<8x512xbf16> to vector<8x128xbf16>
    %cst_15 = arith.constant dense<0.000000e+00> : vector<8x8xf32>
    %35 = tpu.matmul %33, %34, %cst_15 {dimension_numbers = #tpu.dot_dimension_numbers<[1], [1], [0], [0], [0, 0, 1, 0], [], []>} : vector<8x128xbf16>, vector<8x128xbf16>, vector<8x8xf32> -> vector<8x8xf32>
    %cst_16 = arith.constant dense<0xFF800000> : vector<8xf32>
    %36 = vector.multi_reduction <maximumf>, %35, %cst_16 [1] : vector<8x8xf32> to vector<8xf32>
    %37 = vector.shape_cast %36 : vector<8xf32> to vector<8x1xf32>
    %38 = vector.broadcast %37 : vector<8x1xf32> to vector<8x8xf32>
    %39 = arith.subf %35, %38 : vector<8x8xf32>
    %40 = math.exp %39 : vector<8x8xf32>
    %cst_17 = arith.constant dense<0.000000e+00> : vector<8xf32>
    %41 = vector.multi_reduction <add>, %40, %cst_17 [1] : vector<8x8xf32> to vector<8xf32>
    %42 = vector.shape_cast %41 : vector<8xf32> to vector<8x1xf32>
    %43 = tpu.reciprocal %42 {approx = true} : vector<8x1xf32> -> vector<8x1xf32>
    %44 = vector.broadcast %43 : vector<8x1xf32> to vector<8x8xf32>
    %45 = arith.mulf %40, %44 : vector<8x8xf32>
    %46 = arith.truncf %45 : vector<8x8xf32> to vector<8x8xbf16>
    %47 = vector.extract_strided_slice %14 {offsets = [0, 128], sizes = [8, 128], strides = [1, 1]} : vector<8x512xbf16> to vector<8x128xbf16>
    %cst_18 = arith.constant dense<0.000000e+00> : vector<8x128xf32>
    %48 = tpu.matmul %46, %47, %cst_18 {dimension_numbers = #tpu.dot_dimension_numbers<[1], [0], [0], [1], [0, 0, 1, 1], [], []>} : vector<8x8xbf16>, vector<8x128xbf16>, vector<8x128xf32> -> vector<8x128xf32>
    %49 = arith.truncf %48 : vector<8x128xf32> to vector<8x128xbf16>
    %c0_19 = arith.constant 0 : index
    %c128 = arith.constant 128 : index
    %50 = vector.load %arg17[%c0_19, %c128] : memref<8x512xbf16, #tpu.memory_space<vmem>>, vector<8x128xbf16>
    tpu.vector_store %arg17[%c0_19, %c128], %49 {strides = array<i32>} : memref<8x512xbf16, #tpu.memory_space<vmem>>, vector<8x128xbf16>,
    %51 = vector.extract_strided_slice %12 {offsets = [0, 256], sizes = [8, 128], strides = [1, 1]} : vector<8x512xbf16> to vector<8x128xbf16>
    %52 = vector.extract_strided_slice %13 {offsets = [0, 256], sizes = [8, 128], strides = [1, 1]} : vector<8x512xbf16> to vector<8x128xbf16>
    %cst_20 = arith.constant dense<0.000000e+00> : vector<8x8xf32>
    %53 = tpu.matmul %51, %52, %cst_20 {dimension_numbers = #tpu.dot_dimension_numbers<[1], [1], [0], [0], [0, 0, 1, 0], [], []>} : vector<8x128xbf16>, vector<8x128xbf16>, vector<8x8xf32> -> vector<8x8xf32>
    %cst_21 = arith.constant dense<0xFF800000> : vector<8xf32>
    %54 = vector.multi_reduction <maximumf>, %53, %cst_21 [1] : vector<8x8xf32> to vector<8xf32>
    %55 = vector.shape_cast %54 : vector<8xf32> to vector<8x1xf32>
    %56 = vector.broadcast %55 : vector<8x1xf32> to vector<8x8xf32>
    %57 = arith.subf %53, %56 : vector<8x8xf32>
    %58 = math.exp %57 : vector<8x8xf32>
    %cst_22 = arith.constant dense<0.000000e+00> : vector<8xf32>
    %59 = vector.multi_reduction <add>, %58, %cst_22 [1] : vector<8x8xf32> to vector<8xf32>
    %60 = vector.shape_cast %59 : vector<8xf32> to vector<8x1xf32>
    %61 = tpu.reciprocal %60 {approx = true} : vector<8x1xf32> -> vector<8x1xf32>
    %62 = vector.broadcast %61 : vector<8x1xf32> to vector<8x8xf32>
    %63 = arith.mulf %58, %62 : vector<8x8xf32>
    %64 = arith.truncf %63 : vector<8x8xf32> to vector<8x8xbf16>
    %65 = vector.extract_strided_slice %14 {offsets = [0, 256], sizes = [8, 128], strides = [1, 1]} : vector<8x512xbf16> to vector<8x128xbf16>
    %cst_23 = arith.constant dense<0.000000e+00> : vector<8x128xf32>
    %66 = tpu.matmul %64, %65, %cst_23 {dimension_numbers = #tpu.dot_dimension_numbers<[1], [0], [0], [1], [0, 0, 1, 1], [], []>} : vector<8x8xbf16>, vector<8x128xbf16>, vector<8x128xf32> -> vector<8x128xf32>
    %67 = arith.truncf %66 : vector<8x128xf32> to vector<8x128xbf16>
    %c0_24 = arith.constant 0 : index
    %c256 = arith.constant 256 : index
    %68 = vector.load %arg17[%c0_24, %c256] : memref<8x512xbf16, #tpu.memory_space<vmem>>, vector<8x128xbf16>
    tpu.vector_store %arg17[%c0_24, %c256], %67 {strides = array<i32>} : memref<8x512xbf16, #tpu.memory_space<vmem>>, vector<8x128xbf16>,
    %69 = vector.extract_strided_slice %12 {offsets = [0, 384], sizes = [8, 128], strides = [1, 1]} : vector<8x512xbf16> to vector<8x128xbf16>
    %70 = vector.extract_strided_slice %13 {offsets = [0, 384], sizes = [8, 128], strides = [1, 1]} : vector<8x512xbf16> to vector<8x128xbf16>
    %cst_25 = arith.constant dense<0.000000e+00> : vector<8x8xf32>
    %71 = tpu.matmul %69, %70, %cst_25 {dimension_numbers = #tpu.dot_dimension_numbers<[1], [1], [0], [0], [0, 0, 1, 0], [], []>} : vector<8x128xbf16>, vector<8x128xbf16>, vector<8x8xf32> -> vector<8x8xf32>
    %cst_26 = arith.constant dense<0xFF800000> : vector<8xf32>
    %72 = vector.multi_reduction <maximumf>, %71, %cst_26 [1] : vector<8x8xf32> to vector<8xf32>
    %73 = vector.shape_cast %72 : vector<8xf32> to vector<8x1xf32>
    %74 = vector.broadcast %73 : vector<8x1xf32> to vector<8x8xf32>
    %75 = arith.subf %71, %74 : vector<8x8xf32>
    %76 = math.exp %75 : vector<8x8xf32>
    %cst_27 = arith.constant dense<0.000000e+00> : vector<8xf32>
    %77 = vector.multi_reduction <add>, %76, %cst_27 [1] : vector<8x8xf32> to vector<8xf32>
    %78 = vector.shape_cast %77 : vector<8xf32> to vector<8x1xf32>
    %79 = tpu.reciprocal %78 {approx = true} : vector<8x1xf32> -> vector<8x1xf32>
    %80 = vector.broadcast %79 : vector<8x1xf32> to vector<8x8xf32>
    %81 = arith.mulf %76, %80 : vector<8x8xf32>
    %82 = arith.truncf %81 : vector<8x8xf32> to vector<8x8xbf16>
    %83 = vector.extract_strided_slice %14 {offsets = [0, 384], sizes = [8, 128], strides = [1, 1]} : vector<8x512xbf16> to vector<8x128xbf16>
    %cst_28 = arith.constant dense<0.000000e+00> : vector<8x128xf32>
    %84 = tpu.matmul %82, %83, %cst_28 {dimension_numbers = #tpu.dot_dimension_numbers<[1], [0], [0], [1], [0, 0, 1, 1], [], []>} : vector<8x8xbf16>, vector<8x128xbf16>, vector<8x128xf32> -> vector<8x128xf32>
    %85 = arith.truncf %84 : vector<8x128xf32> to vector<8x128xbf16>
    %c0_29 = arith.constant 0 : index
    %c384 = arith.constant 384 : index
    %86 = vector.load %arg17[%c0_29, %c384] : memref<8x512xbf16, #tpu.memory_space<vmem>>, vector<8x128xbf16>
    tpu.vector_store %arg17[%c0_29, %c384], %85 {strides = array<i32>} : memref<8x512xbf16, #tpu.memory_space<vmem>>, vector<8x128xbf16>,
    %c0_30 = arith.constant 0 : index
    %c0_31 = arith.constant 0 : index
    %87 = vector.load %arg17[%c0_30, %c0_31] : memref<8x512xbf16, #tpu.memory_space<vmem>>, vector<8x512xbf16>
    %c0_32 = arith.constant 0 : index
    %c0_33 = arith.constant 0 : index
    %88 = vector.load %arg11[%c0_32, %c0_33] : memref<512x32xbf16, #tpu.memory_space<vmem>>, vector<512x32xbf16>
    %cst_34 = arith.constant dense<0.000000e+00> : vector<8x32xf32>
    %89 = tpu.matmul %87, %88, %cst_34 {dimension_numbers = #tpu.dot_dimension_numbers<[1], [0], [0], [1], [0, 0, 1, 1], [], []>} : vector<8x512xbf16>, vector<512x32xbf16>, vector<8x32xf32> -> vector<8x32xf32>
    %c0_35 = arith.constant 0 : index
    %c0_36 = arith.constant 0 : index
    %90 = vector.load %arg12[%c0_35, %c0_36] : memref<1x32xf32, #tpu.memory_space<vmem>>, vector<1x32xf32>
    %91 = vector.broadcast %90 : vector<1x32xf32> to vector<8x32xf32>
    %92 = arith.addf %89, %91 : vector<8x32xf32>
    %c0_37 = arith.constant 0 : index
    %c0_38 = arith.constant 0 : index
    %c0_39 = arith.constant 0 : index
    %93 = vector.load %arg13[%c0_37, %c0_38, %c0_39] : memref<1x8x32xf32, #tpu.memory_space<vmem>>, vector<1x8x32xf32>
    %94 = vector.shape_cast %93 : vector<1x8x32xf32> to vector<8x32xf32>
    %95 = vector.shape_cast %92 : vector<8x32xf32> to vector<1x8x32xf32>
    tpu.vector_store %arg13[%c0_37, %c0_38, %c0_39], %95 {strides = array<i32>} : memref<1x8x32xf32, #tpu.memory_space<vmem>>, vector<1x8x32xf32>,
    return
  }
  func.func @transform_0(%arg0: i32, %arg1: i32) -> (i32, i32, i32) {
    %c0_i32 = arith.constant 0 : i32
    %c0_i32_0 = arith.constant 0 : i32
    %c0_i32_1 = arith.constant 0 : i32
    return %arg0, %c0_i32, %c0_i32_0 : i32, i32, i32
  }
  func.func @transform_1(%arg0: i32, %arg1: i32) -> (i32, i32) {
    %c0_i32 = arith.constant 0 : i32
    %c0_i32_0 = arith.constant 0 : i32
    %c0_i32_1 = arith.constant 0 : i32
    return %c0_i32, %c0_i32_0 : i32, i32
  }
  func.func @transform_2(%arg0: i32, %arg1: i32) -> (i32, i32) {
    %c0_i32 = arith.constant 0 : i32
    %c0_i32_0 = arith.constant 0 : i32
    %c0_i32_1 = arith.constant 0 : i32
    return %c0_i32, %c0_i32_0 : i32, i32
  }
  func.func @transform_3(%arg0: i32, %arg1: i32) -> (i32, i32) {
    %c0_i32 = arith.constant 0 : i32
    %c0_i32_0 = arith.constant 0 : i32
    %c0_i32_1 = arith.constant 0 : i32
    return %c0_i32, %c0_i32_0 : i32, i32
  }
  func.func @transform_4(%arg0: i32, %arg1: i32) -> (i32, i32) {
    %c0_i32 = arith.constant 0 : i32
    %c0_i32_0 = arith.constant 0 : i32
    %c0_i32_1 = arith.constant 0 : i32
    return %c0_i32, %c0_i32_0 : i32, i32
  }
  func.func @transform_5(%arg0: i32, %arg1: i32) -> (i32, i32) {
    %c0_i32 = arith.constant 0 : i32
    %c0_i32_0 = arith.constant 0 : i32
    %c0_i32_1 = arith.constant 0 : i32
    return %c0_i32, %c0_i32_0 : i32, i32
  }
  func.func @transform_6(%arg0: i32, %arg1: i32) -> (i32, i32) {
    %c0_i32 = arith.constant 0 : i32
    %c0_i32_0 = arith.constant 0 : i32
    %c0_i32_1 = arith.constant 0 : i32
    return %c0_i32, %c0_i32_0 : i32, i32
  }
  func.func @transform_7(%arg0: i32, %arg1: i32) -> (i32, i32) {
    %c0_i32 = arith.constant 0 : i32
    %c0_i32_0 = arith.constant 0 : i32
    %c0_i32_1 = arith.constant 0 : i32
    return %c0_i32, %c0_i32_0 : i32, i32
  }
  func.func @transform_8(%arg0: i32, %arg1: i32) -> (i32, i32) {
    %c0_i32 = arith.constant 0 : i32
    %c0_i32_0 = arith.constant 0 : i32
    %c0_i32_1 = arith.constant 0 : i32
    return %c0_i32, %c0_i32_0 : i32, i32
  }
  func.func @transform_9(%arg0: i32, %arg1: i32) -> (i32, i32) {
    %c0_i32 = arith.constant 0 : i32
    %c0_i32_0 = arith.constant 0 : i32
    %c0_i32_1 = arith.constant 0 : i32
    return %c0_i32, %c0_i32_0 : i32, i32
  }
  func.func @transform_10(%arg0: i32, %arg1: i32) -> (i32, i32) {
    %c0_i32 = arith.constant 0 : i32
    %c0_i32_0 = arith.constant 0 : i32
    %c0_i32_1 = arith.constant 0 : i32
    return %c0_i32, %c0_i32_0 : i32, i32
  }
  func.func @transform_11(%arg0: i32, %arg1: i32) -> (i32, i32, i32) {
    %c0_i32 = arith.constant 0 : i32
    %c0_i32_0 = arith.constant 0 : i32
    return %arg0, %arg1, %c0_i32 : i32, i32, i32
  }
}

</mosaic_0001>

<llo_original>
// kernel: tpu_custom_call.1
$region0: #{tpu_custom_call.1}
  #allocation0 [shape = 'u32[]', space=smem, size = 0x4, offset = 0x4, fixed_abs, tag = 'smem constant byte address 0x4 - core index']
  #allocation1 [shape = 'u32[144,128]{1,0:T(1,128)}', space=vmem, size = 0x12000, scoped, tag = 'internal scratch']
  #allocation2 [shape = 'bf16[8,32]{1,0:T(8,128)(2,1)}', space=vmem, size = 0x800, scoped, tag = 'scratch operand']
  #allocation3 [shape = 'bf16[8,512]{1,0:T(8,128)(2,1)}', space=vmem, size = 0x2000, scoped, tag = 'scratch operand']
  #allocation4 [shape = 'bf16[8,512]{1,0:T(8,128)(2,1)}', space=vmem, size = 0x2000, scoped, tag = 'scratch operand']
  #allocation5 [shape = 'bf16[8,512]{1,0:T(8,128)(2,1)}', space=vmem, size = 0x2000, scoped, tag = 'scratch operand']
  %s0 = inlined_call_operand.vmem [shape: bf16[2,8,32], index: 0, kind: input, shape index: {}]
  %s1 = inlined_call_operand.vmem [shape: f32[1,32], index: 1, kind: input, shape index: {}]
  %s2 = inlined_call_operand.vmem [shape: f32[1,32], index: 2, kind: input, shape index: {}]
  %s3 = inlined_call_operand.vmem [shape: bf16[32,512], index: 3, kind: input, shape index: {}]
  %s4 = inlined_call_operand.vmem [shape: f32[1,512], index: 4, kind: input, shape index: {}]
  %s5 = inlined_call_operand.vmem [shape: bf16[32,512], index: 5, kind: input, shape index: {}]
  %s6 = inlined_call_operand.vmem [shape: f32[1,512], index: 6, kind: input, shape index: {}]
  %s7 = inlined_call_operand.vmem [shape: bf16[32,512], index: 7, kind: input, shape index: {}]
  %s8 = inlined_call_operand.vmem [shape: f32[1,512], index: 8, kind: input, shape index: {}]
  %s9 = inlined_call_operand.vmem [shape: bf16[512,32], index: 9, kind: input, shape index: {}]
  %s10 = inlined_call_operand.vmem [shape: f32[1,32], index: 10, kind: input, shape index: {}]
  %s11 = inlined_call_operand.hbm [shape: f32[2,8,32], index: 11, kind: output, shape index: {}]
  %s12 = sld [smem:[#allocation0]]
  $region81: #{tpu_custom_call.1} parent=0
    _
  %s14 = ssub.s32 1, %s12
  %s15 = scalar_select 0, %s14, %s12
  $region1: #{tpu_custom_call.1} parent=0
    #allocation6 [shape = 'u8[8192]{0}', space=vmem, size = 0x2000, scoped, tag = 'output window, operand 0']
    #allocation7 [shape = 's32[2]{0}', space=sflag, size = 0x8, scoped, tag = 'scoped memory for tpu_custom_call.1']
    %16 = vsyncpa [#allocation7], 0
    %s17 = scalar_lea.sflag [#allocation7], 1
    %18 = vsyncpa %s17, 0
    loop: start=0, step=1, limit=4
    $region2: #{tpu_custom_call.1} parent=1 // loop_pre_header
      _
    $region3: #{tpu_custom_call.1} parent=1 // loop_header
      %s20 = sphi 0, %s24
      %p21 = scmp.ge.s32.totalorder %s20, 4
      %s27 = sphi 0, %s39
      %s28 = sphi 0, %s35
      %s29 = sphi 0, %s27
      %s30 = sphi 0, %s28
      %s31 = sphi 0, %s29
      %s32 = sphi 0, %s30
      %s42 = sphi 0, %s44
      %s45 = sphi 0, %s42
      %s46 = sphi 0, %s45
      %s62 = sphi 0, %s46
      %s66 = sphi 0, %s66
      %s68 = sphi 0, %s66
      %s69 = sphi 0, %s68
      %s83 = sphi 0, %s69
      %s87 = sphi 0, %s87
      %s89 = sphi 0, %s87
      %s90 = sphi 0, %s89
      %s104 = sphi 0, %s90
      %s108 = sphi 0, %s108
      %s110 = sphi 0, %s108
      %s111 = sphi 0, %s110
      %s125 = sphi 0, %s111
      %s129 = sphi 0, %s129
      %s131 = sphi 0, %s129
      %s132 = sphi 0, %s131
      %s146 = sphi 0, %s132
      %s150 = sphi 0, %s150
      %s152 = sphi 0, %s150
      %s153 = sphi 0, %s152
      %s167 = sphi 0, %s153
      %s171 = sphi 0, %s171
      %s173 = sphi 0, %s171
      %s174 = sphi 0, %s173
      %s188 = sphi 0, %s174
      %s192 = sphi 0, %s192
      %s194 = sphi 0, %s192
      %s195 = sphi 0, %s194
      %s209 = sphi 0, %s195
      %s213 = sphi 0, %s213
      %s215 = sphi 0, %s213
      %s216 = sphi 0, %s215
      %s230 = sphi 0, %s216
      %s234 = sphi 0, %s234
      %s236 = sphi 0, %s234
      %s237 = sphi 0, %s236
      %s251 = sphi 0, %s237
      %s255 = sphi 0, %s255
      %s257 = sphi 0, %s255
      %s258 = sphi 0, %s257
      %s272 = sphi 0, %s258
      %s280 = sphi 0, %s282
      %s283 = sphi 0, %s280
      %s284 = sphi 0, %s283
      %s300 = sphi 0, %s284
    $region4: #{tpu_custom_call.1} parent=1 // loop_header_branch
      %23 = sbr.rel (%p21) target = $region8
    $region5: #{tpu_custom_call.1} parent=1 // loop_body
      %s25 = ssub.s32 %s20, 1
      %s26 = ssub.s32 %s20, 2
      %s33 = sadd.s32 1, %s28
      %p34 = scmp.ge.s32.totalorder %s33, 1
      %s35 = scalar_select %p34, 0, %s33
      %s36 = sadd.s32 1, %s27
      %s37 = scalar_select %p34, %s36, %s27
      %p38 = scmp.ge.s32.totalorder %s37, 2
      %s39 = scalar_select %p38, 0, %s37
      %s40 = ssub.s32 %s27, %s39
      %p41 = scmp.eq.s32.totalorder %s40, 0
      %s43 = sadd.s32 %s42, 1
      %s44 = scalar_select %p41, %s42, %s43
      %p47 = pneg %p41
      %p48 = scmp.eq.s32.totalorder %s20, 1
      %p49 = por %p47, %p48
      %p50 = scmp.ne.s32.totalorder %s42, %s45
      %p51 = scmp.eq.s32.totalorder %s20, 0
      %p52 = por %p50, %p51
      %p53 = scmp.ne.s32.totalorder %s42, %s45
      %p54 = scmp.eq.s32.totalorder %s25, 1
      %p55 = por %p53, %p54
      %p56 = scmp.ne.s32.totalorder %s45, %s46
      %p57 = scmp.eq.s32.totalorder %s25, 0
      %p58 = por %p56, %p57
      %p59 = scmp.ne.s32.totalorder %s45, %s46
      %p60 = scmp.eq.s32.totalorder %s26, 1
      %p61 = por %p59, %p60
      %p63 = scmp.ne.s32.totalorder %s46, %s62
      %p64 = scmp.eq.s32.totalorder %s26, 0
      %p65 = por %p63, %p64
      %s67 = sadd.s32 %s66, 1
      %p70 = scmp.eq.s32.totalorder %s20, 1
      %p71 = scmp.ne.s32.totalorder %s66, %s68
      %p72 = scmp.eq.s32.totalorder %s20, 0
      %p73 = por %p71, %p72
      %p74 = scmp.ne.s32.totalorder %s66, %s68
      %p75 = scmp.eq.s32.totalorder %s25, 1
      %p76 = por %p74, %p75
      %p77 = scmp.ne.s32.totalorder %s68, %s69
      %p78 = scmp.eq.s32.totalorder %s25, 0
      %p79 = por %p77, %p78
      %p80 = scmp.ne.s32.totalorder %s68, %s69
      %p81 = scmp.eq.s32.totalorder %s26, 1
      %p82 = por %p80, %p81
      %p84 = scmp.ne.s32.totalorder %s69, %s83
      %p85 = scmp.eq.s32.totalorder %s26, 0
      %p86 = por %p84, %p85
      %s88 = sadd.s32 %s87, 1
      %p91 = scmp.eq.s32.totalorder %s20, 1
      %p92 = scmp.ne.s32.totalorder %s87, %s89
      %p93 = scmp.eq.s32.totalorder %s20, 0
      %p94 = por %p92, %p93
      %p95 = scmp.ne.s32.totalorder %s87, %s89
      %p96 = scmp.eq.s32.totalorder %s25, 1
      %p97 = por %p95, %p96
      %p98 = scmp.ne.s32.totalorder %s89, %s90
      %p99 = scmp.eq.s32.totalorder %s25, 0
      %p100 = por %p98, %p99
      %p101 = scmp.ne.s32.totalorder %s89, %s90
      %p102 = scmp.eq.s32.totalorder %s26, 1
      %p103 = por %p101, %p102
      %p105 = scmp.ne.s32.totalorder %s90, %s104
      %p106 = scmp.eq.s32.totalorder %s26, 0
      %p107 = por %p105, %p106
      %s109 = sadd.s32 %s108, 1
      %p112 = scmp.eq.s32.totalorder %s20, 1
      %p113 = scmp.ne.s32.totalorder %s108, %s110
      %p114 = scmp.eq.s32.totalorder %s20, 0
      %p115 = por %p113, %p114
      %p116 = scmp.ne.s32.totalorder %s108, %s110
      %p117 = scmp.eq.s32.totalorder %s25, 1
      %p118 = por %p116, %p117
      %p119 = scmp.ne.s32.totalorder %s110, %s111
      %p120 = scmp.eq.s32.totalorder %s25, 0
      %p121 = por %p119, %p120
      %p122 = scmp.ne.s32.totalorder %s110, %s111
      %p123 = scmp.eq.s32.totalorder %s26, 1
      %p124 = por %p122, %p123
      %p126 = scmp.ne.s32.totalorder %s111, %s125
      %p127 = scmp.eq.s32.totalorder %s26, 0
      %p128 = por %p126, %p127
      %s130 = sadd.s32 %s129, 1
      %p133 = scmp.eq.s32.totalorder %s20, 1
      %p134 = scmp.ne.s32.totalorder %s129, %s131
      %p135 = scmp.eq.s32.totalorder %s20, 0
      %p136 = por %p134, %p135
      %p137 = scmp.ne.s32.totalorder %s129, %s131
      %p138 = scmp.eq.s32.totalorder %s25, 1
      %p139 = por %p137, %p138
      %p140 = scmp.ne.s32.totalorder %s131, %s132
      %p141 = scmp.eq.s32.totalorder %s25, 0
      %p142 = por %p140, %p141
      %p143 = scmp.ne.s32.totalorder %s131, %s132
      %p144 = scmp.eq.s32.totalorder %s26, 1
      %p145 = por %p143, %p144
      %p147 = scmp.ne.s32.totalorder %s132, %s146
      %p148 = scmp.eq.s32.totalorder %s26, 0
      %p149 = por %p147, %p148
      %s151 = sadd.s32 %s150, 1
      %p154 = scmp.eq.s32.totalorder %s20, 1
      %p155 = scmp.ne.s32.totalorder %s150, %s152
      %p156 = scmp.eq.s32.totalorder %s20, 0
      %p157 = por %p155, %p156
      %p158 = scmp.ne.s32.totalorder %s150, %s152
      %p159 = scmp.eq.s32.totalorder %s25, 1
      %p160 = por %p158, %p159
      %p161 = scmp.ne.s32.totalorder %s152, %s153
      %p162 = scmp.eq.s32.totalorder %s25, 0
      %p163 = por %p161, %p162
      %p164 = scmp.ne.s32.totalorder %s152, %s153
      %p165 = scmp.eq.s32.totalorder %s26, 1
      %p166 = por %p164, %p165
      %p168 = scmp.ne.s32.totalorder %s153, %s167
      %p169 = scmp.eq.s32.totalorder %s26, 0
      %p170 = por %p168, %p169
      %s172 = sadd.s32 %s171, 1
      %p175 = scmp.eq.s32.totalorder %s20, 1
      %p176 = scmp.ne.s32.totalorder %s171, %s173
      %p177 = scmp.eq.s32.totalorder %s20, 0
      %p178 = por %p176, %p177
      %p179 = scmp.ne.s32.totalorder %s171, %s173
      %p180 = scmp.eq.s32.totalorder %s25, 1
      %p181 = por %p179, %p180
      %p182 = scmp.ne.s32.totalorder %s173, %s174
      %p183 = scmp.eq.s32.totalorder %s25, 0
      %p184 = por %p182, %p183
      %p185 = scmp.ne.s32.totalorder %s173, %s174
      %p186 = scmp.eq.s32.totalorder %s26, 1
      %p187 = por %p185, %p186
      %p189 = scmp.ne.s32.totalorder %s174, %s188
      %p190 = scmp.eq.s32.totalorder %s26, 0
      %p191 = por %p189, %p190
      %s193 = sadd.s32 %s192, 1
      %p196 = scmp.eq.s32.totalorder %s20, 1
      %p197 = scmp.ne.s32.totalorder %s192, %s194
      %p198 = scmp.eq.s32.totalorder %s20, 0
      %p199 = por %p197, %p198
      %p200 = scmp.ne.s32.totalorder %s192, %s194
      %p201 = scmp.eq.s32.totalorder %s25, 1
      %p202 = por %p200, %p201
      %p203 = scmp.ne.s32.totalorder %s194, %s195
      %p204 = scmp.eq.s32.totalorder %s25, 0
      %p205 = por %p203, %p204
      %p206 = scmp.ne.s32.totalorder %s194, %s195
      %p207 = scmp.eq.s32.totalorder %s26, 1
      %p208 = por %p206, %p207
      %p210 = scmp.ne.s32.totalorder %s195, %s209
      %p211 = scmp.eq.s32.totalorder %s26, 0
      %p212 = por %p210, %p211
      %s214 = sadd.s32 %s213, 1
      %p217 = scmp.eq.s32.totalorder %s20, 1
      %p218 = scmp.ne.s32.totalorder %s213, %s215
      %p219 = scmp.eq.s32.totalorder %s20, 0
      %p220 = por %p218, %p219
      %p221 = scmp.ne.s32.totalorder %s213, %s215
      %p222 = scmp.eq.s32.totalorder %s25, 1
      %p223 = por %p221, %p222
      %p224 = scmp.ne.s32.totalorder %s215, %s216
      %p225 = scmp.eq.s32.totalorder %s25, 0
      %p226 = por %p224, %p225
      %p227 = scmp.ne.s32.totalorder %s215, %s216
      %p228 = scmp.eq.s32.totalorder %s26, 1
      %p229 = por %p227, %p228
      %p231 = scmp.ne.s32.totalorder %s216, %s230
      %p232 = scmp.eq.s32.totalorder %s26, 0
      %p233 = por %p231, %p232
      %s235 = sadd.s32 %s234, 1
      %p238 = scmp.eq.s32.totalorder %s20, 1
      %p239 = scmp.ne.s32.totalorder %s234, %s236
      %p240 = scmp.eq.s32.totalorder %s20, 0
      %p241 = por %p239, %p240
      %p242 = scmp.ne.s32.totalorder %s234, %s236
      %p243 = scmp.eq.s32.totalorder %s25, 1
      %p244 = por %p242, %p243
      %p245 = scmp.ne.s32.totalorder %s236, %s237
      %p246 = scmp.eq.s32.totalorder %s25, 0
      %p247 = por %p245, %p246
      %p248 = scmp.ne.s32.totalorder %s236, %s237
      %p249 = scmp.eq.s32.totalorder %s26, 1
      %p250 = por %p248, %p249
      %p252 = scmp.ne.s32.totalorder %s237, %s251
      %p253 = scmp.eq.s32.totalorder %s26, 0
      %p254 = por %p252, %p253
      %s256 = sadd.s32 %s255, 1
      %p259 = scmp.eq.s32.totalorder %s20, 1
      %p260 = scmp.ne.s32.totalorder %s255, %s257
      %p261 = scmp.eq.s32.totalorder %s20, 0
      %p262 = por %p260, %p261
      %p263 = scmp.ne.s32.totalorder %s255, %s257
      %p264 = scmp.eq.s32.totalorder %s25, 1
      %p265 = por %p263, %p264
      %p266 = scmp.ne.s32.totalorder %s257, %s258
      %p267 = scmp.eq.s32.totalorder %s25, 0
      %p268 = por %p266, %p267
      %p269 = scmp.ne.s32.totalorder %s257, %s258
      %p270 = scmp.eq.s32.totalorder %s26, 1
      %p271 = por %p269, %p270
      %p273 = scmp.ne.s32.totalorder %s258, %s272
      %p274 = scmp.eq.s32.totalorder %s26, 0
      %p275 = por %p273, %p274
      %s276 = ssub.s32 %s27, %s39
      %s277 = ssub.s32 %s28, %s35
      %s278 = sor.u32 %s276, %s277
      %p279 = scmp.eq.s32.totalorder %s278, 0
      %s281 = sadd.s32 %s280, 1
      %s282 = scalar_select %p279, %s280, %s281
      %p285 = pneg %p279
      %p286 = scmp.eq.s32.totalorder %s20, 1
      %p287 = por %p285, %p286
      %p288 = scmp.ne.s32.totalorder %s280, %s283
      %p289 = scmp.eq.s32.totalorder %s20, 0
      %p290 = por %p288, %p289
      %p291 = scmp.ne.s32.totalorder %s280, %s283
      %p292 = scmp.eq.s32.totalorder %s25, 1
      %p293 = por %p291, %p292
      %p294 = scmp.ne.s32.totalorder %s283, %s284
      %p295 = scmp.eq.s32.totalorder %s25, 0
      %p296 = por %p294, %p295
      %p297 = scmp.ne.s32.totalorder %s283, %s284
      %p298 = scmp.eq.s32.totalorder %s26, 1
      %p299 = por %p297, %p298
      %p301 = scmp.ne.s32.totalorder %s284, %s300
      %p302 = scmp.eq.s32.totalorder %s26, 0
      %p303 = por %p301, %p302
      %p304 = scmp.le.s32.totalorder 1, %s20
      %p305 = scmp.lt.s32.totalorder %s20, 3
      %p306 = pnand %p304, %p305
      %p307 = pneg %p306
      // Predicated region
      $region9: #{tpu_custom_call.1} parent=5 // pred_check
        _
      $region10: #{tpu_custom_call.1} parent=5 // pred_check_branch
        %309 = sbr.rel (%p306) target = $region12
      $region11: #{tpu_custom_call.1} parent=5 // pred_region
        %s310 = ssub.s32 %s20, 1
        // Predicated region
        $region13: #{tpu_custom_call.1} parent=11 // pred_check
          %p311 = pneg %p79
        $region14: #{tpu_custom_call.1} parent=11 // pred_check_branch
          %313 = sbr.rel (%p311) target = $region16
        $region15: #{tpu_custom_call.1} parent=11 // pred_region
          _
        $region16: #{tpu_custom_call.1} parent=11 // pred_fallthru
          _
        // Predicated region
        $region17: #{tpu_custom_call.1} parent=11 // pred_check
          %p314 = pneg %p100
        $region18: #{tpu_custom_call.1} parent=11 // pred_check_branch
          %316 = sbr.rel (%p314) target = $region20
        $region19: #{tpu_custom_call.1} parent=11 // pred_region
          _
        $region20: #{tpu_custom_call.1} parent=11 // pred_fallthru
          _
        // Predicated region
        $region21: #{tpu_custom_call.1} parent=11 // pred_check
          %p317 = pneg %p121
        $region22: #{tpu_custom_call.1} parent=11 // pred_check_branch
          %319 = sbr.rel (%p317) target = $region24
        $region23: #{tpu_custom_call.1} parent=11 // pred_region
          _
        $region24: #{tpu_custom_call.1} parent=11 // pred_fallthru
          _
        // Predicated region
        $region25: #{tpu_custom_call.1} parent=11 // pred_check
          %p320 = pneg %p142
        $region26: #{tpu_custom_call.1} parent=11 // pred_check_branch
          %322 = sbr.rel (%p320) target = $region28
        $region27: #{tpu_custom_call.1} parent=11 // pred_region
          _
        $region28: #{tpu_custom_call.1} parent=11 // pred_fallthru
          _
        // Predicated region
        $region29: #{tpu_custom_call.1} parent=11 // pred_check
          %p323 = pneg %p163
        $region30: #{tpu_custom_call.1} parent=11 // pred_check_branch
          %325 = sbr.rel (%p323) target = $region32
        $region31: #{tpu_custom_call.1} parent=11 // pred_region
          _
        $region32: #{tpu_custom_call.1} parent=11 // pred_fallthru
          _
        // Predicated region
        $region33: #{tpu_custom_call.1} parent=11 // pred_check
          %p326 = pneg %p184
        $region34: #{tpu_custom_call.1} parent=11 // pred_check_branch
          %328 = sbr.rel (%p326) target = $region36
        $region35: #{tpu_custom_call.1} parent=11 // pred_region
          _
        $region36: #{tpu_custom_call.1} parent=11 // pred_fallthru
          _
        // Predicated region
        $region37: #{tpu_custom_call.1} parent=11 // pred_check
          %p329 = pneg %p205
        $region38: #{tpu_custom_call.1} parent=11 // pred_check_branch
          %331 = sbr.rel (%p329) target = $region40
        $region39: #{tpu_custom_call.1} parent=11 // pred_region
          _
        $region40: #{tpu_custom_call.1} parent=11 // pred_fallthru
          _
        // Predicated region
        $region41: #{tpu_custom_call.1} parent=11 // pred_check
          %p332 = pneg %p226
        $region42: #{tpu_custom_call.1} parent=11 // pred_check_branch
          %334 = sbr.rel (%p332) target = $region44
        $region43: #{tpu_custom_call.1} parent=11 // pred_region
          _
        $region44: #{tpu_custom_call.1} parent=11 // pred_fallthru
          _
        // Predicated region
        $region45: #{tpu_custom_call.1} parent=11 // pred_check
          %p335 = pneg %p247
        $region46: #{tpu_custom_call.1} parent=11 // pred_check_branch
          %337 = sbr.rel (%p335) target = $region48
        $region47: #{tpu_custom_call.1} parent=11 // pred_region
          _
        $region48: #{tpu_custom_call.1} parent=11 // pred_fallthru
          _
        // Predicated region
        $region49: #{tpu_custom_call.1} parent=11 // pred_check
          %p338 = pneg %p268
        $region50: #{tpu_custom_call.1} parent=11 // pred_check_branch
          %340 = sbr.rel (%p338) target = $region52
        $region51: #{tpu_custom_call.1} parent=11 // pred_region
          _
        $region52: #{tpu_custom_call.1} parent=11 // pred_fallthru
          _
      $region12: #{tpu_custom_call.1} parent=5 // pred_fallthru
        _
      %p341 = scmp.lt.s32.totalorder %s20, 2
      // Predicated region
      $region53: #{tpu_custom_call.1} parent=5 // pred_check
        %p342 = pneg %p341
      $region54: #{tpu_custom_call.1} parent=5 // pred_check_branch
        %344 = sbr.rel (%p342) target = $region56
      $region55: #{tpu_custom_call.1} parent=5 // pred_region
        // Predicated region
        $region57: #{tpu_custom_call.1} parent=55 // pred_check
          %p345 = pneg %p52
        $region58: #{tpu_custom_call.1} parent=55 // pred_check_branch
          %347 = sbr.rel (%p345) target = $region60
        $region59: #{tpu_custom_call.1} parent=55 // pred_region
          %p348 = scmp.lt.s32.totalorder %s27, 1
          %s349 = scalar_select %p348, %s27, 1
          %s350 = smul.addr %s349, 4
          %s351 = scalar_lea.vmem %s0, %s350
        $region60: #{tpu_custom_call.1} parent=55 // pred_fallthru
          _
      $region56: #{tpu_custom_call.1} parent=5 // pred_fallthru
        _
      %p352 = scmp.le.s32.totalorder 1, %s20
      %p353 = scmp.lt.s32.totalorder %s20, 3
      %p354 = pnand %p352, %p353
      %p355 = pneg %p354
      // Predicated region
      $region61: #{tpu_custom_call.1} parent=5 // pred_check
        _
      $region62: #{tpu_custom_call.1} parent=5 // pred_check_branch
        %357 = sbr.rel (%p354) target = $region64
      $region63: #{tpu_custom_call.1} parent=5 // pred_region
        %s358 = ssub.s32 %s20, 1
        %p359 = scmp.lt.s32.totalorder %s29, 1
        %s360 = scalar_select %p359, %s29, 1
        %s361 = smul.addr %s360, 4
        %s362 = scalar_lea.vmem %s0, %s361
        %p363 = pneg %p58
        %p364 = pneg %p55
        %p365 = pneg %p79
        %p366 = pneg %p76
        %p367 = pneg %p100
        %p368 = pneg %p97
        %p369 = pneg %p121
        %p370 = pneg %p118
        %p371 = pneg %p142
        %p372 = pneg %p139
        %p373 = pneg %p163
        %p374 = pneg %p160
        %p375 = pneg %p184
        %p376 = pneg %p181
        %p377 = pneg %p205
        %p378 = pneg %p202
        %p379 = pneg %p226
        %p380 = pneg %p223
        %p381 = pneg %p247
        %p382 = pneg %p244
        %p383 = pneg %p268
        %p384 = pneg %p265
        %p385 = pneg %p296
        %p386 = pneg %p293
        %s387 = sand.u32 %s283, 1
        %s388 = scalar_lea.sflag [#allocation7], %s387
        %s389 = sand.u32 %s283, 1
        %s390 = smul.addr %s389, 8
        %s391 = scalar_lea.vmem [#allocation6], %s390
        %p392 = scmp.lt.s32.totalorder %s29, 1
        %s393 = scalar_select %p392, %s29, 1
        %s394 = smul.addr %s393, 4
        %s395 = scalar_lea.vmem %s0, %s394
        %p397 = scmp.eq.s32.totalorder %s30, 0
        // Predicated region
        $region65: #{tpu_custom_call.1} parent=63 // pred_check
          %p398 = pneg %p397
        $region66: #{tpu_custom_call.1} parent=63 // pred_check_branch
          %400 = sbr.rel (%p398) target = $region68
        $region67: #{tpu_custom_call.1} parent=63 // pred_region
          %v401 = vld [vmem:[%s395] sm:$0xf]
          %v402 = vunpack.c.l.bf16 %v401
          %vm403 = vcmask 261120
          %v404 = vsel %vm403, %v402, 0.0
          %405 = vadd.xlane.f32.xlu0 %v404
          %v406 = vpop.xlane.xlu0 %405
          %v407 = vrcp.pop 32.0
          %v408 = vmul.f32 %v406, %v407
          %v409 = vsub.f32 %v402, %v408
          %v410 = vmul.f32 %v409, %v409
          %v411 = vsel %vm403, %v410, 0.0
          %412 = vadd.xlane.f32.xlu0 %v411
          %v413 = vpop.xlane.xlu0 %412
          %v414 = vmul.f32 %v413, %v407
          %v415 = vadd.f32 %v414, 1e-05
          %v416 = vrsqrt.pop %v415
          %v417 = vmul.f32 %v409, %v416
          %v418 = vld [vmem:[%s1] sm:$0x1]
          %v420 = vlaneseq
          %v421 = vshrl.u32 %v420, 7
          %v422 = vsub.s32 0, %v421
          %v423 = vrot.slane %v418, %v422
          %v425 = vmul.f32 %v417, %v423
          %v426 = vld [vmem:[%s2] sm:$0x1]
          %v428 = vlaneseq
          %v429 = vshrl.u32 %v428, 7
          %v430 = vsub.s32 0, %v429
          %v431 = vrot.slane %v426, %v430
          %v433 = vadd.f32 %v425, %v431
          %v434 = vpack.c.bf16 %v433, %v433
          %vm435 = vcmask 257024
          %436 = vst.msk [vmem:[#allocation2] sm:$0xf] %vm435, %v434
          %v437 = vld [vmem:[%s5] sm:$0xff]
          %v438 = vld [vmem:[%s5 + $0x8] sm:$0xff]
          %v439 = vld [vmem:[%s5 + $0x10] sm:$0xff]
          %v440 = vld [vmem:[%s5 + $0x18] sm:$0xff]
          %v441 = vld [vmem:[%s5 + $0x20] sm:$0xff]
          %v442 = vld [vmem:[%s5 + $0x28] sm:$0xff]
          %v443 = vld [vmem:[%s5 + $0x30] sm:$0xff]
          %v444 = vld [vmem:[%s5 + $0x38] sm:$0xff]
          %v445 = vld [vmem:[%s6] sm:$0xf]
          %v447 = vlaneseq
          %v448 = vshrl.u32 %v447, 7
          %v449 = vsub.s32 0, %v448
          %v450 = vrot.slane %v445, %v449
          %v451 = vlaneseq
          %v452 = vshrl.u32 %v451, 7
          %v453 = vsub.s32 1, %v452
          %v454 = vrot.slane %v445, %v453
          %v455 = vlaneseq
          %v456 = vshrl.u32 %v455, 7
          %v457 = vsub.s32 2, %v456
          %v458 = vrot.slane %v445, %v457
          %v459 = vlaneseq
          %v460 = vshrl.u32 %v459, 7
          %v461 = vsub.s32 3, %v460
          %v462 = vrot.slane %v445, %v461
          %v475 = vunpack.c.l.b16 %v437
          %v476 = vunpack.c.h.b16 %v437
          %v477 = vunpack.c.l.b16 %v438
          %v478 = vunpack.c.h.b16 %v438
          %v479 = vunpack.c.l.b16 %v439
          %v480 = vunpack.c.h.b16 %v439
          %v481 = vunpack.c.l.b16 %v440
          %v482 = vunpack.c.h.b16 %v440
          %v483 = vunpack.c.l.b16 %v441
          %v484 = vunpack.c.h.b16 %v441
          %v485 = vunpack.c.l.b16 %v442
          %v486 = vunpack.c.h.b16 %v442
          %v487 = vunpack.c.l.b16 %v443
          %v488 = vunpack.c.h.b16 %v443
          %v489 = vunpack.c.l.b16 %v444
          %v490 = vunpack.c.h.b16 %v444
          %v491 = vpack.c.b16 %v479, %v475
          %v492 = vpack.c.b16 %v480, %v476
          %v493 = vpack.c.b16 %v481, %v477
          %v494 = vpack.c.b16 %v482, %v478
          %v495 = vpack.c.b16 %v487, %v483
          %v496 = vpack.c.b16 %v488, %v484
          %v497 = vpack.c.b16 %v489, %v485
          %v498 = vpack.c.b16 %v490, %v486
          %v508 = vsel %vm403, %v434, 0
          %510 = vmatprep.subr.bf16.mxu0 %v492
          %511 = vmatpush1.bf16.msra.mxu0 %v491
          %512 = vmatprep.subr.bf16.mxu0 %v496
          %513 = vmatpush1.bf16.msra.mxu0 %v495
          %514 = vmatprep.subr.bf16.mxu0 0
          %515 = vmatpush1.bf16.msra.mxu0 0
          %516 = vmatprep.subr.bf16.mxu0 0
          %517 = vmatpush1.bf16.msra.mxu0 0
          %518 = vmatprep.subr.bf16.mxu0 0
          %519 = vmatpush1.bf16.msra.mxu0 0
          %520 = vmatprep.subr.bf16.mxu0 0
          %521 = vmatpush1.bf16.msra.mxu0 0
          %522 = vmatprep.subr.bf16.mxu0 0
          %523 = vmatpush1.bf16.msra.mxu0 0
          %524 = vmatprep.subr.bf16.mxu0 0
          %525 = vmatpush1.bf16.msra.mxu0 0
          %526 = vmatprep.subr.bf16.mxu0 0
          %527 = vmatpush1.bf16.msra.mxu0 0
          %528 = vmatprep.subr.bf16.mxu0 0
          %529 = vmatpush1.bf16.msra.mxu0 0
          %530 = vmatprep.subr.bf16.mxu0 0
          %531 = vmatpush1.bf16.msra.mxu0 0
          %532 = vmatprep.subr.bf16.mxu0 0
          %533 = vmatpush1.bf16.msra.mxu0 0
          %534 = vmatprep.subr.bf16.mxu0 0
          %535 = vmatpush1.bf16.msra.mxu0 0
          %536 = vmatprep.subr.bf16.mxu0 0
          %537 = vmatpush1.bf16.msra.mxu0 0
          %538 = vmatprep.subr.bf16.mxu0 0
          %539 = vmatpush1.bf16.msra.mxu0 0
          %540 = vmatprep.subr.bf16.mxu0 0
          %541 = vmatpush1.bf16.msra.mxu0 0
          %542 = vmatprep.mubr.bf16.mxu0 0
          %543 = vmatmul.mubr.bf16.gmra.mrb[0].mxu0 %v508
          %v544 = vpop.f32.mrb[0].mxu0
          %v545 = vadd.f32 %v450, %v544
          %v546 = vpop.f32.mrb[0].mxu0
          %v547 = vadd.f32 %v454, %v546
          %v548 = vpop.f32.mrb[0].mxu0
          %v549 = vpop.f32.mrb[0].mxu0
          %550 = vdwg.mxu0
          %551 = vmatprep.subr.bf16.mxu0 %v494
          %552 = vmatpush1.bf16.msra.mxu0 %v493
          %553 = vmatprep.subr.bf16.mxu0 %v498
          %554 = vmatpush1.bf16.msra.mxu0 %v497
          %555 = vmatprep.subr.bf16.mxu0 0
          %556 = vmatpush1.bf16.msra.mxu0 0
          %557 = vmatprep.subr.bf16.mxu0 0
          %558 = vmatpush1.bf16.msra.mxu0 0
          %559 = vmatprep.subr.bf16.mxu0 0
          %560 = vmatpush1.bf16.msra.mxu0 0
          %561 = vmatprep.subr.bf16.mxu0 0
          %562 = vmatpush1.bf16.msra.mxu0 0
          %563 = vmatprep.subr.bf16.mxu0 0
          %564 = vmatpush1.bf16.msra.mxu0 0
          %565 = vmatprep.subr.bf16.mxu0 0
          %566 = vmatpush1.bf16.msra.mxu0 0
          %567 = vmatprep.subr.bf16.mxu0 0
          %568 = vmatpush1.bf16.msra.mxu0 0
          %569 = vmatprep.subr.bf16.mxu0 0
          %570 = vmatpush1.bf16.msra.mxu0 0
          %571 = vmatprep.subr.bf16.mxu0 0
          %572 = vmatpush1.bf16.msra.mxu0 0
          %573 = vmatprep.subr.bf16.mxu0 0
          %574 = vmatpush1.bf16.msra.mxu0 0
          %575 = vmatprep.subr.bf16.mxu0 0
          %576 = vmatpush1.bf16.msra.mxu0 0
          %577 = vmatprep.subr.bf16.mxu0 0
          %578 = vmatpush1.bf16.msra.mxu0 0
          %579 = vmatprep.subr.bf16.mxu0 0
          %580 = vmatpush1.bf16.msra.mxu0 0
          %581 = vmatprep.subr.bf16.mxu0 0
          %582 = vmatpush1.bf16.msra.mxu0 0
          %583 = vmatprep.mubr.bf16.mxu0 0
          %584 = vmatmul.mubr.bf16.gmra.mrb[0].mxu0 %v508
          %v585 = vpop.f32.mrb[0].mxu0
          %v586 = vadd.f32 %v458, %v585
          %v587 = vpop.f32.mrb[0].mxu0
          %v588 = vadd.f32 %v462, %v587
          %v589 = vpop.f32.mrb[0].mxu0
          %v590 = vpop.f32.mrb[0].mxu0
          %591 = vdwg.mxu0
          %v592 = vpack.c.bf16 %v545, %v545
          %v593 = vpack.c.bf16 %v547, %v547
          %v594 = vpack.c.bf16 %v586, %v586
          %v595 = vpack.c.bf16 %v588, %v588
          %v600 = vunpack.c.l.b16 %v592
          %v601 = vunpack.c.l.b16 %v593
          %v602 = vunpack.c.l.b16 %v594
          %v603 = vunpack.c.l.b16 %v595
          %v604 = vpack.c.b16 %v601, %v600
          %v605 = vpack.c.b16 %v603, %v602
          %608 = vst [vmem:[#allocation3] sm:$0xff] %v604
          %609 = vst [vmem:[#allocation3 + $0x8] sm:$0xff] %v605
          %v610 = vld [vmem:[%s7] sm:$0xff]
          %v611 = vld [vmem:[%s7 + $0x8] sm:$0xff]
          %v612 = vld [vmem:[%s7 + $0x10] sm:$0xff]
          %v613 = vld [vmem:[%s7 + $0x18] sm:$0xff]
          %v614 = vld [vmem:[%s7 + $0x20] sm:$0xff]
          %v615 = vld [vmem:[%s7 + $0x28] sm:$0xff]
          %v616 = vld [vmem:[%s7 + $0x30] sm:$0xff]
          %v617 = vld [vmem:[%s7 + $0x38] sm:$0xff]
          %v618 = vld [vmem:[%s8] sm:$0xf]
          %v620 = vlaneseq
          %v621 = vshrl.u32 %v620, 7
          %v622 = vsub.s32 0, %v621
          %v623 = vrot.slane %v618, %v622
          %v624 = vlaneseq
          %v625 = vshrl.u32 %v624, 7
          %v626 = vsub.s32 1, %v625
          %v627 = vrot.slane %v618, %v626
          %v628 = vlaneseq
          %v629 = vshrl.u32 %v628, 7
          %v630 = vsub.s32 2, %v629
          %v631 = vrot.slane %v618, %v630
          %v632 = vlaneseq
          %v633 = vshrl.u32 %v632, 7
          %v634 = vsub.s32 3, %v633
          %v635 = vrot.slane %v618, %v634
          %v648 = vunpack.c.l.b16 %v610
          %v649 = vunpack.c.h.b16 %v610
          %v650 = vunpack.c.l.b16 %v611
          %v651 = vunpack.c.h.b16 %v611
          %v652 = vunpack.c.l.b16 %v612
          %v653 = vunpack.c.h.b16 %v612
          %v654 = vunpack.c.l.b16 %v613
          %v655 = vunpack.c.h.b16 %v613
          %v656 = vunpack.c.l.b16 %v614
          %v657 = vunpack.c.h.b16 %v614
          %v658 = vunpack.c.l.b16 %v615
          %v659 = vunpack.c.h.b16 %v615
          %v660 = vunpack.c.l.b16 %v616
          %v661 = vunpack.c.h.b16 %v616
          %v662 = vunpack.c.l.b16 %v617
          %v663 = vunpack.c.h.b16 %v617
          %v664 = vpack.c.b16 %v652, %v648
          %v665 = vpack.c.b16 %v653, %v649
          %v666 = vpack.c.b16 %v654, %v650
          %v667 = vpack.c.b16 %v655, %v651
          %v668 = vpack.c.b16 %v660, %v656
          %v669 = vpack.c.b16 %v661, %v657
          %v670 = vpack.c.b16 %v662, %v658
          %v671 = vpack.c.b16 %v663, %v659
          %680 = vmatprep.subr.bf16.mxu0 %v665
          %681 = vmatpush1.bf16.msra.mxu0 %v664
          %682 = vmatprep.subr.bf16.mxu0 %v669
          %683 = vmatpush1.bf16.msra.mxu0 %v668
          %684 = vmatprep.subr.bf16.mxu0 0
          %685 = vmatpush1.bf16.msra.mxu0 0
          %686 = vmatprep.subr.bf16.mxu0 0
          %687 = vmatpush1.bf16.msra.mxu0 0
          %688 = vmatprep.subr.bf16.mxu0 0
          %689 = vmatpush1.bf16.msra.mxu0 0
          %690 = vmatprep.subr.bf16.mxu0 0
          %691 = vmatpush1.bf16.msra.mxu0 0
          %692 = vmatprep.subr.bf16.mxu0 0
          %693 = vmatpush1.bf16.msra.mxu0 0
          %694 = vmatprep.subr.bf16.mxu0 0
          %695 = vmatpush1.bf16.msra.mxu0 0
          %696 = vmatprep.subr.bf16.mxu0 0
          %697 = vmatpush1.bf16.msra.mxu0 0
          %698 = vmatprep.subr.bf16.mxu0 0
          %699 = vmatpush1.bf16.msra.mxu0 0
          %700 = vmatprep.subr.bf16.mxu0 0
          %701 = vmatpush1.bf16.msra.mxu0 0
          %702 = vmatprep.subr.bf16.mxu0 0
          %703 = vmatpush1.bf16.msra.mxu0 0
          %704 = vmatprep.subr.bf16.mxu0 0
          %705 = vmatpush1.bf16.msra.mxu0 0
          %706 = vmatprep.subr.bf16.mxu0 0
          %707 = vmatpush1.bf16.msra.mxu0 0
          %708 = vmatprep.subr.bf16.mxu0 0
          %709 = vmatpush1.bf16.msra.mxu0 0
          %710 = vmatprep.subr.bf16.mxu0 0
          %711 = vmatpush1.bf16.msra.mxu0 0
          %712 = vmatprep.mubr.bf16.mxu0 0
          %713 = vmatmul.mubr.bf16.gmra.mrb[0].mxu0 %v508
          %v714 = vpop.f32.mrb[0].mxu0
          %v715 = vadd.f32 %v623, %v714
          %v716 = vpop.f32.mrb[0].mxu0
          %v717 = vadd.f32 %v627, %v716
          %v718 = vpop.f32.mrb[0].mxu0
          %v719 = vpop.f32.mrb[0].mxu0
          %720 = vdwg.mxu0
          %721 = vmatprep.subr.bf16.mxu0 %v667
          %722 = vmatpush1.bf16.msra.mxu0 %v666
          %723 = vmatprep.subr.bf16.mxu0 %v671
          %724 = vmatpush1.bf16.msra.mxu0 %v670
          %725 = vmatprep.subr.bf16.mxu0 0
          %726 = vmatpush1.bf16.msra.mxu0 0
          %727 = vmatprep.subr.bf16.mxu0 0
          %728 = vmatpush1.bf16.msra.mxu0 0
          %729 = vmatprep.subr.bf16.mxu0 0
          %730 = vmatpush1.bf16.msra.mxu0 0
          %731 = vmatprep.subr.bf16.mxu0 0
          %732 = vmatpush1.bf16.msra.mxu0 0
          %733 = vmatprep.subr.bf16.mxu0 0
          %734 = vmatpush1.bf16.msra.mxu0 0
          %735 = vmatprep.subr.bf16.mxu0 0
          %736 = vmatpush1.bf16.msra.mxu0 0
          %737 = vmatprep.subr.bf16.mxu0 0
          %738 = vmatpush1.bf16.msra.mxu0 0
          %739 = vmatprep.subr.bf16.mxu0 0
          %740 = vmatpush1.bf16.msra.mxu0 0
          %741 = vmatprep.subr.bf16.mxu0 0
          %742 = vmatpush1.bf16.msra.mxu0 0
          %743 = vmatprep.subr.bf16.mxu0 0
          %744 = vmatpush1.bf16.msra.mxu0 0
          %745 = vmatprep.subr.bf16.mxu0 0
          %746 = vmatpush1.bf16.msra.mxu0 0
          %747 = vmatprep.subr.bf16.mxu0 0
          %748 = vmatpush1.bf16.msra.mxu0 0
          %749 = vmatprep.subr.bf16.mxu0 0
          %750 = vmatpush1.bf16.msra.mxu0 0
          %751 = vmatprep.subr.bf16.mxu0 0
          %752 = vmatpush1.bf16.msra.mxu0 0
          %753 = vmatprep.mubr.bf16.mxu0 0
          %754 = vmatmul.mubr.bf16.gmra.mrb[0].mxu0 %v508
          %v755 = vpop.f32.mrb[0].mxu0
          %v756 = vadd.f32 %v631, %v755
          %v757 = vpop.f32.mrb[0].mxu0
          %v758 = vadd.f32 %v635, %v757
          %v759 = vpop.f32.mrb[0].mxu0
          %v760 = vpop.f32.mrb[0].mxu0
          %761 = vdwg.mxu0
          %v762 = vpack.c.bf16 %v715, %v715
          %v763 = vpack.c.bf16 %v717, %v717
          %v764 = vpack.c.bf16 %v756, %v756
          %v765 = vpack.c.bf16 %v758, %v758
          %v770 = vunpack.c.l.b16 %v762
          %v771 = vunpack.c.l.b16 %v763
          %v772 = vunpack.c.l.b16 %v764
          %v773 = vunpack.c.l.b16 %v765
          %v774 = vpack.c.b16 %v771, %v770
          %v775 = vpack.c.b16 %v773, %v772
          %778 = vst [vmem:[#allocation4] sm:$0xff] %v774
          %779 = vst [vmem:[#allocation4 + $0x8] sm:$0xff] %v775
        $region68: #{tpu_custom_call.1} parent=63 // pred_fallthru
          _
        %s780 = smul.u32 %s30, 8
        %s781 = sshra.s32 %s780, 3
        %s782 = sand.u32 %s780, 7
        %s783 = smul.addr %s781, 4
        %s784 = scalar_lea.vmem [#allocation2], %s783
        %v785 = vld [vmem:[%s784] sm:$0xf]
        %v786 = vld [vmem:[%s3] sm:$0xff]
        %v787 = vld [vmem:[%s3 + $0x8] sm:$0xff]
        %v788 = vld [vmem:[%s3 + $0x10] sm:$0xff]
        %v789 = vld [vmem:[%s3 + $0x18] sm:$0xff]
        %v790 = vld [vmem:[%s3 + $0x20] sm:$0xff]
        %v791 = vld [vmem:[%s3 + $0x28] sm:$0xff]
        %v792 = vld [vmem:[%s3 + $0x30] sm:$0xff]
        %v793 = vld [vmem:[%s3 + $0x38] sm:$0xff]
        %v794 = vld [vmem:[%s4] sm:$0xf]
        %v796 = vlaneseq
        %v797 = vshrl.u32 %v796, 7
        %v798 = vsub.s32 0, %v797
        %v799 = vrot.slane %v794, %v798
        %v800 = vlaneseq
        %v801 = vshrl.u32 %v800, 7
        %v802 = vsub.s32 1, %v801
        %v803 = vrot.slane %v794, %v802
        %v804 = vlaneseq
        %v805 = vshrl.u32 %v804, 7
        %v806 = vsub.s32 2, %v805
        %v807 = vrot.slane %v794, %v806
        %v808 = vlaneseq
        %v809 = vshrl.u32 %v808, 7
        %v810 = vsub.s32 3, %v809
        %v811 = vrot.slane %v794, %v810
        %v824 = vunpack.c.l.b16 %v786
        %v825 = vunpack.c.h.b16 %v786
        %v826 = vunpack.c.l.b16 %v787
        %v827 = vunpack.c.h.b16 %v787
        %v828 = vunpack.c.l.b16 %v788
        %v829 = vunpack.c.h.b16 %v788
        %v830 = vunpack.c.l.b16 %v789
        %v831 = vunpack.c.h.b16 %v789
        %v832 = vunpack.c.l.b16 %v790
        %v833 = vunpack.c.h.b16 %v790
        %v834 = vunpack.c.l.b16 %v791
        %v835 = vunpack.c.h.b16 %v791
        %v836 = vunpack.c.l.b16 %v792
        %v837 = vunpack.c.h.b16 %v792
        %v838 = vunpack.c.l.b16 %v793
        %v839 = vunpack.c.h.b16 %v793
        %v840 = vpack.c.b16 %v828, %v824
        %v841 = vpack.c.b16 %v829, %v825
        %v842 = vpack.c.b16 %v830, %v826
        %v843 = vpack.c.b16 %v831, %v827
        %v844 = vpack.c.b16 %v836, %v832
        %v845 = vpack.c.b16 %v837, %v833
        %v846 = vpack.c.b16 %v838, %v834
        %v847 = vpack.c.b16 %v839, %v835
        %vm856 = vcmask 261120
        %v858 = vsel %vm856, %v785, 0
        %860 = vmatprep.subr.bf16.mxu0 %v841
        %861 = vmatpush1.bf16.msra.mxu0 %v840
        %862 = vmatprep.subr.bf16.mxu0 %v845
        %863 = vmatpush1.bf16.msra.mxu0 %v844
        %864 = vmatprep.subr.bf16.mxu0 0
        %865 = vmatpush1.bf16.msra.mxu0 0
        %866 = vmatprep.subr.bf16.mxu0 0
        %867 = vmatpush1.bf16.msra.mxu0 0
        %868 = vmatprep.subr.bf16.mxu0 0
        %869 = vmatpush1.bf16.msra.mxu0 0
        %870 = vmatprep.subr.bf16.mxu0 0
        %871 = vmatpush1.bf16.msra.mxu0 0
        %872 = vmatprep.subr.bf16.mxu0 0
        %873 = vmatpush1.bf16.msra.mxu0 0
        %874 = vmatprep.subr.bf16.mxu0 0
        %875 = vmatpush1.bf16.msra.mxu0 0
        %876 = vmatprep.subr.bf16.mxu0 0
        %877 = vmatpush1.bf16.msra.mxu0 0
        %878 = vmatprep.subr.bf16.mxu0 0
        %879 = vmatpush1.bf16.msra.mxu0 0
        %880 = vmatprep.subr.bf16.mxu0 0
        %881 = vmatpush1.bf16.msra.mxu0 0
        %882 = vmatprep.subr.bf16.mxu0 0
        %883 = vmatpush1.bf16.msra.mxu0 0
        %884 = vmatprep.subr.bf16.mxu0 0
        %885 = vmatpush1.bf16.msra.mxu0 0
        %886 = vmatprep.subr.bf16.mxu0 0
        %887 = vmatpush1.bf16.msra.mxu0 0
        %888 = vmatprep.subr.bf16.mxu0 0
        %889 = vmatpush1.bf16.msra.mxu0 0
        %890 = vmatprep.subr.bf16.mxu0 0
        %891 = vmatpush1.bf16.msra.mxu0 0
        %892 = vmatprep.mubr.bf16.mxu0 0
        %893 = vmatmul.mubr.bf16.gmra.mrb[0].mxu0 %v858
        %v894 = vpop.f32.mrb[0].mxu0
        %v895 = vadd.f32 %v799, %v894
        %v896 = vpop.f32.mrb[0].mxu0
        %v897 = vadd.f32 %v803, %v896
        %v898 = vpop.f32.mrb[0].mxu0
        %v899 = vpop.f32.mrb[0].mxu0
        %900 = vdwg.mxu0
        %901 = vmatprep.subr.bf16.mxu0 %v843
        %902 = vmatpush1.bf16.msra.mxu0 %v842
        %903 = vmatprep.subr.bf16.mxu0 %v847
        %904 = vmatpush1.bf16.msra.mxu0 %v846
        %905 = vmatprep.subr.bf16.mxu0 0
        %906 = vmatpush1.bf16.msra.mxu0 0
        %907 = vmatprep.subr.bf16.mxu0 0
        %908 = vmatpush1.bf16.msra.mxu0 0
        %909 = vmatprep.subr.bf16.mxu0 0
        %910 = vmatpush1.bf16.msra.mxu0 0
        %911 = vmatprep.subr.bf16.mxu0 0
        %912 = vmatpush1.bf16.msra.mxu0 0
        %913 = vmatprep.subr.bf16.mxu0 0
        %914 = vmatpush1.bf16.msra.mxu0 0
        %915 = vmatprep.subr.bf16.mxu0 0
        %916 = vmatpush1.bf16.msra.mxu0 0
        %917 = vmatprep.subr.bf16.mxu0 0
        %918 = vmatpush1.bf16.msra.mxu0 0
        %919 = vmatprep.subr.bf16.mxu0 0
        %920 = vmatpush1.bf16.msra.mxu0 0
        %921 = vmatprep.subr.bf16.mxu0 0
        %922 = vmatpush1.bf16.msra.mxu0 0
        %923 = vmatprep.subr.bf16.mxu0 0
        %924 = vmatpush1.bf16.msra.mxu0 0
        %925 = vmatprep.subr.bf16.mxu0 0
        %926 = vmatpush1.bf16.msra.mxu0 0
        %927 = vmatprep.subr.bf16.mxu0 0
        %928 = vmatpush1.bf16.msra.mxu0 0
        %929 = vmatprep.subr.bf16.mxu0 0
        %930 = vmatpush1.bf16.msra.mxu0 0
        %931 = vmatprep.subr.bf16.mxu0 0
        %932 = vmatpush1.bf16.msra.mxu0 0
        %933 = vmatprep.mubr.bf16.mxu0 0
        %934 = vmatmul.mubr.bf16.gmra.mrb[0].mxu0 %v858
        %v935 = vpop.f32.mrb[0].mxu0
        %v936 = vadd.f32 %v807, %v935
        %v937 = vpop.f32.mrb[0].mxu0
        %v938 = vadd.f32 %v811, %v937
        %v939 = vpop.f32.mrb[0].mxu0
        %v940 = vpop.f32.mrb[0].mxu0
        %941 = vdwg.mxu0
        %v942 = vpack.c.bf16 %v895, %v895
        %v943 = vpack.c.bf16 %v897, %v897
        %v944 = vpack.c.bf16 %v936, %v936
        %v945 = vpack.c.bf16 %v938, %v938
        %v946 = vld [vmem:[#allocation3] sm:$0xff]
        %v947 = vld [vmem:[#allocation3 + $0x8] sm:$0xff]
        %v948 = vld [vmem:[#allocation4] sm:$0xff]
        %v949 = vld [vmem:[#allocation4 + $0x8] sm:$0xff]
        %950 = vmatprep.subr.bf16.mxu0 0
        %951 = vmatpush1.bf16.xpose.msra.mxu0 %v946
        %952 = vmatprep.subr.bf16.mxu0 0
        %953 = vmatpush1.bf16.xpose.msra.mxu0 0
        %954 = vmatprep.subr.bf16.mxu0 0
        %955 = vmatpush1.bf16.xpose.msra.mxu0 0
        %956 = vmatprep.subr.bf16.mxu0 0
        %957 = vmatpush1.bf16.xpose.msra.mxu0 0
        %958 = vmatprep.subr.bf16.mxu0 0
        %959 = vmatpush1.bf16.xpose.msra.mxu0 0
        %960 = vmatprep.subr.bf16.mxu0 0
        %961 = vmatpush1.bf16.xpose.msra.mxu0 0
        %962 = vmatprep.subr.bf16.mxu0 0
        %963 = vmatpush1.bf16.xpose.msra.mxu0 0
        %964 = vmatprep.subr.bf16.mxu0 0
        %965 = vmatpush1.bf16.xpose.msra.mxu0 0
        %966 = vmatprep.subr.bf16.mxu0 0
        %967 = vmatpush1.bf16.xpose.msra.mxu0 0
        %968 = vmatprep.subr.bf16.mxu0 0
        %969 = vmatpush1.bf16.xpose.msra.mxu0 0
        %970 = vmatprep.subr.bf16.mxu0 0
        %971 = vmatpush1.bf16.xpose.msra.mxu0 0
        %972 = vmatprep.subr.bf16.mxu0 0
        %973 = vmatpush1.bf16.xpose.msra.mxu0 0
        %974 = vmatprep.subr.bf16.mxu0 0
        %975 = vmatpush1.bf16.xpose.msra.mxu0 0
        %976 = vmatprep.subr.bf16.mxu0 0
        %977 = vmatpush1.bf16.xpose.msra.mxu0 0
        %978 = vmatprep.subr.bf16.mxu0 0
        %979 = vmatpush1.bf16.xpose.msra.mxu0 0
        %980 = vmatprep.subr.bf16.mxu0 0
        %981 = vmatpush1.bf16.xpose.msra.mxu0 0
        %982 = vmatprep.mubr.bf16.mxu0 0
        %983 = vmatmul.mubr.bf16.gmra.mrb[0].mxu0 %v942
        %v984 = vpop.f32.mrb[0].mxu0
        %v985 = vadd.f32 0.0, %v984
        %v986 = vpop.f32.mrb[0].mxu0
        %v987 = vpop.f32.mrb[0].mxu0
        %v988 = vpop.f32.mrb[0].mxu0
        %989 = vdwg.mxu0
        %vm990 = vcmask 64512
        %v991 = vsel %vm990, %v985, -inf
        %992 = vmax.xlane.f32.xlu0 %v991
        %v993 = vpop.xlane.xlu0 %992
        %v994 = vsub.f32 %v985, %v993
        %v995 = vmul.f32 %v994, 1.442695
        %v996 = vpow.pop %v995
        %v997 = vsel %vm990, %v996, 0.0
        %998 = vadd.xlane.f32.xlu0 %v997
        %v999 = vpop.xlane.xlu0 %998
        %v1000 = vrcp.pop %v999
        %v1001 = vmul.f32 %v996, %v1000
        %v1002 = vpack.c.bf16 %v1001, %v1001
        %v1004 = vsel %vm990, %v1002, 0
        %vm1006 = vcmask 1043456
        %v1008 = vsel %vm1006, %v948, 0
        %1010 = vmatprep.subr.bf16.mxu0 0
        %1011 = vmatpush1.bf16.msra.mxu0 %v1008
        %1012 = vmatprep.subr.bf16.mxu0 0
        %1013 = vmatpush1.bf16.msra.mxu0 0
        %1014 = vmatprep.subr.bf16.mxu0 0
        %1015 = vmatpush1.bf16.msra.mxu0 0
        %1016 = vmatprep.subr.bf16.mxu0 0
        %1017 = vmatpush1.bf16.msra.mxu0 0
        %1018 = vmatprep.subr.bf16.mxu0 0
        %1019 = vmatpush1.bf16.msra.mxu0 0
        %1020 = vmatprep.subr.bf16.mxu0 0
        %1021 = vmatpush1.bf16.msra.mxu0 0
        %1022 = vmatprep.subr.bf16.mxu0 0
        %1023 = vmatpush1.bf16.msra.mxu0 0
        %1024 = vmatprep.subr.bf16.mxu0 0
        %1025 = vmatpush1.bf16.msra.mxu0 0
        %1026 = vmatprep.subr.bf16.mxu0 0
        %1027 = vmatpush1.bf16.msra.mxu0 0
        %1028 = vmatprep.subr.bf16.mxu0 0
        %1029 = vmatpush1.bf16.msra.mxu0 0
        %1030 = vmatprep.subr.bf16.mxu0 0
        %1031 = vmatpush1.bf16.msra.mxu0 0
        %1032 = vmatprep.subr.bf16.mxu0 0
        %1033 = vmatpush1.bf16.msra.mxu0 0
        %1034 = vmatprep.subr.bf16.mxu0 0
        %1035 = vmatpush1.bf16.msra.mxu0 0
        %1036 = vmatprep.subr.bf16.mxu0 0
        %1037 = vmatpush1.bf16.msra.mxu0 0
        %1038 = vmatprep.subr.bf16.mxu0 0
        %1039 = vmatpush1.bf16.msra.mxu0 0
        %1040 = vmatprep.subr.bf16.mxu0 0
        %1041 = vmatpush1.bf16.msra.mxu0 0
        %1042 = vmatprep.mubr.bf16.mxu0 0
        %1043 = vmatmul.mubr.bf16.gmra.mrb[0].mxu0 %v1004
        %v1044 = vpop.f32.mrb[0].mxu0
        %v1045 = vadd.f32 0.0, %v1044
        %v1046 = vpop.f32.mrb[0].mxu0
        %v1047 = vpop.f32.mrb[0].mxu0
        %v1048 = vpop.f32.mrb[0].mxu0
        %1049 = vdwg.mxu0
        %v1050 = vpack.c.bf16 %v1045, %v1045
        %1051 = vst [vmem:[#allocation5] sm:$0xf] %v1050
        %v1053 = vunpack.c.h.b16 %v946
        %v1054 = vpack.c.b16 %v1053, %v1053
        %1056 = vmatprep.subr.bf16.mxu0 0
        %1057 = vmatpush1.bf16.xpose.msra.mxu0 %v1054
        %1058 = vmatprep.subr.bf16.mxu0 0
        %1059 = vmatpush1.bf16.xpose.msra.mxu0 0
        %1060 = vmatprep.subr.bf16.mxu0 0
        %1061 = vmatpush1.bf16.xpose.msra.mxu0 0
        %1062 = vmatprep.subr.bf16.mxu0 0
        %1063 = vmatpush1.bf16.xpose.msra.mxu0 0
        %1064 = vmatprep.subr.bf16.mxu0 0
        %1065 = vmatpush1.bf16.xpose.msra.mxu0 0
        %1066 = vmatprep.subr.bf16.mxu0 0
        %1067 = vmatpush1.bf16.xpose.msra.mxu0 0
        %1068 = vmatprep.subr.bf16.mxu0 0
        %1069 = vmatpush1.bf16.xpose.msra.mxu0 0
        %1070 = vmatprep.subr.bf16.mxu0 0
        %1071 = vmatpush1.bf16.xpose.msra.mxu0 0
        %1072 = vmatprep.subr.bf16.mxu0 0
        %1073 = vmatpush1.bf16.xpose.msra.mxu0 0
        %1074 = vmatprep.subr.bf16.mxu0 0
        %1075 = vmatpush1.bf16.xpose.msra.mxu0 0
        %1076 = vmatprep.subr.bf16.mxu0 0
        %1077 = vmatpush1.bf16.xpose.msra.mxu0 0
        %1078 = vmatprep.subr.bf16.mxu0 0
        %1079 = vmatpush1.bf16.xpose.msra.mxu0 0
        %1080 = vmatprep.subr.bf16.mxu0 0
        %1081 = vmatpush1.bf16.xpose.msra.mxu0 0
        %1082 = vmatprep.subr.bf16.mxu0 0
        %1083 = vmatpush1.bf16.xpose.msra.mxu0 0
        %1084 = vmatprep.subr.bf16.mxu0 0
        %1085 = vmatpush1.bf16.xpose.msra.mxu0 0
        %1086 = vmatprep.subr.bf16.mxu0 0
        %1087 = vmatpush1.bf16.xpose.msra.mxu0 0
        %1088 = vmatprep.mubr.bf16.mxu0 0
        %1089 = vmatmul.mubr.bf16.gmra.mrb[0].mxu0 %v943
        %v1090 = vpop.f32.mrb[0].mxu0
        %v1091 = vadd.f32 0.0, %v1090
        %v1092 = vpop.f32.mrb[0].mxu0
        %v1093 = vpop.f32.mrb[0].mxu0
        %v1094 = vpop.f32.mrb[0].mxu0
        %1095 = vdwg.mxu0
        %v1096 = vsel %vm990, %v1091, -inf
        %1097 = vmax.xlane.f32.xlu0 %v1096
        %v1098 = vpop.xlane.xlu0 %1097
        %v1099 = vsub.f32 %v1091, %v1098
        %v1100 = vmul.f32 %v1099, 1.442695
        %v1101 = vpow.pop %v1100
        %v1102 = vsel %vm990, %v1101, 0.0
        %1103 = vadd.xlane.f32.xlu0 %v1102
        %v1104 = vpop.xlane.xlu0 %1103
        %v1105 = vrcp.pop %v1104
        %v1106 = vmul.f32 %v1101, %v1105
        %v1107 = vpack.c.bf16 %v1106, %v1106
        %v1109 = vunpack.c.h.b16 %v948
        %v1110 = vpack.c.b16 %v1109, %v1109
        %v1112 = vsel %vm990, %v1107, 0
        %v1115 = vsel %vm1006, %v1110, 0
        %1117 = vmatprep.subr.bf16.mxu0 0
        %1118 = vmatpush1.bf16.msra.mxu0 %v1115
        %1119 = vmatprep.subr.bf16.mxu0 0
        %1120 = vmatpush1.bf16.msra.mxu0 0
        %1121 = vmatprep.subr.bf16.mxu0 0
        %1122 = vmatpush1.bf16.msra.mxu0 0
        %1123 = vmatprep.subr.bf16.mxu0 0
        %1124 = vmatpush1.bf16.msra.mxu0 0
        %1125 = vmatprep.subr.bf16.mxu0 0
        %1126 = vmatpush1.bf16.msra.mxu0 0
        %1127 = vmatprep.subr.bf16.mxu0 0
        %1128 = vmatpush1.bf16.msra.mxu0 0
        %1129 = vmatprep.subr.bf16.mxu0 0
        %1130 = vmatpush1.bf16.msra.mxu0 0
        %1131 = vmatprep.subr.bf16.mxu0 0
        %1132 = vmatpush1.bf16.msra.mxu0 0
        %1133 = vmatprep.subr.bf16.mxu0 0
        %1134 = vmatpush1.bf16.msra.mxu0 0
        %1135 = vmatprep.subr.bf16.mxu0 0
        %1136 = vmatpush1.bf16.msra.mxu0 0
        %1137 = vmatprep.subr.bf16.mxu0 0
        %1138 = vmatpush1.bf16.msra.mxu0 0
        %1139 = vmatprep.subr.bf16.mxu0 0
        %1140 = vmatpush1.bf16.msra.mxu0 0
        %1141 = vmatprep.subr.bf16.mxu0 0
        %1142 = vmatpush1.bf16.msra.mxu0 0
        %1143 = vmatprep.subr.bf16.mxu0 0
        %1144 = vmatpush1.bf16.msra.mxu0 0
        %1145 = vmatprep.subr.bf16.mxu0 0
        %1146 = vmatpush1.bf16.msra.mxu0 0
        %1147 = vmatprep.subr.bf16.mxu0 0
        %1148 = vmatpush1.bf16.msra.mxu0 0
        %1149 = vmatprep.mubr.bf16.mxu0 0
        %1150 = vmatmul.mubr.bf16.gmra.mrb[0].mxu0 %v1112
        %v1151 = vpop.f32.mrb[0].mxu0
        %v1152 = vadd.f32 0.0, %v1151
        %v1153 = vpop.f32.mrb[0].mxu0
        %v1154 = vpop.f32.mrb[0].mxu0
        %v1155 = vpop.f32.mrb[0].mxu0
        %1156 = vdwg.mxu0
        %v1157 = vpack.c.bf16 %v1152, %v1152
        %1158 = vst [vmem:[#allocation5 + $0x4] sm:$0xf] %v1157
        %1159 = vmatprep.subr.bf16.mxu0 0
        %1160 = vmatpush1.bf16.xpose.msra.mxu0 %v947
        %1161 = vmatprep.subr.bf16.mxu0 0
        %1162 = vmatpush1.bf16.xpose.msra.mxu0 0
        %1163 = vmatprep.subr.bf16.mxu0 0
        %1164 = vmatpush1.bf16.xpose.msra.mxu0 0
        %1165 = vmatprep.subr.bf16.mxu0 0
        %1166 = vmatpush1.bf16.xpose.msra.mxu0 0
        %1167 = vmatprep.subr.bf16.mxu0 0
        %1168 = vmatpush1.bf16.xpose.msra.mxu0 0
        %1169 = vmatprep.subr.bf16.mxu0 0
        %1170 = vmatpush1.bf16.xpose.msra.mxu0 0
        %1171 = vmatprep.subr.bf16.mxu0 0
        %1172 = vmatpush1.bf16.xpose.msra.mxu0 0
        %1173 = vmatprep.subr.bf16.mxu0 0
        %1174 = vmatpush1.bf16.xpose.msra.mxu0 0
        %1175 = vmatprep.subr.bf16.mxu0 0
        %1176 = vmatpush1.bf16.xpose.msra.mxu0 0
        %1177 = vmatprep.subr.bf16.mxu0 0
        %1178 = vmatpush1.bf16.xpose.msra.mxu0 0
        %1179 = vmatprep.subr.bf16.mxu0 0
        %1180 = vmatpush1.bf16.xpose.msra.mxu0 0
        %1181 = vmatprep.subr.bf16.mxu0 0
        %1182 = vmatpush1.bf16.xpose.msra.mxu0 0
        %1183 = vmatprep.subr.bf16.mxu0 0
        %1184 = vmatpush1.bf16.xpose.msra.mxu0 0
        %1185 = vmatprep.subr.bf16.mxu0 0
        %1186 = vmatpush1.bf16.xpose.msra.mxu0 0
        %1187 = vmatprep.subr.bf16.mxu0 0
        %1188 = vmatpush1.bf16.xpose.msra.mxu0 0
        %1189 = vmatprep.subr.bf16.mxu0 0
        %1190 = vmatpush1.bf16.xpose.msra.mxu0 0
        %1191 = vmatprep.mubr.bf16.mxu0 0
        %1192 = vmatmul.mubr.bf16.gmra.mrb[0].mxu0 %v944
        %v1193 = vpop.f32.mrb[0].mxu0
        %v1194 = vadd.f32 0.0, %v1193
        %v1195 = vpop.f32.mrb[0].mxu0
        %v1196 = vpop.f32.mrb[0].mxu0
        %v1197 = vpop.f32.mrb[0].mxu0
        %1198 = vdwg.mxu0
        %v1199 = vsel %vm990, %v1194, -inf
        %1200 = vmax.xlane.f32.xlu0 %v1199
        %v1201 = vpop.xlane.xlu0 %1200
        %v1202 = vsub.f32 %v1194, %v1201
        %v1203 = vmul.f32 %v1202, 1.442695
        %v1204 = vpow.pop %v1203
        %v1205 = vsel %vm990, %v1204, 0.0
        %1206 = vadd.xlane.f32.xlu0 %v1205
        %v1207 = vpop.xlane.xlu0 %1206
        %v1208 = vrcp.pop %v1207
        %v1209 = vmul.f32 %v1204, %v1208
        %v1210 = vpack.c.bf16 %v1209, %v1209
        %v1212 = vsel %vm990, %v1210, 0
        %v1215 = vsel %vm1006, %v949, 0
        %1217 = vmatprep.subr.bf16.mxu0 0
        %1218 = vmatpush1.bf16.msra.mxu0 %v1215
        %1219 = vmatprep.subr.bf16.mxu0 0
        %1220 = vmatpush1.bf16.msra.mxu0 0
        %1221 = vmatprep.subr.bf16.mxu0 0
        %1222 = vmatpush1.bf16.msra.mxu0 0
        %1223 = vmatprep.subr.bf16.mxu0 0
        %1224 = vmatpush1.bf16.msra.mxu0 0
        %1225 = vmatprep.subr.bf16.mxu0 0
        %1226 = vmatpush1.bf16.msra.mxu0 0
        %1227 = vmatprep.subr.bf16.mxu0 0
        %1228 = vmatpush1.bf16.msra.mxu0 0
        %1229 = vmatprep.subr.bf16.mxu0 0
        %1230 = vmatpush1.bf16.msra.mxu0 0
        %1231 = vmatprep.subr.bf16.mxu0 0
        %1232 = vmatpush1.bf16.msra.mxu0 0
        %1233 = vmatprep.subr.bf16.mxu0 0
        %1234 = vmatpush1.bf16.msra.mxu0 0
        %1235 = vmatprep.subr.bf16.mxu0 0
        %1236 = vmatpush1.bf16.msra.mxu0 0
        %1237 = vmatprep.subr.bf16.mxu0 0
        %1238 = vmatpush1.bf16.msra.mxu0 0
        %1239 = vmatprep.subr.bf16.mxu0 0
        %1240 = vmatpush1.bf16.msra.mxu0 0
        %1241 = vmatprep.subr.bf16.mxu0 0
        %1242 = vmatpush1.bf16.msra.mxu0 0
        %1243 = vmatprep.subr.bf16.mxu0 0
        %1244 = vmatpush1.bf16.msra.mxu0 0
        %1245 = vmatprep.subr.bf16.mxu0 0
        %1246 = vmatpush1.bf16.msra.mxu0 0
        %1247 = vmatprep.subr.bf16.mxu0 0
        %1248 = vmatpush1.bf16.msra.mxu0 0
        %1249 = vmatprep.mubr.bf16.mxu0 0
        %1250 = vmatmul.mubr.bf16.gmra.mrb[0].mxu0 %v1212
        %v1251 = vpop.f32.mrb[0].mxu0
        %v1252 = vadd.f32 0.0, %v1251
        %v1253 = vpop.f32.mrb[0].mxu0
        %v1254 = vpop.f32.mrb[0].mxu0
        %v1255 = vpop.f32.mrb[0].mxu0
        %1256 = vdwg.mxu0
        %v1257 = vpack.c.bf16 %v1252, %v1252
        %1258 = vst [vmem:[#allocation5 + $0x8] sm:$0xf] %v1257
        %v1260 = vunpack.c.h.b16 %v947
        %v1261 = vpack.c.b16 %v1260, %v1260
        %1263 = vmatprep.subr.bf16.mxu0 0
        %1264 = vmatpush1.bf16.xpose.msra.mxu0 %v1261
        %1265 = vmatprep.subr.bf16.mxu0 0
        %1266 = vmatpush1.bf16.xpose.msra.mxu0 0
        %1267 = vmatprep.subr.bf16.mxu0 0
        %1268 = vmatpush1.bf16.xpose.msra.mxu0 0
        %1269 = vmatprep.subr.bf16.mxu0 0
        %1270 = vmatpush1.bf16.xpose.msra.mxu0 0
        %1271 = vmatprep.subr.bf16.mxu0 0
        %1272 = vmatpush1.bf16.xpose.msra.mxu0 0
        %1273 = vmatprep.subr.bf16.mxu0 0
        %1274 = vmatpush1.bf16.xpose.msra.mxu0 0
        %1275 = vmatprep.subr.bf16.mxu0 0
        %1276 = vmatpush1.bf16.xpose.msra.mxu0 0
        %1277 = vmatprep.subr.bf16.mxu0 0
        %1278 = vmatpush1.bf16.xpose.msra.mxu0 0
        %1279 = vmatprep.subr.bf16.mxu0 0
        %1280 = vmatpush1.bf16.xpose.msra.mxu0 0
        %1281 = vmatprep.subr.bf16.mxu0 0
        %1282 = vmatpush1.bf16.xpose.msra.mxu0 0
        %1283 = vmatprep.subr.bf16.mxu0 0
        %1284 = vmatpush1.bf16.xpose.msra.mxu0 0
        %1285 = vmatprep.subr.bf16.mxu0 0
        %1286 = vmatpush1.bf16.xpose.msra.mxu0 0
        %1287 = vmatprep.subr.bf16.mxu0 0
        %1288 = vmatpush1.bf16.xpose.msra.mxu0 0
        %1289 = vmatprep.subr.bf16.mxu0 0
        %1290 = vmatpush1.bf16.xpose.msra.mxu0 0
        %1291 = vmatprep.subr.bf16.mxu0 0
        %1292 = vmatpush1.bf16.xpose.msra.mxu0 0
        %1293 = vmatprep.subr.bf16.mxu0 0
        %1294 = vmatpush1.bf16.xpose.msra.mxu0 0
        %1295 = vmatprep.mubr.bf16.mxu0 0
        %1296 = vmatmul.mubr.bf16.gmra.mrb[0].mxu0 %v945
        %v1297 = vpop.f32.mrb[0].mxu0
        %v1298 = vadd.f32 0.0, %v1297
        %v1299 = vpop.f32.mrb[0].mxu0
        %v1300 = vpop.f32.mrb[0].mxu0
        %v1301 = vpop.f32.mrb[0].mxu0
        %1302 = vdwg.mxu0
        %v1303 = vsel %vm990, %v1298, -inf
        %1304 = vmax.xlane.f32.xlu0 %v1303
        %v1305 = vpop.xlane.xlu0 %1304
        %v1306 = vsub.f32 %v1298, %v1305
        %v1307 = vmul.f32 %v1306, 1.442695
        %v1308 = vpow.pop %v1307
        %v1309 = vsel %vm990, %v1308, 0.0
        %1310 = vadd.xlane.f32.xlu0 %v1309
        %v1311 = vpop.xlane.xlu0 %1310
        %v1312 = vrcp.pop %v1311
        %v1313 = vmul.f32 %v1308, %v1312
        %v1314 = vpack.c.bf16 %v1313, %v1313
        %v1316 = vunpack.c.h.b16 %v949
        %v1317 = vpack.c.b16 %v1316, %v1316
        %v1319 = vsel %vm990, %v1314, 0
        %v1322 = vsel %vm1006, %v1317, 0
        %1324 = vmatprep.subr.bf16.mxu0 0
        %1325 = vmatpush1.bf16.msra.mxu0 %v1322
        %1326 = vmatprep.subr.bf16.mxu0 0
        %1327 = vmatpush1.bf16.msra.mxu0 0
        %1328 = vmatprep.subr.bf16.mxu0 0
        %1329 = vmatpush1.bf16.msra.mxu0 0
        %1330 = vmatprep.subr.bf16.mxu0 0
        %1331 = vmatpush1.bf16.msra.mxu0 0
        %1332 = vmatprep.subr.bf16.mxu0 0
        %1333 = vmatpush1.bf16.msra.mxu0 0
        %1334 = vmatprep.subr.bf16.mxu0 0
        %1335 = vmatpush1.bf16.msra.mxu0 0
        %1336 = vmatprep.subr.bf16.mxu0 0
        %1337 = vmatpush1.bf16.msra.mxu0 0
        %1338 = vmatprep.subr.bf16.mxu0 0
        %1339 = vmatpush1.bf16.msra.mxu0 0
        %1340 = vmatprep.subr.bf16.mxu0 0
        %1341 = vmatpush1.bf16.msra.mxu0 0
        %1342 = vmatprep.subr.bf16.mxu0 0
        %1343 = vmatpush1.bf16.msra.mxu0 0
        %1344 = vmatprep.subr.bf16.mxu0 0
        %1345 = vmatpush1.bf16.msra.mxu0 0
        %1346 = vmatprep.subr.bf16.mxu0 0
        %1347 = vmatpush1.bf16.msra.mxu0 0
        %1348 = vmatprep.subr.bf16.mxu0 0
        %1349 = vmatpush1.bf16.msra.mxu0 0
        %1350 = vmatprep.subr.bf16.mxu0 0
        %1351 = vmatpush1.bf16.msra.mxu0 0
        %1352 = vmatprep.subr.bf16.mxu0 0
        %1353 = vmatpush1.bf16.msra.mxu0 0
        %1354 = vmatprep.subr.bf16.mxu0 0
        %1355 = vmatpush1.bf16.msra.mxu0 0
        %1356 = vmatprep.mubr.bf16.mxu0 0
        %1357 = vmatmul.mubr.bf16.gmra.mrb[0].mxu0 %v1319
        %v1358 = vpop.f32.mrb[0].mxu0
        %v1359 = vadd.f32 0.0, %v1358
        %v1360 = vpop.f32.mrb[0].mxu0
        %v1361 = vpop.f32.mrb[0].mxu0
        %v1362 = vpop.f32.mrb[0].mxu0
        %1363 = vdwg.mxu0
        %v1364 = vpack.c.bf16 %v1359, %v1359
        %1365 = vst [vmem:[#allocation5 + $0xc] sm:$0xf] %v1364
        %v1366 = vld [vmem:[#allocation5] sm:$0xff]
        %v1367 = vld [vmem:[#allocation5 + $0x8] sm:$0xff]
        %v1368 = vld [vmem:[%s9] sm:$0xf]
        %v1369 = vld [vmem:[%s9 + $0x4] sm:$0xf]
        %v1370 = vld [vmem:[%s9 + $0x8] sm:$0xf]
        %v1371 = vld [vmem:[%s9 + $0xc] sm:$0xf]
        %v1372 = vld [vmem:[%s9 + $0x10] sm:$0xf]
        %v1373 = vld [vmem:[%s9 + $0x14] sm:$0xf]
        %v1374 = vld [vmem:[%s9 + $0x18] sm:$0xf]
        %v1375 = vld [vmem:[%s9 + $0x1c] sm:$0xf]
        %v1376 = vld [vmem:[%s9 + $0x20] sm:$0xf]
        %v1377 = vld [vmem:[%s9 + $0x24] sm:$0xf]
        %v1378 = vld [vmem:[%s9 + $0x28] sm:$0xf]
        %v1379 = vld [vmem:[%s9 + $0x2c] sm:$0xf]
        %v1380 = vld [vmem:[%s9 + $0x30] sm:$0xf]
        %v1381 = vld [vmem:[%s9 + $0x34] sm:$0xf]
        %v1382 = vld [vmem:[%s9 + $0x38] sm:$0xf]
        %v1383 = vld [vmem:[%s9 + $0x3c] sm:$0xf]
        %v1384 = vld [vmem:[%s9 + $0x40] sm:$0xf]
        %v1385 = vld [vmem:[%s9 + $0x44] sm:$0xf]
        %v1386 = vld [vmem:[%s9 + $0x48] sm:$0xf]
        %v1387 = vld [vmem:[%s9 + $0x4c] sm:$0xf]
        %v1388 = vld [vmem:[%s9 + $0x50] sm:$0xf]
        %v1389 = vld [vmem:[%s9 + $0x54] sm:$0xf]
        %v1390 = vld [vmem:[%s9 + $0x58] sm:$0xf]
        %v1391 = vld [vmem:[%s9 + $0x5c] sm:$0xf]
        %v1392 = vld [vmem:[%s9 + $0x60] sm:$0xf]
        %v1393 = vld [vmem:[%s9 + $0x64] sm:$0xf]
        %v1394 = vld [vmem:[%s9 + $0x68] sm:$0xf]
        %v1395 = vld [vmem:[%s9 + $0x6c] sm:$0xf]
        %v1396 = vld [vmem:[%s9 + $0x70] sm:$0xf]
        %v1397 = vld [vmem:[%s9 + $0x74] sm:$0xf]
        %v1398 = vld [vmem:[%s9 + $0x78] sm:$0xf]
        %v1399 = vld [vmem:[%s9 + $0x7c] sm:$0xf]
        %v1400 = vld [vmem:[%s9 + $0x80] sm:$0xf]
        %v1401 = vld [vmem:[%s9 + $0x84] sm:$0xf]
        %v1402 = vld [vmem:[%s9 + $0x88] sm:$0xf]
        %v1403 = vld [vmem:[%s9 + $0x8c] sm:$0xf]
        %v1404 = vld [vmem:[%s9 + $0x90] sm:$0xf]
        %v1405 = vld [vmem:[%s9 + $0x94] sm:$0xf]
        %v1406 = vld [vmem:[%s9 + $0x98] sm:$0xf]
        %v1407 = vld [vmem:[%s9 + $0x9c] sm:$0xf]
        %v1408 = vld [vmem:[%s9 + $0xa0] sm:$0xf]
        %v1409 = vld [vmem:[%s9 + $0xa4] sm:$0xf]
        %v1410 = vld [vmem:[%s9 + $0xa8] sm:$0xf]
        %v1411 = vld [vmem:[%s9 + $0xac] sm:$0xf]
        %v1412 = vld [vmem:[%s9 + $0xb0] sm:$0xf]
        %v1413 = vld [vmem:[%s9 + $0xb4] sm:$0xf]
        %v1414 = vld [vmem:[%s9 + $0xb8] sm:$0xf]
        %v1415 = vld [vmem:[%s9 + $0xbc] sm:$0xf]
        %v1416 = vld [vmem:[%s9 + $0xc0] sm:$0xf]
        %v1417 = vld [vmem:[%s9 + $0xc4] sm:$0xf]
        %v1418 = vld [vmem:[%s9 + $0xc8] sm:$0xf]
        %v1419 = vld [vmem:[%s9 + $0xcc] sm:$0xf]
        %v1420 = vld [vmem:[%s9 + $0xd0] sm:$0xf]
        %v1421 = vld [vmem:[%s9 + $0xd4] sm:$0xf]
        %v1422 = vld [vmem:[%s9 + $0xd8] sm:$0xf]
        %v1423 = vld [vmem:[%s9 + $0xdc] sm:$0xf]
        %v1424 = vld [vmem:[%s9 + $0xe0] sm:$0xf]
        %v1425 = vld [vmem:[%s9 + $0xe4] sm:$0xf]
        %v1426 = vld [vmem:[%s9 + $0xe8] sm:$0xf]
        %v1427 = vld [vmem:[%s9 + $0xec] sm:$0xf]
        %v1428 = vld [vmem:[%s9 + $0xf0] sm:$0xf]
        %v1429 = vld [vmem:[%s9 + $0xf4] sm:$0xf]
        %v1430 = vld [vmem:[%s9 + $0xf8] sm:$0xf]
        %v1431 = vld [vmem:[%s9 + $0xfc] sm:$0xf]
        %v1432 = vld [vmem:[%s10] sm:$0x1]
        %v1434 = vlaneseq
        %v1435 = vshrl.u32 %v1434, 7
        %v1436 = vsub.s32 0, %v1435
        %v1437 = vrot.slane %v1432, %v1436
        %v1441 = vunpack.c.l.b16 %v1366
        %v1442 = vunpack.c.h.b16 %v1366
        %v1443 = vunpack.c.l.b16 %v1367
        %v1444 = vunpack.c.h.b16 %v1367
        %v1445 = vpack.c.b16 %v1441, %v1441
        %v1446 = vpack.c.b16 %v1442, %v1442
        %v1447 = vpack.c.b16 %v1443, %v1443
        %v1448 = vpack.c.b16 %v1444, %v1444
        %v1517 = vunpack.c.l.b16 %v1368
        %v1518 = vunpack.c.l.b16 %v1369
        %v1519 = vunpack.c.l.b16 %v1370
        %v1520 = vunpack.c.l.b16 %v1371
        %v1521 = vunpack.c.l.b16 %v1372
        %v1522 = vunpack.c.l.b16 %v1373
        %v1523 = vunpack.c.l.b16 %v1374
        %v1524 = vunpack.c.l.b16 %v1375
        %v1525 = vunpack.c.l.b16 %v1376
        %v1526 = vunpack.c.l.b16 %v1377
        %v1527 = vunpack.c.l.b16 %v1378
        %v1528 = vunpack.c.l.b16 %v1379
        %v1529 = vunpack.c.l.b16 %v1380
        %v1530 = vunpack.c.l.b16 %v1381
        %v1531 = vunpack.c.l.b16 %v1382
        %v1532 = vunpack.c.l.b16 %v1383
        %v1533 = vunpack.c.l.b16 %v1384
        %v1534 = vunpack.c.l.b16 %v1385
        %v1535 = vunpack.c.l.b16 %v1386
        %v1536 = vunpack.c.l.b16 %v1387
        %v1537 = vunpack.c.l.b16 %v1388
        %v1538 = vunpack.c.l.b16 %v1389
        %v1539 = vunpack.c.l.b16 %v1390
        %v1540 = vunpack.c.l.b16 %v1391
        %v1541 = vunpack.c.l.b16 %v1392
        %v1542 = vunpack.c.l.b16 %v1393
        %v1543 = vunpack.c.l.b16 %v1394
        %v1544 = vunpack.c.l.b16 %v1395
        %v1545 = vunpack.c.l.b16 %v1396
        %v1546 = vunpack.c.l.b16 %v1397
        %v1547 = vunpack.c.l.b16 %v1398
        %v1548 = vunpack.c.l.b16 %v1399
        %v1549 = vunpack.c.l.b16 %v1400
        %v1550 = vunpack.c.l.b16 %v1401
        %v1551 = vunpack.c.l.b16 %v1402
        %v1552 = vunpack.c.l.b16 %v1403
        %v1553 = vunpack.c.l.b16 %v1404
        %v1554 = vunpack.c.l.b16 %v1405
        %v1555 = vunpack.c.l.b16 %v1406
        %v1556 = vunpack.c.l.b16 %v1407
        %v1557 = vunpack.c.l.b16 %v1408
        %v1558 = vunpack.c.l.b16 %v1409
        %v1559 = vunpack.c.l.b16 %v1410
        %v1560 = vunpack.c.l.b16 %v1411
        %v1561 = vunpack.c.l.b16 %v1412
        %v1562 = vunpack.c.l.b16 %v1413
        %v1563 = vunpack.c.l.b16 %v1414
        %v1564 = vunpack.c.l.b16 %v1415
        %v1565 = vunpack.c.l.b16 %v1416
        %v1566 = vunpack.c.l.b16 %v1417
        %v1567 = vunpack.c.l.b16 %v1418
        %v1568 = vunpack.c.l.b16 %v1419
        %v1569 = vunpack.c.l.b16 %v1420
        %v1570 = vunpack.c.l.b16 %v1421
        %v1571 = vunpack.c.l.b16 %v1422
        %v1572 = vunpack.c.l.b16 %v1423
        %v1573 = vunpack.c.l.b16 %v1424
        %v1574 = vunpack.c.l.b16 %v1425
        %v1575 = vunpack.c.l.b16 %v1426
        %v1576 = vunpack.c.l.b16 %v1427
        %v1577 = vunpack.c.l.b16 %v1428
        %v1578 = vunpack.c.l.b16 %v1429
        %v1579 = vunpack.c.l.b16 %v1430
        %v1580 = vunpack.c.l.b16 %v1431
        %v1581 = vpack.c.b16 %v1518, %v1517
        %v1582 = vpack.c.b16 %v1520, %v1519
        %v1583 = vpack.c.b16 %v1522, %v1521
        %v1584 = vpack.c.b16 %v1524, %v1523
        %v1585 = vpack.c.b16 %v1526, %v1525
        %v1586 = vpack.c.b16 %v1528, %v1527
        %v1587 = vpack.c.b16 %v1530, %v1529
        %v1588 = vpack.c.b16 %v1532, %v1531
        %v1589 = vpack.c.b16 %v1534, %v1533
        %v1590 = vpack.c.b16 %v1536, %v1535
        %v1591 = vpack.c.b16 %v1538, %v1537
        %v1592 = vpack.c.b16 %v1540, %v1539
        %v1593 = vpack.c.b16 %v1542, %v1541
        %v1594 = vpack.c.b16 %v1544, %v1543
        %v1595 = vpack.c.b16 %v1546, %v1545
        %v1596 = vpack.c.b16 %v1548, %v1547
        %v1597 = vpack.c.b16 %v1550, %v1549
        %v1598 = vpack.c.b16 %v1552, %v1551
        %v1599 = vpack.c.b16 %v1554, %v1553
        %v1600 = vpack.c.b16 %v1556, %v1555
        %v1601 = vpack.c.b16 %v1558, %v1557
        %v1602 = vpack.c.b16 %v1560, %v1559
        %v1603 = vpack.c.b16 %v1562, %v1561
        %v1604 = vpack.c.b16 %v1564, %v1563
        %v1605 = vpack.c.b16 %v1566, %v1565
        %v1606 = vpack.c.b16 %v1568, %v1567
        %v1607 = vpack.c.b16 %v1570, %v1569
        %v1608 = vpack.c.b16 %v1572, %v1571
        %v1609 = vpack.c.b16 %v1574, %v1573
        %v1610 = vpack.c.b16 %v1576, %v1575
        %v1611 = vpack.c.b16 %v1578, %v1577
        %v1612 = vpack.c.b16 %v1580, %v1579
        %1645 = vmatprep.subr.bf16.mxu0 0
        %1646 = vmatpush1.bf16.msra.mxu0 %v1581
        %1647 = vmatprep.subr.bf16.mxu0 0
        %1648 = vmatpush1.bf16.msra.mxu0 %v1582
        %1649 = vmatprep.subr.bf16.mxu0 0
        %1650 = vmatpush1.bf16.msra.mxu0 %v1583
        %1651 = vmatprep.subr.bf16.mxu0 0
        %1652 = vmatpush1.bf16.msra.mxu0 %v1584
        %1653 = vmatprep.subr.bf16.mxu0 0
        %1654 = vmatpush1.bf16.msra.mxu0 %v1585
        %1655 = vmatprep.subr.bf16.mxu0 0
        %1656 = vmatpush1.bf16.msra.mxu0 %v1586
        %1657 = vmatprep.subr.bf16.mxu0 0
        %1658 = vmatpush1.bf16.msra.mxu0 %v1587
        %1659 = vmatprep.subr.bf16.mxu0 0
        %1660 = vmatpush1.bf16.msra.mxu0 %v1588
        %1661 = vmatprep.subr.bf16.mxu0 0
        %1662 = vmatpush1.bf16.msra.mxu0 %v1589
        %1663 = vmatprep.subr.bf16.mxu0 0
        %1664 = vmatpush1.bf16.msra.mxu0 %v1590
        %1665 = vmatprep.subr.bf16.mxu0 0
        %1666 = vmatpush1.bf16.msra.mxu0 %v1591
        %1667 = vmatprep.subr.bf16.mxu0 0
        %1668 = vmatpush1.bf16.msra.mxu0 %v1592
        %1669 = vmatprep.subr.bf16.mxu0 0
        %1670 = vmatpush1.bf16.msra.mxu0 %v1593
        %1671 = vmatprep.subr.bf16.mxu0 0
        %1672 = vmatpush1.bf16.msra.mxu0 %v1594
        %1673 = vmatprep.subr.bf16.mxu0 0
        %1674 = vmatpush1.bf16.msra.mxu0 %v1595
        %1675 = vmatprep.subr.bf16.mxu0 0
        %1676 = vmatpush1.bf16.msra.mxu0 %v1596
        %1677 = vmatprep.mubr.bf16.mxu0 %v1446
        %1678 = vmatmul.mubr.bf16.gmra.mrb[0].mxu0 %v1445
        %v1679 = vpop.f32.mrb[0].mxu0
        %v1680 = vadd.f32 %v1437, %v1679
        %v1681 = vpop.f32.mrb[0].mxu0
        %v1682 = vpop.f32.mrb[0].mxu0
        %v1683 = vpop.f32.mrb[0].mxu0
        %1684 = vdwg.mxu0
        %1685 = vmatprep.subr.bf16.mxu0 0
        %1686 = vmatpush1.bf16.msra.mxu0 %v1597
        %1687 = vmatprep.subr.bf16.mxu0 0
        %1688 = vmatpush1.bf16.msra.mxu0 %v1598
        %1689 = vmatprep.subr.bf16.mxu0 0
        %1690 = vmatpush1.bf16.msra.mxu0 %v1599
        %1691 = vmatprep.subr.bf16.mxu0 0
        %1692 = vmatpush1.bf16.msra.mxu0 %v1600
        %1693 = vmatprep.subr.bf16.mxu0 0
        %1694 = vmatpush1.bf16.msra.mxu0 %v1601
        %1695 = vmatprep.subr.bf16.mxu0 0
        %1696 = vmatpush1.bf16.msra.mxu0 %v1602
        %1697 = vmatprep.subr.bf16.mxu0 0
        %1698 = vmatpush1.bf16.msra.mxu0 %v1603
        %1699 = vmatprep.subr.bf16.mxu0 0
        %1700 = vmatpush1.bf16.msra.mxu0 %v1604
        %1701 = vmatprep.subr.bf16.mxu0 0
        %1702 = vmatpush1.bf16.msra.mxu0 %v1605
        %1703 = vmatprep.subr.bf16.mxu0 0
        %1704 = vmatpush1.bf16.msra.mxu0 %v1606
        %1705 = vmatprep.subr.bf16.mxu0 0
        %1706 = vmatpush1.bf16.msra.mxu0 %v1607
        %1707 = vmatprep.subr.bf16.mxu0 0
        %1708 = vmatpush1.bf16.msra.mxu0 %v1608
        %1709 = vmatprep.subr.bf16.mxu0 0
        %1710 = vmatpush1.bf16.msra.mxu0 %v1609
        %1711 = vmatprep.subr.bf16.mxu0 0
        %1712 = vmatpush1.bf16.msra.mxu0 %v1610
        %1713 = vmatprep.subr.bf16.mxu0 0
        %1714 = vmatpush1.bf16.msra.mxu0 %v1611
        %1715 = vmatprep.subr.bf16.mxu0 0
        %1716 = vmatpush1.bf16.msra.mxu0 %v1612
        %1717 = vmatprep.mubr.bf16.mxu0 %v1448
        %1718 = vmatmul.mubr.bf16.gmra.mrb[0].mxu0 %v1447
        %v1719 = vpop.f32.mrb[0].mxu0
        %v1720 = vadd.f32 %v1680, %v1719
        %v1721 = vpop.f32.mrb[0].mxu0
        %v1722 = vpop.f32.mrb[0].mxu0
        %v1723 = vpop.f32.mrb[0].mxu0
        %1724 = vdwg.mxu0
        %1725 = vst.msk [vmem:[%s391] sm:$0xff] %vm856, %v1720
        %s1726 = sand.u32 %s283, 1
        %s1727 = scalar_lea.sflag [#allocation7], %s1726
        %s1728 = sand.u32 %s283, 1
        %s1729 = smul.addr %s1728, 8
        %s1730 = scalar_lea.vmem [#allocation6], %s1729
        // Predicated region
        $region69: #{tpu_custom_call.1} parent=63 // pred_check
          %p1731 = pneg %p293
        $region70: #{tpu_custom_call.1} parent=63 // pred_check_branch
          %1733 = sbr.rel (%p1731) target = $region72
        $region71: #{tpu_custom_call.1} parent=63 // pred_region
          %s1735 = ssub.s32 128, 128
          %1736 = vsyncadd %s1727, %s1735
          %s1737 = sadd.s32 %s30, %s29
          %s1738 = smul.addr %s1737, 128
          %s1739 = scalar_lea.hbm %s11, %s1738
          %s1741 = sshll.u32 %s1730, 4
          %s1742 = int_to_ptr.vmem [resolvable:$true] %s1741
          %1744 = dma.vmem_to_hbm [thread:$0]  %s1742, 128, %s1739, %s1727
        $region72: #{tpu_custom_call.1} parent=63 // pred_fallthru
          _
      $region64: #{tpu_custom_call.1} parent=5 // pred_fallthru
        _
      %p1745 = scmp.le.s32.totalorder 2, %s20
      // Predicated region
      $region73: #{tpu_custom_call.1} parent=5 // pred_check
        %p1746 = pneg %p1745
      $region74: #{tpu_custom_call.1} parent=5 // pred_check_branch
        %1748 = sbr.rel (%p1746) target = $region76
      $region75: #{tpu_custom_call.1} parent=5 // pred_region
        %s1749 = ssub.s32 %s20, 2
        // Predicated region
        $region77: #{tpu_custom_call.1} parent=75 // pred_check
          %p1750 = pneg %p299
        $region78: #{tpu_custom_call.1} parent=75 // pred_check_branch
          %1752 = sbr.rel (%p1750) target = $region80
        $region79: #{tpu_custom_call.1} parent=75 // pred_region
          %s1753 = sand.u32 %s284, 1
          %s1754 = scalar_lea.sflag [#allocation7], %s1753
          %s1755 = sand.u32 %s284, 1
          %s1756 = smul.addr %s1755, 8
          %s1757 = scalar_lea.vmem [#allocation6], %s1756
          %1758 = dma.done %s1754, 128
        $region80: #{tpu_custom_call.1} parent=75 // pred_fallthru
          _
      $region76: #{tpu_custom_call.1} parent=5 // pred_fallthru
        _
    $region6: #{tpu_custom_call.1} parent=1 // loop_footer
      %s24 = sadd.s32 1, %s20
    $region7: #{tpu_custom_call.1} parent=1 // loop_footer_branch
      %19 = sbr.rel target = $region3
    $region8: #{tpu_custom_call.1} parent=1 // loop_exit
      _
    %1759 = vsyncpa [#allocation7], 1
    %s1760 = scalar_lea.sflag [#allocation7], 1
    %1761 = vsyncpa %s1760, 1

// kernel: tpu_custom_call.1
$region0: #{tpu_custom_call.1}
  #allocation0 [shape = 'u32[]', space=smem, size = 0x4, offset = 0x4, fixed_abs, tag = 'smem constant byte address 0x4 - core index']
  #allocation1 [shape = 'u32[144,128]{1,0:T(1,128)}', space=vmem, size = 0x12000, scoped, tag = 'internal scratch']
  #allocation2 [shape = 'bf16[8,32]{1,0:T(8,128)(2,1)}', space=vmem, size = 0x800, scoped, tag = 'scratch operand']
  #allocation3 [shape = 'bf16[8,512]{1,0:T(8,128)(2,1)}', space=vmem, size = 0x2000, scoped, tag = 'scratch operand']
  #allocation4 [shape = 'bf16[8,512]{1,0:T(8,128)(2,1)}', space=vmem, size = 0x2000, scoped, tag = 'scratch operand']
  #allocation5 [shape = 'bf16[8,512]{1,0:T(8,128)(2,1)}', space=vmem, size = 0x2000, scoped, tag = 'scratch operand']
  %s0 = inlined_call_operand.vmem [shape: bf16[2,8,32], index: 0, kind: input, shape index: {}]
  %s1 = inlined_call_operand.vmem [shape: f32[1,32], index: 1, kind: input, shape index: {}]
  %s2 = inlined_call_operand.vmem [shape: f32[1,32], index: 2, kind: input, shape index: {}]
  %s3 = inlined_call_operand.vmem [shape: bf16[32,512], index: 3, kind: input, shape index: {}]
  %s4 = inlined_call_operand.vmem [shape: f32[1,512], index: 4, kind: input, shape index: {}]
  %s5 = inlined_call_operand.vmem [shape: bf16[32,512], index: 5, kind: input, shape index: {}]
  %s6 = inlined_call_operand.vmem [shape: f32[1,512], index: 6, kind: input, shape index: {}]
  %s7 = inlined_call_operand.vmem [shape: bf16[32,512], index: 7, kind: input, shape index: {}]
  %s8 = inlined_call_operand.vmem [shape: f32[1,512], index: 8, kind: input, shape index: {}]
  %s9 = inlined_call_operand.vmem [shape: bf16[512,32], index: 9, kind: input, shape index: {}]
  %s10 = inlined_call_operand.vmem [shape: f32[1,32], index: 10, kind: input, shape index: {}]
  %s11 = inlined_call_operand.hbm [shape: f32[2,8,32], index: 11, kind: output, shape index: {}]
  %s12 = sld [smem:[#allocation0]]
  $region81: #{tpu_custom_call.1} parent=0
    _
  %s14 = ssub.s32 1, %s12
  %s15 = scalar_select 0, %s14, %s12
  $region1: #{tpu_custom_call.1} parent=0
    #allocation6 [shape = 'u8[8192]{0}', space=vmem, size = 0x2000, scoped, tag = 'output window, operand 0']
    #allocation7 [shape = 's32[2]{0}', space=sflag, size = 0x8, scoped, tag = 'scoped memory for tpu_custom_call.1']
    %16 = vsyncpa [#allocation7], 0
    %s17 = scalar_lea.sflag [#allocation7], 1
    %18 = vsyncpa %s17, 0
    loop: start=0, step=1, limit=4
    $region2: #{tpu_custom_call.1} parent=1 // loop_pre_header
      _
    $region3: #{tpu_custom_call.1} parent=1 // loop_header
      %s20 = sphi 0, %s24
      %p21 = scmp.ge.s32.totalorder %s20, 4
      %s27 = sphi 0, %s39
      %s28 = sphi 0, %s35
      %s29 = sphi 0, %s27
      %s30 = sphi 0, %s28
      %s31 = sphi 0, %s29
      %s32 = sphi 0, %s30
      %s42 = sphi 0, %s44
      %s45 = sphi 0, %s42
      %s46 = sphi 0, %s45
      %s62 = sphi 0, %s46
      %s66 = sphi 0, %s66
      %s68 = sphi 0, %s66
      %s69 = sphi 0, %s68
      %s83 = sphi 0, %s69
      %s87 = sphi 0, %s87
      %s89 = sphi 0, %s87
      %s90 = sphi 0, %s89
      %s104 = sphi 0, %s90
      %s108 = sphi 0, %s108
      %s110 = sphi 0, %s108
      %s111 = sphi 0, %s110
      %s125 = sphi 0, %s111
      %s129 = sphi 0, %s129
      %s131 = sphi 0, %s129
      %s132 = sphi 0, %s131
      %s146 = sphi 0, %s132
      %s150 = sphi 0, %s150
      %s152 = sphi 0, %s150
      %s153 = sphi 0, %s152
      %s167 = sphi 0, %s153
      %s171 = sphi 0, %s171
      %s173 = sphi 0, %s171
      %s174 = sphi 0, %s173
      %s188 = sphi 0, %s174
      %s192 = sphi 0, %s192
      %s194 = sphi 0, %s192
      %s195 = sphi 0, %s194
      %s209 = sphi 0, %s195
      %s213 = sphi 0, %s213
      %s215 = sphi 0, %s213
      %s216 = sphi 0, %s215
      %s230 = sphi 0, %s216
      %s234 = sphi 0, %s234
      %s236 = sphi 0, %s234
      %s237 = sphi 0, %s236
      %s251 = sphi 0, %s237
      %s255 = sphi 0, %s255
      %s257 = sphi 0, %s255
      %s258 = sphi 0, %s257
      %s272 = sphi 0, %s258
      %s280 = sphi 0, %s282
      %s283 = sphi 0, %s280
      %s284 = sphi 0, %s283
      %s300 = sphi 0, %s284
    $region4: #{tpu_custom_call.1} parent=1 // loop_header_branch
      %23 = sbr.rel (%p21) target = $region8
    $region5: #{tpu_custom_call.1} parent=1 // loop_body
      %s25 = ssub.s32 %s20, 1
      %s26 = ssub.s32 %s20, 2
      %s33 = sadd.s32 1, %s28
      %p34 = scmp.ge.s32.totalorder %s33, 1
      %s35 = scalar_select %p34, 0, %s33
      %s36 = sadd.s32 1, %s27
      %s37 = scalar_select %p34, %s36, %s27
      %p38 = scmp.ge.s32.totalorder %s37, 2
      %s39 = scalar_select %p38, 0, %s37
      %s40 = ssub.s32 %s27, %s39
      %p41 = scmp.eq.s32.totalorder %s40, 0
      %s43 = sadd.s32 %s42, 1
      %s44 = scalar_select %p41, %s42, %s43
      %p47 = pneg %p41
      %p48 = scmp.eq.s32.totalorder %s20, 1
      %p49 = por %p47, %p48
      %p50 = scmp.ne.s32.totalorder %s42, %s45
      %p51 = scmp.eq.s32.totalorder %s20, 0
      %p52 = por %p50, %p51
      %p53 = scmp.ne.s32.totalorder %s42, %s45
      %p54 = scmp.eq.s32.totalorder %s25, 1
      %p55 = por %p53, %p54
      %p56 = scmp.ne.s32.totalorder %s45, %s46
      %p57 = scmp.eq.s32.totalorder %s25, 0
      %p58 = por %p56, %p57
      %p59 = scmp.ne.s32.totalorder %s45, %s46
      %p60 = scmp.eq.s32.totalorder %s26, 1
      %p61 = por %p59, %p60
      %p63 = scmp.ne.s32.totalorder %s46, %s62
      %p64 = scmp.eq.s32.totalorder %s26, 0
      %p65 = por %p63, %p64
      %s67 = sadd.s32 %s66, 1
      %p70 = scmp.eq.s32.totalorder %s20, 1
      %p71 = scmp.ne.s32.totalorder %s66, %s68
      %p72 = scmp.eq.s32.totalorder %s20, 0
      %p73 = por %p71, %p72
      %p74 = scmp.ne.s32.totalorder %s66, %s68
      %p75 = scmp.eq.s32.totalorder %s25, 1
      %p76 = por %p74, %p75
      %p77 = scmp.ne.s32.totalorder %s68, %s69
      %p78 = scmp.eq.s32.totalorder %s25, 0
      %p79 = por %p77, %p78
      %p80 = scmp.ne.s32.totalorder %s68, %s69
      %p81 = scmp.eq.s32.totalorder %s26, 1
      %p82 = por %p80, %p81
      %p84 = scmp.ne.s32.totalorder %s69, %s83
      %p85 = scmp.eq.s32.totalorder %s26, 0
      %p86 = por %p84, %p85
      %s88 = sadd.s32 %s87, 1
      %p91 = scmp.eq.s32.totalorder %s20, 1
      %p92 = scmp.ne.s32.totalorder %s87, %s89
      %p93 = scmp.eq.s32.totalorder %s20, 0
      %p94 = por %p92, %p93
      %p95 = scmp.ne.s32.totalorder %s87, %s89
      %p96 = scmp.eq.s32.totalorder %s25, 1
      %p97 = por %p95, %p96
      %p98 = scmp.ne.s32.totalorder %s89, %s90
      %p99 = scmp.eq.s32.totalorder %s25, 0
      %p100 = por %p98, %p99
      %p101 = scmp.ne.s32.totalorder %s89, %s90
      %p102 = scmp.eq.s32.totalorder %s26, 1
      %p103 = por %p101, %p102
      %p105 = scmp.ne.s32.totalorder %s90, %s104
      %p106 = scmp.eq.s32.totalorder %s26, 0
      %p107 = por %p105, %p106
      %s109 = sadd.s32 %s108, 1
      %p112 = scmp.eq.s32.totalorder %s20, 1
      %p113 = scmp.ne.s32.totalorder %s108, %s110
      %p114 = scmp.eq.s32.totalorder %s20, 0
      %p115 = por %p113, %p114
      %p116 = scmp.ne.s32.totalorder %s108, %s110
      %p117 = scmp.eq.s32.totalorder %s25, 1
      %p118 = por %p116, %p117
      %p119 = scmp.ne.s32.totalorder %s110, %s111
      %p120 = scmp.eq.s32.totalorder %s25, 0
      %p121 = por %p119, %p120
      %p122 = scmp.ne.s32.totalorder %s110, %s111
      %p123 = scmp.eq.s32.totalorder %s26, 1
      %p124 = por %p122, %p123
      %p126 = scmp.ne.s32.totalorder %s111, %s125
      %p127 = scmp.eq.s32.totalorder %s26, 0
      %p128 = por %p126, %p127
      %s130 = sadd.s32 %s129, 1
      %p133 = scmp.eq.s32.totalorder %s20, 1
      %p134 = scmp.ne.s32.totalorder %s129, %s131
      %p135 = scmp.eq.s32.totalorder %s20, 0
      %p136 = por %p134, %p135
      %p137 = scmp.ne.s32.totalorder %s129, %s131
      %p138 = scmp.eq.s32.totalorder %s25, 1
      %p139 = por %p137, %p138
      %p140 = scmp.ne.s32.totalorder %s131, %s132
      %p141 = scmp.eq.s32.totalorder %s25, 0
      %p142 = por %p140, %p141
      %p143 = scmp.ne.s32.totalorder %s131, %s132
      %p144 = scmp.eq.s32.totalorder %s26, 1
      %p145 = por %p143, %p144
      %p147 = scmp.ne.s32.totalorder %s132, %s146
      %p148 = scmp.eq.s32.totalorder %s26, 0
      %p149 = por %p147, %p148
      %s151 = sadd.s32 %s150, 1
      %p154 = scmp.eq.s32.totalorder %s20, 1
      %p155 = scmp.ne.s32.totalorder %s150, %s152
      %p156 = scmp.eq.s32.totalorder %s20, 0
      %p157 = por %p155, %p156
      %p158 = scmp.ne.s32.totalorder %s150, %s152
      %p159 = scmp.eq.s32.totalorder %s25, 1
      %p160 = por %p158, %p159
      %p161 = scmp.ne.s32.totalorder %s152, %s153
      %p162 = scmp.eq.s32.totalorder %s25, 0
      %p163 = por %p161, %p162
      %p164 = scmp.ne.s32.totalorder %s152, %s153
      %p165 = scmp.eq.s32.totalorder %s26, 1
      %p166 = por %p164, %p165
      %p168 = scmp.ne.s32.totalorder %s153, %s167
      %p169 = scmp.eq.s32.totalorder %s26, 0
      %p170 = por %p168, %p169
      %s172 = sadd.s32 %s171, 1
      %p175 = scmp.eq.s32.totalorder %s20, 1
      %p176 = scmp.ne.s32.totalorder %s171, %s173
      %p177 = scmp.eq.s32.totalorder %s20, 0
      %p178 = por %p176, %p177
      %p179 = scmp.ne.s32.totalorder %s171, %s173
      %p180 = scmp.eq.s32.totalorder %s25, 1
      %p181 = por %p179, %p180
      %p182 = scmp.ne.s32.totalorder %s173, %s174
      %p183 = scmp.eq.s32.totalorder %s25, 0
      %p184 = por %p182, %p183
      %p185 = scmp.ne.s32.totalorder %s173, %s174
      %p186 = scmp.eq.s32.totalorder %s26, 1
      %p187 = por %p185, %p186
      %p189 = scmp.ne.s32.totalorder %s174, %s188
      %p190 = scmp.eq.s32.totalorder %s26, 0
      %p191 = por %p189, %p190
      %s193 = sadd.s32 %s192, 1
      %p196 = scmp.eq.s32.totalorder %s20, 1
      %p197 = scmp.ne.s32.totalorder %s192, %s194
      %p198 = scmp.eq.s32.totalorder %s20, 0
      %p199 = por %p197, %p198
      %p200 = scmp.ne.s32.totalorder %s192, %s194
      %p201 = scmp.eq.s32.totalorder %s25, 1
      %p202 = por %p200, %p201
      %p203 = scmp.ne.s32.totalorder %s194, %s195
      %p204 = scmp.eq.s32.totalorder %s25, 0
      %p205 = por %p203, %p204
      %p206 = scmp.ne.s32.totalorder %s194, %s195
      %p207 = scmp.eq.s32.totalorder %s26, 1
      %p208 = por %p206, %p207
      %p210 = scmp.ne.s32.totalorder %s195, %s209
      %p211 = scmp.eq.s32.totalorder %s26, 0
      %p212 = por %p210, %p211
      %s214 = sadd.s32 %s213, 1
      %p217 = scmp.eq.s32.totalorder %s20, 1
      %p218 = scmp.ne.s32.totalorder %s213, %s215
      %p219 = scmp.eq.s32.totalorder %s20, 0
      %p220 = por %p218, %p219
      %p221 = scmp.ne.s32.totalorder %s213, %s215
      %p222 = scmp.eq.s32.totalorder %s25, 1
      %p223 = por %p221, %p222
      %p224 = scmp.ne.s32.totalorder %s215, %s216
      %p225 = scmp.eq.s32.totalorder %s25, 0
      %p226 = por %p224, %p225
      %p227 = scmp.ne.s32.totalorder %s215, %s216
      %p228 = scmp.eq.s32.totalorder %s26, 1
      %p229 = por %p227, %p228
      %p231 = scmp.ne.s32.totalorder %s216, %s230
      %p232 = scmp.eq.s32.totalorder %s26, 0
      %p233 = por %p231, %p232
      %s235 = sadd.s32 %s234, 1
      %p238 = scmp.eq.s32.totalorder %s20, 1
      %p239 = scmp.ne.s32.totalorder %s234, %s236
      %p240 = scmp.eq.s32.totalorder %s20, 0
      %p241 = por %p239, %p240
      %p242 = scmp.ne.s32.totalorder %s234, %s236
      %p243 = scmp.eq.s32.totalorder %s25, 1
      %p244 = por %p242, %p243
      %p245 = scmp.ne.s32.totalorder %s236, %s237
      %p246 = scmp.eq.s32.totalorder %s25, 0
      %p247 = por %p245, %p246
      %p248 = scmp.ne.s32.totalorder %s236, %s237
      %p249 = scmp.eq.s32.totalorder %s26, 1
      %p250 = por %p248, %p249
      %p252 = scmp.ne.s32.totalorder %s237, %s251
      %p253 = scmp.eq.s32.totalorder %s26, 0
      %p254 = por %p252, %p253
      %s256 = sadd.s32 %s255, 1
      %p259 = scmp.eq.s32.totalorder %s20, 1
      %p260 = scmp.ne.s32.totalorder %s255, %s257
      %p261 = scmp.eq.s32.totalorder %s20, 0
      %p262 = por %p260, %p261
      %p263 = scmp.ne.s32.totalorder %s255, %s257
      %p264 = scmp.eq.s32.totalorder %s25, 1
      %p265 = por %p263, %p264
      %p266 = scmp.ne.s32.totalorder %s257, %s258
      %p267 = scmp.eq.s32.totalorder %s25, 0
      %p268 = por %p266, %p267
      %p269 = scmp.ne.s32.totalorder %s257, %s258
      %p270 = scmp.eq.s32.totalorder %s26, 1
      %p271 = por %p269, %p270
      %p273 = scmp.ne.s32.totalorder %s258, %s272
      %p274 = scmp.eq.s32.totalorder %s26, 0
      %p275 = por %p273, %p274
      %s276 = ssub.s32 %s27, %s39
      %s277 = ssub.s32 %s28, %s35
      %s278 = sor.u32 %s276, %s277
      %p279 = scmp.eq.s32.totalorder %s278, 0
      %s281 = sadd.s32 %s280, 1
      %s282 = scalar_select %p279, %s280, %s281
      %p285 = pneg %p279
      %p286 = scmp.eq.s32.totalorder %s20, 1
      %p287 = por %p285, %p286
      %p288 = scmp.ne.s32.totalorder %s280, %s283
      %p289 = scmp.eq.s32.totalorder %s20, 0
      %p290 = por %p288, %p289
      %p291 = scmp.ne.s32.totalorder %s280, %s283
      %p292 = scmp.eq.s32.totalorder %s25, 1
      %p293 = por %p291, %p292
      %p294 = scmp.ne.s32.totalorder %s283, %s284
      %p295 = scmp.eq.s32.totalorder %s25, 0
      %p296 = por %p294, %p295
      %p297 = scmp.ne.s32.totalorder %s283, %s284
      %p298 = scmp.eq.s32.totalorder %s26, 1
      %p299 = por %p297, %p298
      %p301 = scmp.ne.s32.totalorder %s284, %s300
      %p302 = scmp.eq.s32.totalorder %s26, 0
      %p303 = por %p301, %p302
      %p304 = scmp.le.s32.totalorder 1, %s20
      %p305 = scmp.lt.s32.totalorder %s20, 3
      %p306 = pnand %p304, %p305
      %p307 = pneg %p306
      // Predicated region
      $region9: #{tpu_custom_call.1} parent=5 // pred_check
        _
      $region10: #{tpu_custom_call.1} parent=5 // pred_check_branch
        %309 = sbr.rel (%p306) target = $region12
      $region11: #{tpu_custom_call.1} parent=5 // pred_region
        %s310 = ssub.s32 %s20, 1
        // Predicated region
        $region13: #{tpu_custom_call.1} parent=11 // pred_check
          %p311 = pneg %p79
        $region14: #{tpu_custom_call.1} parent=11 // pred_check_branch
          %313 = sbr.rel (%p311) target = $region16
        $region15: #{tpu_custom_call.1} parent=11 // pred_region
          _
        $region16: #{tpu_custom_call.1} parent=11 // pred_fallthru
          _
        // Predicated region
        $region17: #{tpu_custom_call.1} parent=11 // pred_check
          %p314 = pneg %p100
        $region18: #{tpu_custom_call.1} parent=11 // pred_check_branch
          %316 = sbr.rel (%p314) target = $region20
        $region19: #{tpu_custom_call.1} parent=11 // pred_region
          _
        $region20: #{tpu_custom_call.1} parent=11 // pred_fallthru
          _
        // Predicated region
        $region21: #{tpu_custom_call.1} parent=11 // pred_check
          %p317 = pneg %p121
        $region22: #{tpu_custom_call.1} parent=11 // pred_check_branch
          %319 = sbr.rel (%p317) target = $region24
        $region23: #{tpu_custom_call.1} parent=11 // pred_region
          _
        $region24: #{tpu_custom_call.1} parent=11 // pred_fallthru
          _
        // Predicated region
        $region25: #{tpu_custom_call.1} parent=11 // pred_check
          %p320 = pneg %p142
        $region26: #{tpu_custom_call.1} parent=11 // pred_check_branch
          %322 = sbr.rel (%p320) target = $region28
        $region27: #{tpu_custom_call.1} parent=11 // pred_region
          _
        $region28: #{tpu_custom_call.1} parent=11 // pred_fallthru
          _
        // Predicated region
        $region29: #{tpu_custom_call.1} parent=11 // pred_check
          %p323 = pneg %p163
        $region30: #{tpu_custom_call.1} parent=11 // pred_check_branch
          %325 = sbr.rel (%p323) target = $region32
        $region31: #{tpu_custom_call.1} parent=11 // pred_region
          _
        $region32: #{tpu_custom_call.1} parent=11 // pred_fallthru
          _
        // Predicated region
        $region33: #{tpu_custom_call.1} parent=11 // pred_check
          %p326 = pneg %p184
        $region34: #{tpu_custom_call.1} parent=11 // pred_check_branch
          %328 = sbr.rel (%p326) target = $region36
        $region35: #{tpu_custom_call.1} parent=11 // pred_region
          _
        $region36: #{tpu_custom_call.1} parent=11 // pred_fallthru
          _
        // Predicated region
        $region37: #{tpu_custom_call.1} parent=11 // pred_check
          %p329 = pneg %p205
        $region38: #{tpu_custom_call.1} parent=11 // pred_check_branch
          %331 = sbr.rel (%p329) target = $region40
        $region39: #{tpu_custom_call.1} parent=11 // pred_region
          _
        $region40: #{tpu_custom_call.1} parent=11 // pred_fallthru
          _
        // Predicated region
        $region41: #{tpu_custom_call.1} parent=11 // pred_check
          %p332 = pneg %p226
        $region42: #{tpu_custom_call.1} parent=11 // pred_check_branch
          %334 = sbr.rel (%p332) target = $region44
        $region43: #{tpu_custom_call.1} parent=11 // pred_region
          _
        $region44: #{tpu_custom_call.1} parent=11 // pred_fallthru
          _
        // Predicated region
        $region45: #{tpu_custom_call.1} parent=11 // pred_check
          %p335 = pneg %p247
        $region46: #{tpu_custom_call.1} parent=11 // pred_check_branch
          %337 = sbr.rel (%p335) target = $region48
        $region47: #{tpu_custom_call.1} parent=11 // pred_region
          _
        $region48: #{tpu_custom_call.1} parent=11 // pred_fallthru
          _
        // Predicated region
        $region49: #{tpu_custom_call.1} parent=11 // pred_check
          %p338 = pneg %p268
        $region50: #{tpu_custom_call.1} parent=11 // pred_check_branch
          %340 = sbr.rel (%p338) target = $region52
        $region51: #{tpu_custom_call.1} parent=11 // pred_region
          _
        $region52: #{tpu_custom_call.1} parent=11 // pred_fallthru
          _
      $region12: #{tpu_custom_call.1} parent=5 // pred_fallthru
        _
      %p341 = scmp.lt.s32.totalorder %s20, 2
      // Predicated region
      $region53: #{tpu_custom_call.1} parent=5 // pred_check
        %p342 = pneg %p341
      $region54: #{tpu_custom_call.1} parent=5 // pred_check_branch
        %344 = sbr.rel (%p342) target = $region56
      $region55: #{tpu_custom_call.1} parent=5 // pred_region
        // Predicated region
        $region57: #{tpu_custom_call.1} parent=55 // pred_check
          %p345 = pneg %p52
        $region58: #{tpu_custom_call.1} parent=55 // pred_check_branch
          %347 = sbr.rel (%p345) target = $region60
        $region59: #{tpu_custom_call.1} parent=55 // pred_region
          %p348 = scmp.lt.s32.totalorder %s27, 1
          %s349 = scalar_select %p348, %s27, 1
          %s350 = smul.addr %s349, 4
          %s351 = scalar_lea.vmem %s0, %s350
        $region60: #{tpu_custom_call.1} parent=55 // pred_fallthru
          _
      $region56: #{tpu_custom_call.1} parent=5 // pred_fallthru
        _
      %p352 = scmp.le.s32.totalorder 1, %s20
      %p353 = scmp.lt.s32.totalorder %s20, 3
      %p354 = pnand %p352, %p353
      %p355 = pneg %p354
      // Predicated region
      $region61: #{tpu_custom_call.1} parent=5 // pred_check
        _
      $region62: #{tpu_custom_call.1} parent=5 // pred_check_branch
        %357 = sbr.rel (%p354) target = $region64
      $region63: #{tpu_custom_call.1} parent=5 // pred_region
        %s358 = ssub.s32 %s20, 1
        %p359 = scmp.lt.s32.totalorder %s29, 1
        %s360 = scalar_select %p359, %s29, 1
        %s361 = smul.addr %s360, 4
        %s362 = scalar_lea.vmem %s0, %s361
        %p363 = pneg %p58
        %p364 = pneg %p55
        %p365 = pneg %p79
        %p366 = pneg %p76
        %p367 = pneg %p100
        %p368 = pneg %p97
        %p369 = pneg %p121
        %p370 = pneg %p118
        %p371 = pneg %p142
        %p372 = pneg %p139
        %p373 = pneg %p163
        %p374 = pneg %p160
        %p375 = pneg %p184
        %p376 = pneg %p181
        %p377 = pneg %p205
        %p378 = pneg %p202
        %p379 = pneg %p226
        %p380 = pneg %p223
        %p381 = pneg %p247
        %p382 = pneg %p244
        %p383 = pneg %p268
        %p384 = pneg %p265
        %p385 = pneg %p296
        %p386 = pneg %p293
        %s387 = sand.u32 %s283, 1
        %s388 = scalar_lea.sflag [#allocation7], %s387
        %s389 = sand.u32 %s283, 1
        %s390 = smul.addr %s389, 8
        %s391 = scalar_lea.vmem [#allocation6], %s390
        %p392 = scmp.lt.s32.totalorder %s29, 1
        %s393 = scalar_select %p392, %s29, 1
        %s394 = smul.addr %s393, 4
        %s395 = scalar_lea.vmem %s0, %s394
        %p397 = scmp.eq.s32.totalorder %s30, 0
        // Predicated region
        $region65: #{tpu_custom_call.1} parent=63 // pred_check
          %p398 = pneg %p397
        $region66: #{tpu_custom_call.1} parent=63 // pred_check_branch
          %400 = sbr.rel (%p398) target = $region68
        $region67: #{tpu_custom_call.1} parent=63 // pred_region
          %v401 = vld [vmem:[%s395] sm:$0xf]
          %v402 = vunpack.c.l.bf16 %v401
          %vm403 = vcmask 261120
          %v404 = vsel %vm403, %v402, 0.0
          %405 = vadd.xlane.f32.xlu0 %v404
          %v406 = vpop.xlane.xlu0 %405
          %v407 = vrcp.pop 32.0
          %v408 = vmul.f32 %v406, %v407
          %v409 = vsub.f32 %v402, %v408
          %v410 = vmul.f32 %v409, %v409
          %v411 = vsel %vm403, %v410, 0.0
          %412 = vadd.xlane.f32.xlu0 %v411
          %v413 = vpop.xlane.xlu0 %412
          %v414 = vmul.f32 %v413, %v407
          %v415 = vadd.f32 %v414, 1e-05
          %v416 = vrsqrt.pop %v415
          %v417 = vmul.f32 %v409, %v416
          %v418 = vld [vmem:[%s1] sm:$0x1]
          %v420 = vlaneseq
          %v421 = vshrl.u32 %v420, 7
          %v422 = vsub.s32 0, %v421
          %v423 = vrot.slane %v418, %v422
          %v425 = vmul.f32 %v417, %v423
          %v426 = vld [vmem:[%s2] sm:$0x1]
          %v428 = vlaneseq
          %v429 = vshrl.u32 %v428, 7
          %v430 = vsub.s32 0, %v429
          %v431 = vrot.slane %v426, %v430
          %v433 = vadd.f32 %v425, %v431
          %v434 = vpack.c.bf16 %v433, %v433
          %vm435 = vcmask 257024
          %436 = vst.msk [vmem:[#allocation2] sm:$0xf] %vm435, %v434
          %v437 = vld [vmem:[%s5] sm:$0xff]
          %v438 = vld [vmem:[%s5 + $0x8] sm:$0xff]
          %v439 = vld [vmem:[%s5 + $0x10] sm:$0xff]
          %v440 = vld [vmem:[%s5 + $0x18] sm:$0xff]
          %v441 = vld [vmem:[%s5 + $0x20] sm:$0xff]
          %v442 = vld [vmem:[%s5 + $0x28] sm:$0xff]
          %v443 = vld [vmem:[%s5 + $0x30] sm:$0xff]
          %v444 = vld [vmem:[%s5 + $0x38] sm:$0xff]
          %v445 = vld [vmem:[%s6] sm:$0xf]
          %v447 = vlaneseq
          %v448 = vshrl.u32 %v447, 7
          %v449 = vsub.s32 0, %v448
          %v450 = vrot.slane %v445, %v449
          %v451 = vlaneseq
          %v452 = vshrl.u32 %v451, 7
          %v453 = vsub.s32 1, %v452
          %v454 = vrot.slane %v445, %v453
          %v455 = vlaneseq
          %v456 = vshrl.u32 %v455, 7
          %v457 = vsub.s32 2, %v456
          %v458 = vrot.slane %v445, %v457
          %v459 = vlaneseq
          %v460 = vshrl.u32 %v459, 7
          %v461 = vsub.s32 3, %v460
          %v462 = vrot.slane %v445, %v461
          %v475 = vunpack.c.l.b16 %v437
          %v476 = vunpack.c.h.b16 %v437
          %v477 = vunpack.c.l.b16 %v438
          %v478 = vunpack.c.h.b16 %v438
          %v479 = vunpack.c.l.b16 %v439
          %v480 = vunpack.c.h.b16 %v439
          %v481 = vunpack.c.l.b16 %v440
          %v482 = vunpack.c.h.b16 %v440
          %v483 = vunpack.c.l.b16 %v441
          %v484 = vunpack.c.h.b16 %v441
          %v485 = vunpack.c.l.b16 %v442
          %v486 = vunpack.c.h.b16 %v442
          %v487 = vunpack.c.l.b16 %v443
          %v488 = vunpack.c.h.b16 %v443
          %v489 = vunpack.c.l.b16 %v444
          %v490 = vunpack.c.h.b16 %v444
          %v491 = vpack.c.b16 %v479, %v475
          %v492 = vpack.c.b16 %v480, %v476
          %v493 = vpack.c.b16 %v481, %v477
          %v494 = vpack.c.b16 %v482, %v478
          %v495 = vpack.c.b16 %v487, %v483
          %v496 = vpack.c.b16 %v488, %v484
          %v497 = vpack.c.b16 %v489, %v485
          %v498 = vpack.c.b16 %v490, %v486
          %v508 = vsel %vm403, %v434, 0
          %510 = vmatprep.subr.bf16.mxu0 %v492
          %511 = vmatpush1.bf16.msra.mxu0 %v491
          %512 = vmatprep.subr.bf16.mxu0 %v496
          %513 = vmatpush1.bf16.msra.mxu0 %v495
          %514 = vmatprep.subr.bf16.mxu0 0
          %515 = vmatpush1.bf16.msra.mxu0 0
          %516 = vmatprep.subr.bf16.mxu0 0
          %517 = vmatpush1.bf16.msra.mxu0 0
          %518 = vmatprep.subr.bf16.mxu0 0
          %519 = vmatpush1.bf16.msra.mxu0 0
          %520 = vmatprep.subr.bf16.mxu0 0
          %521 = vmatpush1.bf16.msra.mxu0 0
          %522 = vmatprep.subr.bf16.mxu0 0
          %523 = vmatpush1.bf16.msra.mxu0 0
          %524 = vmatprep.subr.bf16.mxu0 0
          %525 = vmatpush1.bf16.msra.mxu0 0
          %526 = vmatprep.subr.bf16.mxu0 0
          %527 = vmatpush1.bf16.msra.mxu0 0
          %528 = vmatprep.subr.bf16.mxu0 0
          %529 = vmatpush1.bf16.msra.mxu0 0
          %530 = vmatprep.subr.bf16.mxu0 0
          %531 = vmatpush1.bf16.msra.mxu0 0
          %532 = vmatprep.subr.bf16.mxu0 0
          %533 = vmatpush1.bf16.msra.mxu0 0
          %534 = vmatprep.subr.bf16.mxu0 0
          %535 = vmatpush1.bf16.msra.mxu0 0
          %536 = vmatprep.subr.bf16.mxu0 0
          %537 = vmatpush1.bf16.msra.mxu0 0
          %538 = vmatprep.subr.bf16.mxu0 0
          %539 = vmatpush1.bf16.msra.mxu0 0
          %540 = vmatprep.subr.bf16.mxu0 0
          %541 = vmatpush1.bf16.msra.mxu0 0
          %542 = vmatprep.mubr.bf16.mxu0 0
          %543 = vmatmul.mubr.bf16.gmra.mrb[0].mxu0 %v508
          %v544 = vpop.f32.mrb[0].mxu0
          %v545 = vadd.f32 %v450, %v544
          %v546 = vpop.f32.mrb[0].mxu0
          %v547 = vadd.f32 %v454, %v546
          %v548 = vpop.f32.mrb[0].mxu0
          %v549 = vpop.f32.mrb[0].mxu0
          %550 = vdwg.mxu0
          %551 = vmatprep.subr.bf16.mxu0 %v494
          %552 = vmatpush1.bf16.msra.mxu0 %v493
          %553 = vmatprep.subr.bf16.mxu0 %v498
          %554 = vmatpush1.bf16.msra.mxu0 %v497
          %555 = vmatprep.subr.bf16.mxu0 0
          %556 = vmatpush1.bf16.msra.mxu0 0
          %557 = vmatprep.subr.bf16.mxu0 0
          %558 = vmatpush1.bf16.msra.mxu0 0
          %559 = vmatprep.subr.bf16.mxu0 0
          %560 = vmatpush1.bf16.msra.mxu0 0
          %561 = vmatprep.subr.bf16.mxu0 0
          %562 = vmatpush1.bf16.msra.mxu0 0
          %563 = vmatprep.subr.bf16.mxu0 0
          %564 = vmatpush1.bf16.msra.mxu0 0
          %565 = vmatprep.subr.bf16.mxu0 0
          %566 = vmatpush1.bf16.msra.mxu0 0
          %567 = vmatprep.subr.bf16.mxu0 0
          %568 = vmatpush1.bf16.msra.mxu0 0
          %569 = vmatprep.subr.bf16.mxu0 0
          %570 = vmatpush1.bf16.msra.mxu0 0
          %571 = vmatprep.subr.bf16.mxu0 0
          %572 = vmatpush1.bf16.msra.mxu0 0
          %573 = vmatprep.subr.bf16.mxu0 0
          %574 = vmatpush1.bf16.msra.mxu0 0
          %575 = vmatprep.subr.bf16.mxu0 0
          %576 = vmatpush1.bf16.msra.mxu0 0
          %577 = vmatprep.subr.bf16.mxu0 0
          %578 = vmatpush1.bf16.msra.mxu0 0
          %579 = vmatprep.subr.bf16.mxu0 0
          %580 = vmatpush1.bf16.msra.mxu0 0
          %581 = vmatprep.subr.bf16.mxu0 0
          %582 = vmatpush1.bf16.msra.mxu0 0
          %583 = vmatprep.mubr.bf16.mxu0 0
          %584 = vmatmul.mubr.bf16.gmra.mrb[0].mxu0 %v508
          %v585 = vpop.f32.mrb[0].mxu0
          %v586 = vadd.f32 %v458, %v585
          %v587 = vpop.f32.mrb[0].mxu0
          %v588 = vadd.f32 %v462, %v587
          %v589 = vpop.f32.mrb[0].mxu0
          %v590 = vpop.f32.mrb[0].mxu0
          %591 = vdwg.mxu0
          %v592 = vpack.c.bf16 %v545, %v545
          %v593 = vpack.c.bf16 %v547, %v547
          %v594 = vpack.c.bf16 %v586, %v586
          %v595 = vpack.c.bf16 %v588, %v588
          %v600 = vunpack.c.l.b16 %v592
          %v601 = vunpack.c.l.b16 %v593
          %v602 = vunpack.c.l.b16 %v594
          %v603 = vunpack.c.l.b16 %v595
          %v604 = vpack.c.b16 %v601, %v600
          %v605 = vpack.c.b16 %v603, %v602
          %608 = vst [vmem:[#allocation3] sm:$0xff] %v604
          %609 = vst [vmem:[#allocation3 + $0x8] sm:$0xff] %v605
          %v610 = vld [vmem:[%s7] sm:$0xff]
          %v611 = vld [vmem:[%s7 + $0x8] sm:$0xff]
          %v612 = vld [vmem:[%s7 + $0x10] sm:$0xff]
          %v613 = vld [vmem:[%s7 + $0x18] sm:$0xff]
          %v614 = vld [vmem:[%s7 + $0x20] sm:$0xff]
          %v615 = vld [vmem:[%s7 + $0x28] sm:$0xff]
          %v616 = vld [vmem:[%s7 + $0x30] sm:$0xff]
          %v617 = vld [vmem:[%s7 + $0x38] sm:$0xff]
          %v618 = vld [vmem:[%s8] sm:$0xf]
          %v620 = vlaneseq
          %v621 = vshrl.u32 %v620, 7
          %v622 = vsub.s32 0, %v621
          %v623 = vrot.slane %v618, %v622
          %v624 = vlaneseq
          %v625 = vshrl.u32 %v624, 7
          %v626 = vsub.s32 1, %v625
          %v627 = vrot.slane %v618, %v626
          %v628 = vlaneseq
          %v629 = vshrl.u32 %v628, 7
          %v630 = vsub.s32 2, %v629
          %v631 = vrot.slane %v618, %v630
          %v632 = vlaneseq
          %v633 = vshrl.u32 %v632, 7
          %v634 = vsub.s32 3, %v633
          %v635 = vrot.slane %v618, %v634
          %v648 = vunpack.c.l.b16 %v610
          %v649 = vunpack.c.h.b16 %v610
          %v650 = vunpack.c.l.b16 %v611
          %v651 = vunpack.c.h.b16 %v611
          %v652 = vunpack.c.l.b16 %v612
          %v653 = vunpack.c.h.b16 %v612
          %v654 = vunpack.c.l.b16 %v613
          %v655 = vunpack.c.h.b16 %v613
          %v656 = vunpack.c.l.b16 %v614
          %v657 = vunpack.c.h.b16 %v614
          %v658 = vunpack.c.l.b16 %v615
          %v659 = vunpack.c.h.b16 %v615
          %v660 = vunpack.c.l.b16 %v616
          %v661 = vunpack.c.h.b16 %v616
          %v662 = vunpack.c.l.b16 %v617
          %v663 = vunpack.c.h.b16 %v617
          %v664 = vpack.c.b16 %v652, %v648
          %v665 = vpack.c.b16 %v653, %v649
          %v666 = vpack.c.b16 %v654, %v650
          %v667 = vpack.c.b16 %v655, %v651
          %v668 = vpack.c.b16 %v660, %v656
          %v669 = vpack.c.b16 %v661, %v657
          %v670 = vpack.c.b16 %v662, %v658
          %v671 = vpack.c.b16 %v663, %v659
          %680 = vmatprep.subr.bf16.mxu0 %v665
          %681 = vmatpush1.bf16.msra.mxu0 %v664
          %682 = vmatprep.subr.bf16.mxu0 %v669
          %683 = vmatpush1.bf16.msra.mxu0 %v668
          %684 = vmatprep.subr.bf16.mxu0 0
          %685 = vmatpush1.bf16.msra.mxu0 0
          %686 = vmatprep.subr.bf16.mxu0 0
          %687 = vmatpush1.bf16.msra.mxu0 0
          %688 = vmatprep.subr.bf16.mxu0 0
          %689 = vmatpush1.bf16.msra.mxu0 0
          %690 = vmatprep.subr.bf16.mxu0 0
          %691 = vmatpush1.bf16.msra.mxu0 0
          %692 = vmatprep.subr.bf16.mxu0 0
          %693 = vmatpush1.bf16.msra.mxu0 0
          %694 = vmatprep.subr.bf16.mxu0 0
          %695 = vmatpush1.bf16.msra.mxu0 0
          %696 = vmatprep.subr.bf16.mxu0 0
          %697 = vmatpush1.bf16.msra.mxu0 0
          %698 = vmatprep.subr.bf16.mxu0 0
          %699 = vmatpush1.bf16.msra.mxu0 0
          %700 = vmatprep.subr.bf16.mxu0 0
          %701 = vmatpush1.bf16.msra.mxu0 0
          %702 = vmatprep.subr.bf16.mxu0 0
          %703 = vmatpush1.bf16.msra.mxu0 0
          %704 = vmatprep.subr.bf16.mxu0 0
          %705 = vmatpush1.bf16.msra.mxu0 0
          %706 = vmatprep.subr.bf16.mxu0 0
          %707 = vmatpush1.bf16.msra.mxu0 0
          %708 = vmatprep.subr.bf16.mxu0 0
          %709 = vmatpush1.bf16.msra.mxu0 0
          %710 = vmatprep.subr.bf16.mxu0 0
          %711 = vmatpush1.bf16.msra.mxu0 0
          %712 = vmatprep.mubr.bf16.mxu0 0
          %713 = vmatmul.mubr.bf16.gmra.mrb[0].mxu0 %v508
          %v714 = vpop.f32.mrb[0].mxu0
          %v715 = vadd.f32 %v623, %v714
          %v716 = vpop.f32.mrb[0].mxu0
          %v717 = vadd.f32 %v627, %v716
          %v718 = vpop.f32.mrb[0].mxu0
          %v719 = vpop.f32.mrb[0].mxu0
          %720 = vdwg.mxu0
          %721 = vmatprep.subr.bf16.mxu0 %v667
          %722 = vmatpush1.bf16.msra.mxu0 %v666
          %723 = vmatprep.subr.bf16.mxu0 %v671
          %724 = vmatpush1.bf16.msra.mxu0 %v670
          %725 = vmatprep.subr.bf16.mxu0 0
          %726 = vmatpush1.bf16.msra.mxu0 0
          %727 = vmatprep.subr.bf16.mxu0 0
          %728 = vmatpush1.bf16.msra.mxu0 0
          %729 = vmatprep.subr.bf16.mxu0 0
          %730 = vmatpush1.bf16.msra.mxu0 0
          %731 = vmatprep.subr.bf16.mxu0 0
          %732 = vmatpush1.bf16.msra.mxu0 0
          %733 = vmatprep.subr.bf16.mxu0 0
          %734 = vmatpush1.bf16.msra.mxu0 0
          %735 = vmatprep.subr.bf16.mxu0 0
          %736 = vmatpush1.bf16.msra.mxu0 0
          %737 = vmatprep.subr.bf16.mxu0 0
          %738 = vmatpush1.bf16.msra.mxu0 0
          %739 = vmatprep.subr.bf16.mxu0 0
          %740 = vmatpush1.bf16.msra.mxu0 0
          %741 = vmatprep.subr.bf16.mxu0 0
          %742 = vmatpush1.bf16.msra.mxu0 0
          %743 = vmatprep.subr.bf16.mxu0 0
          %744 = vmatpush1.bf16.msra.mxu0 0
          %745 = vmatprep.subr.bf16.mxu0 0
          %746 = vmatpush1.bf16.msra.mxu0 0
          %747 = vmatprep.subr.bf16.mxu0 0
          %748 = vmatpush1.bf16.msra.mxu0 0
          %749 = vmatprep.subr.bf16.mxu0 0
          %750 = vmatpush1.bf16.msra.mxu0 0
          %751 = vmatprep.subr.bf16.mxu0 0
          %752 = vmatpush1.bf16.msra.mxu0 0
          %753 = vmatprep.mubr.bf16.mxu0 0
          %754 = vmatmul.mubr.bf16.gmra.mrb[0].mxu0 %v508
          %v755 = vpop.f32.mrb[0].mxu0
          %v756 = vadd.f32 %v631, %v755
          %v757 = vpop.f32.mrb[0].mxu0
          %v758 = vadd.f32 %v635, %v757
          %v759 = vpop.f32.mrb[0].mxu0
          %v760 = vpop.f32.mrb[0].mxu0
          %761 = vdwg.mxu0
          %v762 = vpack.c.bf16 %v715, %v715
          %v763 = vpack.c.bf16 %v717, %v717
          %v764 = vpack.c.bf16 %v756, %v756
          %v765 = vpack.c.bf16 %v758, %v758
          %v770 = vunpack.c.l.b16 %v762
          %v771 = vunpack.c.l.b16 %v763
          %v772 = vunpack.c.l.b16 %v764
          %v773 = vunpack.c.l.b16 %v765
          %v774 = vpack.c.b16 %v771, %v770
          %v775 = vpack.c.b16 %v773, %v772
          %778 = vst [vmem:[#allocation4] sm:$0xff] %v774
          %779 = vst [vmem:[#allocation4 + $0x8] sm:$0xff] %v775
        $region68: #{tpu_custom_call.1} parent=63 // pred_fallthru
          _
        %s780 = smul.u32 %s30, 8
        %s781 = sshra.s32 %s780, 3
        %s782 = sand.u32 %s780, 7
        %s783 = smul.addr %s781, 4
        %s784 = scalar_lea.vmem [#allocation2], %s783
        %v785 = vld [vmem:[%s784] sm:$0xf]
        %v786 = vld [vmem:[%s3] sm:$0xff]
        %v787 = vld [vmem:[%s3 + $0x8] sm:$0xff]
        %v788 = vld [vmem:[%s3 + $0x10] sm:$0xff]
        %v789 = vld [vmem:[%s3 + $0x18] sm:$0xff]
        %v790 = vld [vmem:[%s3 + $0x20] sm:$0xff]
        %v791 = vld [vmem:[%s3 + $0x28] sm:$0xff]
        %v792 = vld [vmem:[%s3 + $0x30] sm:$0xff]
        %v793 = vld [vmem:[%s3 + $0x38] sm:$0xff]
        %v794 = vld [vmem:[%s4] sm:$0xf]
        %v796 = vlaneseq
        %v797 = vshrl.u32 %v796, 7
        %v798 = vsub.s32 0, %v797
        %v799 = vrot.slane %v794, %v798
        %v800 = vlaneseq
        %v801 = vshrl.u32 %v800, 7
        %v802 = vsub.s32 1, %v801
        %v803 = vrot.slane %v794, %v802
        %v804 = vlaneseq
        %v805 = vshrl.u32 %v804, 7
        %v806 = vsub.s32 2, %v805
        %v807 = vrot.slane %v794, %v806
        %v808 = vlaneseq
        %v809 = vshrl.u32 %v808, 7
        %v810 = vsub.s32 3, %v809
        %v811 = vrot.slane %v794, %v810
        %v824 = vunpack.c.l.b16 %v786
        %v825 = vunpack.c.h.b16 %v786
        %v826 = vunpack.c.l.b16 %v787
        %v827 = vunpack.c.h.b16 %v787
        %v828 = vunpack.c.l.b16 %v788
        %v829 = vunpack.c.h.b16 %v788
        %v830 = vunpack.c.l.b16 %v789
        %v831 = vunpack.c.h.b16 %v789
        %v832 = vunpack.c.l.b16 %v790
        %v833 = vunpack.c.h.b16 %v790
        %v834 = vunpack.c.l.b16 %v791
        %v835 = vunpack.c.h.b16 %v791
        %v836 = vunpack.c.l.b16 %v792
        %v837 = vunpack.c.h.b16 %v792
        %v838 = vunpack.c.l.b16 %v793
        %v839 = vunpack.c.h.b16 %v793
        %v840 = vpack.c.b16 %v828, %v824
        %v841 = vpack.c.b16 %v829, %v825
        %v842 = vpack.c.b16 %v830, %v826
        %v843 = vpack.c.b16 %v831, %v827
        %v844 = vpack.c.b16 %v836, %v832
        %v845 = vpack.c.b16 %v837, %v833
        %v846 = vpack.c.b16 %v838, %v834
        %v847 = vpack.c.b16 %v839, %v835
        %vm856 = vcmask 261120
        %v858 = vsel %vm856, %v785, 0
        %860 = vmatprep.subr.bf16.mxu0 %v841
        %861 = vmatpush1.bf16.msra.mxu0 %v840
        %862 = vmatprep.subr.bf16.mxu0 %v845
        %863 = vmatpush1.bf16.msra.mxu0 %v844
        %864 = vmatprep.subr.bf16.mxu0 0
        %865 = vmatpush1.bf16.msra.mxu0 0
        %866 = vmatprep.subr.bf16.mxu0 0
        %867 = vmatpush1.bf16.msra.mxu0 0
        %868 = vmatprep.subr.bf16.mxu0 0
        %869 = vmatpush1.bf16.msra.mxu0 0
        %870 = vmatprep.subr.bf16.mxu0 0
        %871 = vmatpush1.bf16.msra.mxu0 0
        %872 = vmatprep.subr.bf16.mxu0 0
        %873 = vmatpush1.bf16.msra.mxu0 0
        %874 = vmatprep.subr.bf16.mxu0 0
        %875 = vmatpush1.bf16.msra.mxu0 0
        %876 = vmatprep.subr.bf16.mxu0 0
        %877 = vmatpush1.bf16.msra.mxu0 0
        %878 = vmatprep.subr.bf16.mxu0 0
        %879 = vmatpush1.bf16.msra.mxu0 0
        %880 = vmatprep.subr.bf16.mxu0 0
        %881 = vmatpush1.bf16.msra.mxu0 0
        %882 = vmatprep.subr.bf16.mxu0 0
        %883 = vmatpush1.bf16.msra.mxu0 0
        %884 = vmatprep.subr.bf16.mxu0 0
        %885 = vmatpush1.bf16.msra.mxu0 0
        %886 = vmatprep.subr.bf16.mxu0 0
        %887 = vmatpush1.bf16.msra.mxu0 0
        %888 = vmatprep.subr.bf16.mxu0 0
        %889 = vmatpush1.bf16.msra.mxu0 0
        %890 = vmatprep.subr.bf16.mxu0 0
        %891 = vmatpush1.bf16.msra.mxu0 0
        %892 = vmatprep.mubr.bf16.mxu0 0
        %893 = vmatmul.mubr.bf16.gmra.mrb[0].mxu0 %v858
        %v894 = vpop.f32.mrb[0].mxu0
        %v895 = vadd.f32 %v799, %v894
        %v896 = vpop.f32.mrb[0].mxu0
        %v897 = vadd.f32 %v803, %v896
        %v898 = vpop.f32.mrb[0].mxu0
        %v899 = vpop.f32.mrb[0].mxu0
        %900 = vdwg.mxu0
        %901 = vmatprep.subr.bf16.mxu0 %v843
        %902 = vmatpush1.bf16.msra.mxu0 %v842
        %903 = vmatprep.subr.bf16.mxu0 %v847
        %904 = vmatpush1.bf16.msra.mxu0 %v846
        %905 = vmatprep.subr.bf16.mxu0 0
        %906 = vmatpush1.bf16.msra.mxu0 0
        %907 = vmatprep.subr.bf16.mxu0 0
        %908 = vmatpush1.bf16.msra.mxu0 0
        %909 = vmatprep.subr.bf16.mxu0 0
        %910 = vmatpush1.bf16.msra.mxu0 0
        %911 = vmatprep.subr.bf16.mxu0 0
        %912 = vmatpush1.bf16.msra.mxu0 0
        %913 = vmatprep.subr.bf16.mxu0 0
        %914 = vmatpush1.bf16.msra.mxu0 0
        %915 = vmatprep.subr.bf16.mxu0 0
        %916 = vmatpush1.bf16.msra.mxu0 0
        %917 = vmatprep.subr.bf16.mxu0 0
        %918 = vmatpush1.bf16.msra.mxu0 0
        %919 = vmatprep.subr.bf16.mxu0 0
        %920 = vmatpush1.bf16.msra.mxu0 0
        %921 = vmatprep.subr.bf16.mxu0 0
        %922 = vmatpush1.bf16.msra.mxu0 0
        %923 = vmatprep.subr.bf16.mxu0 0
        %924 = vmatpush1.bf16.msra.mxu0 0
        %925 = vmatprep.subr.bf16.mxu0 0
        %926 = vmatpush1.bf16.msra.mxu0 0
        %927 = vmatprep.subr.bf16.mxu0 0
        %928 = vmatpush1.bf16.msra.mxu0 0
        %929 = vmatprep.subr.bf16.mxu0 0
        %930 = vmatpush1.bf16.msra.mxu0 0
        %931 = vmatprep.subr.bf16.mxu0 0
        %932 = vmatpush1.bf16.msra.mxu0 0
        %933 = vmatprep.mubr.bf16.mxu0 0
        %934 = vmatmul.mubr.bf16.gmra.mrb[0].mxu0 %v858
        %v935 = vpop.f32.mrb[0].mxu0
        %v936 = vadd.f32 %v807, %v935
        %v937 = vpop.f32.mrb[0].mxu0
        %v938 = vadd.f32 %v811, %v937
        %v939 = vpop.f32.mrb[0].mxu0
        %v940 = vpop.f32.mrb[0].mxu0
        %941 = vdwg.mxu0
        %v942 = vpack.c.bf16 %v895, %v895
        %v943 = vpack.c.bf16 %v897, %v897
        %v944 = vpack.c.bf16 %v936, %v936
        %v945 = vpack.c.bf16 %v938, %v938
        %v946 = vld [vmem:[#allocation3] sm:$0xff]
        %v947 = vld [vmem:[#allocation3 + $0x8] sm:$0xff]
        %v948 = vld [vmem:[#allocation4] sm:$0xff]
        %v949 = vld [vmem:[#allocation4 + $0x8] sm:$0xff]
        %950 = vmatprep.subr.bf16.mxu0 0
        %951 = vmatpush1.bf16.xpose.msra.mxu0 %v946
        %952 = vmatprep.subr.bf16.mxu0 0
        %953 = vmatpush1.bf16.xpose.msra.mxu0 0
        %954 = vmatprep.subr.bf16.mxu0 0
        %955 = vmatpush1.bf16.xpose.msra.mxu0 0
        %956 = vmatprep.subr.bf16.mxu0 0
        %957 = vmatpush1.bf16.xpose.msra.mxu0 0
        %958 = vmatprep.subr.bf16.mxu0 0
        %959 = vmatpush1.bf16.xpose.msra.mxu0 0
        %960 = vmatprep.subr.bf16.mxu0 0
        %961 = vmatpush1.bf16.xpose.msra.mxu0 0
        %962 = vmatprep.subr.bf16.mxu0 0
        %963 = vmatpush1.bf16.xpose.msra.mxu0 0
        %964 = vmatprep.subr.bf16.mxu0 0
        %965 = vmatpush1.bf16.xpose.msra.mxu0 0
        %966 = vmatprep.subr.bf16.mxu0 0
        %967 = vmatpush1.bf16.xpose.msra.mxu0 0
        %968 = vmatprep.subr.bf16.mxu0 0
        %969 = vmatpush1.bf16.xpose.msra.mxu0 0
        %970 = vmatprep.subr.bf16.mxu0 0
        %971 = vmatpush1.bf16.xpose.msra.mxu0 0
        %972 = vmatprep.subr.bf16.mxu0 0
        %973 = vmatpush1.bf16.xpose.msra.mxu0 0
        %974 = vmatprep.subr.bf16.mxu0 0
        %975 = vmatpush1.bf16.xpose.msra.mxu0 0
        %976 = vmatprep.subr.bf16.mxu0 0
        %977 = vmatpush1.bf16.xpose.msra.mxu0 0
        %978 = vmatprep.subr.bf16.mxu0 0
        %979 = vmatpush1.bf16.xpose.msra.mxu0 0
        %980 = vmatprep.subr.bf16.mxu0 0
        %981 = vmatpush1.bf16.xpose.msra.mxu0 0
        %982 = vmatprep.mubr.bf16.mxu0 0
        %983 = vmatmul.mubr.bf16.gmra.mrb[0].mxu0 %v942
        %v984 = vpop.f32.mrb[0].mxu0
        %v985 = vadd.f32 0.0, %v984
        %v986 = vpop.f32.mrb[0].mxu0
        %v987 = vpop.f32.mrb[0].mxu0
        %v988 = vpop.f32.mrb[0].mxu0
        %989 = vdwg.mxu0
        %vm990 = vcmask 64512
        %v991 = vsel %vm990, %v985, -inf
        %992 = vmax.xlane.f32.xlu0 %v991
        %v993 = vpop.xlane.xlu0 %992
        %v994 = vsub.f32 %v985, %v993
        %v995 = vmul.f32 %v994, 1.442695
        %v996 = vpow.pop %v995
        %v997 = vsel %vm990, %v996, 0.0
        %998 = vadd.xlane.f32.xlu0 %v997
        %v999 = vpop.xlane.xlu0 %998
        %v1000 = vrcp.pop %v999
        %v1001 = vmul.f32 %v996, %v1000
        %v1002 = vpack.c.bf16 %v1001, %v1001
        %v1004 = vsel %vm990, %v1002, 0
        %vm1006 = vcmask 1043456
        %v1008 = vsel %vm1006, %v948, 0
        %1010 = vmatprep.subr.bf16.mxu0 0
        %1011 = vmatpush1.bf16.msra.mxu0 %v1008
        %1012 = vmatprep.subr.bf16.mxu0 0
        %1013 = vmatpush1.bf16.msra.mxu0 0
        %1014 = vmatprep.subr.bf16.mxu0 0
        %1015 = vmatpush1.bf16.msra.mxu0 0
        %1016 = vmatprep.subr.bf16.mxu0 0
        %1017 = vmatpush1.bf16.msra.mxu0 0
        %1018 = vmatprep.subr.bf16.mxu0 0
        %1019 = vmatpush1.bf16.msra.mxu0 0
        %1020 = vmatprep.subr.bf16.mxu0 0
        %1021 = vmatpush1.bf16.msra.mxu0 0
        %1022 = vmatprep.subr.bf16.mxu0 0
        %1023 = vmatpush1.bf16.msra.mxu0 0
        %1024 = vmatprep.subr.bf16.mxu0 0
        %1025 = vmatpush1.bf16.msra.mxu0 0
        %1026 = vmatprep.subr.bf16.mxu0 0
        %1027 = vmatpush1.bf16.msra.mxu0 0
        %1028 = vmatprep.subr.bf16.mxu0 0
        %1029 = vmatpush1.bf16.msra.mxu0 0
        %1030 = vmatprep.subr.bf16.mxu0 0
        %1031 = vmatpush1.bf16.msra.mxu0 0
        %1032 = vmatprep.subr.bf16.mxu0 0
        %1033 = vmatpush1.bf16.msra.mxu0 0
        %1034 = vmatprep.subr.bf16.mxu0 0
        %1035 = vmatpush1.bf16.msra.mxu0 0
        %1036 = vmatprep.subr.bf16.mxu0 0
        %1037 = vmatpush1.bf16.msra.mxu0 0
        %1038 = vmatprep.subr.bf16.mxu0 0
        %1039 = vmatpush1.bf16.msra.mxu0 0
        %1040 = vmatprep.subr.bf16.mxu0 0
        %1041 = vmatpush1.bf16.msra.mxu0 0
        %1042 = vmatprep.mubr.bf16.mxu0 0
        %1043 = vmatmul.mubr.bf16.gmra.mrb[0].mxu0 %v1004
        %v1044 = vpop.f32.mrb[0].mxu0
        %v1045 = vadd.f32 0.0, %v1044
        %v1046 = vpop.f32.mrb[0].mxu0
        %v1047 = vpop.f32.mrb[0].mxu0
        %v1048 = vpop.f32.mrb[0].mxu0
        %1049 = vdwg.mxu0
        %v1050 = vpack.c.bf16 %v1045, %v1045
        %1051 = vst [vmem:[#allocation5] sm:$0xf] %v1050
        %v1053 = vunpack.c.h.b16 %v946
        %v1054 = vpack.c.b16 %v1053, %v1053
        %1056 = vmatprep.subr.bf16.mxu0 0
        %1057 = vmatpush1.bf16.xpose.msra.mxu0 %v1054
        %1058 = vmatprep.subr.bf16.mxu0 0
        %1059 = vmatpush1.bf16.xpose.msra.mxu0 0
        %1060 = vmatprep.subr.bf16.mxu0 0
        %1061 = vmatpush1.bf16.xpose.msra.mxu0 0
        %1062 = vmatprep.subr.bf16.mxu0 0
        %1063 = vmatpush1.bf16.xpose.msra.mxu0 0
        %1064 = vmatprep.subr.bf16.mxu0 0
        %1065 = vmatpush1.bf16.xpose.msra.mxu0 0
        %1066 = vmatprep.subr.bf16.mxu0 0
        %1067 = vmatpush1.bf16.xpose.msra.mxu0 0
        %1068 = vmatprep.subr.bf16.mxu0 0
        %1069 = vmatpush1.bf16.xpose.msra.mxu0 0
        %1070 = vmatprep.subr.bf16.mxu0 0
        %1071 = vmatpush1.bf16.xpose.msra.mxu0 0
        %1072 = vmatprep.subr.bf16.mxu0 0
        %1073 = vmatpush1.bf16.xpose.msra.mxu0 0
        %1074 = vmatprep.subr.bf16.mxu0 0
        %1075 = vmatpush1.bf16.xpose.msra.mxu0 0
        %1076 = vmatprep.subr.bf16.mxu0 0
        %1077 = vmatpush1.bf16.xpose.msra.mxu0 0
        %1078 = vmatprep.subr.bf16.mxu0 0
        %1079 = vmatpush1.bf16.xpose.msra.mxu0 0
        %1080 = vmatprep.subr.bf16.mxu0 0
        %1081 = vmatpush1.bf16.xpose.msra.mxu0 0
        %1082 = vmatprep.subr.bf16.mxu0 0
        %1083 = vmatpush1.bf16.xpose.msra.mxu0 0
        %1084 = vmatprep.subr.bf16.mxu0 0
        %1085 = vmatpush1.bf16.xpose.msra.mxu0 0
        %1086 = vmatprep.subr.bf16.mxu0 0
        %1087 = vmatpush1.bf16.xpose.msra.mxu0 0
        %1088 = vmatprep.mubr.bf16.mxu0 0
        %1089 = vmatmul.mubr.bf16.gmra.mrb[0].mxu0 %v943
        %v1090 = vpop.f32.mrb[0].mxu0
        %v1091 = vadd.f32 0.0, %v1090
        %v1092 = vpop.f32.mrb[0].mxu0
        %v1093 = vpop.f32.mrb[0].mxu0
        %v1094 = vpop.f32.mrb[0].mxu0
        %1095 = vdwg.mxu0
        %v1096 = vsel %vm990, %v1091, -inf
        %1097 = vmax.xlane.f32.xlu0 %v1096
        %v1098 = vpop.xlane.xlu0 %1097
        %v1099 = vsub.f32 %v1091, %v1098
        %v1100 = vmul.f32 %v1099, 1.442695
        %v1101 = vpow.pop %v1100
        %v1102 = vsel %vm990, %v1101, 0.0
        %1103 = vadd.xlane.f32.xlu0 %v1102
        %v1104 = vpop.xlane.xlu0 %1103
        %v1105 = vrcp.pop %v1104
        %v1106 = vmul.f32 %v1101, %v1105
        %v1107 = vpack.c.bf16 %v1106, %v1106
        %v1109 = vunpack.c.h.b16 %v948
        %v1110 = vpack.c.b16 %v1109, %v1109
        %v1112 = vsel %vm990, %v1107, 0
        %v1115 = vsel %vm1006, %v1110, 0
        %1117 = vmatprep.subr.bf16.mxu0 0
        %1118 = vmatpush1.bf16.msra.mxu0 %v1115
        %1119 = vmatprep.subr.bf16.mxu0 0
        %1120 = vmatpush1.bf16.msra.mxu0 0
        %1121 = vmatprep.subr.bf16.mxu0 0
        %1122 = vmatpush1.bf16.msra.mxu0 0
        %1123 = vmatprep.subr.bf16.mxu0 0
        %1124 = vmatpush1.bf16.msra.mxu0 0
        %1125 = vmatprep.subr.bf16.mxu0 0
        %1126 = vmatpush1.bf16.msra.mxu0 0
        %1127 = vmatprep.subr.bf16.mxu0 0
        %1128 = vmatpush1.bf16.msra.mxu0 0
        %1129 = vmatprep.subr.bf16.mxu0 0
        %1130 = vmatpush1.bf16.msra.mxu0 0
        %1131 = vmatprep.subr.bf16.mxu0 0
        %1132 = vmatpush1.bf16.msra.mxu0 0
        %1133 = vmatprep.subr.bf16.mxu0 0
        %1134 = vmatpush1.bf16.msra.mxu0 0
        %1135 = vmatprep.subr.bf16.mxu0 0
        %1136 = vmatpush1.bf16.msra.mxu0 0
        %1137 = vmatprep.subr.bf16.mxu0 0
        %1138 = vmatpush1.bf16.msra.mxu0 0
        %1139 = vmatprep.subr.bf16.mxu0 0
        %1140 = vmatpush1.bf16.msra.mxu0 0
        %1141 = vmatprep.subr.bf16.mxu0 0
        %1142 = vmatpush1.bf16.msra.mxu0 0
        %1143 = vmatprep.subr.bf16.mxu0 0
        %1144 = vmatpush1.bf16.msra.mxu0 0
        %1145 = vmatprep.subr.bf16.mxu0 0
        %1146 = vmatpush1.bf16.msra.mxu0 0
        %1147 = vmatprep.subr.bf16.mxu0 0
        %1148 = vmatpush1.bf16.msra.mxu0 0
        %1149 = vmatprep.mubr.bf16.mxu0 0
        %1150 = vmatmul.mubr.bf16.gmra.mrb[0].mxu0 %v1112
        %v1151 = vpop.f32.mrb[0].mxu0
        %v1152 = vadd.f32 0.0, %v1151
        %v1153 = vpop.f32.mrb[0].mxu0
        %v1154 = vpop.f32.mrb[0].mxu0
        %v1155 = vpop.f32.mrb[0].mxu0
        %1156 = vdwg.mxu0
        %v1157 = vpack.c.bf16 %v1152, %v1152
        %1158 = vst [vmem:[#allocation5 + $0x4] sm:$0xf] %v1157
        %1159 = vmatprep.subr.bf16.mxu0 0
        %1160 = vmatpush1.bf16.xpose.msra.mxu0 %v947
        %1161 = vmatprep.subr.bf16.mxu0 0
        %1162 = vmatpush1.bf16.xpose.msra.mxu0 0
        %1163 = vmatprep.subr.bf16.mxu0 0
        %1164 = vmatpush1.bf16.xpose.msra.mxu0 0
        %1165 = vmatprep.subr.bf16.mxu0 0
        %1166 = vmatpush1.bf16.xpose.msra.mxu0 0
        %1167 = vmatprep.subr.bf16.mxu0 0
        %1168 = vmatpush1.bf16.xpose.msra.mxu0 0
        %1169 = vmatprep.subr.bf16.mxu0 0
        %1170 = vmatpush1.bf16.xpose.msra.mxu0 0
        %1171 = vmatprep.subr.bf16.mxu0 0
        %1172 = vmatpush1.bf16.xpose.msra.mxu0 0
        %1173 = vmatprep.subr.bf16.mxu0 0
        %1174 = vmatpush1.bf16.xpose.msra.mxu0 0
        %1175 = vmatprep.subr.bf16.mxu0 0
        %1176 = vmatpush1.bf16.xpose.msra.mxu0 0
        %1177 = vmatprep.subr.bf16.mxu0 0
        %1178 = vmatpush1.bf16.xpose.msra.mxu0 0
        %1179 = vmatprep.subr.bf16.mxu0 0
        %1180 = vmatpush1.bf16.xpose.msra.mxu0 0
        %1181 = vmatprep.subr.bf16.mxu0 0
        %1182 = vmatpush1.bf16.xpose.msra.mxu0 0
        %1183 = vmatprep.subr.bf16.mxu0 0
        %1184 = vmatpush1.bf16.xpose.msra.mxu0 0
        %1185 = vmatprep.subr.bf16.mxu0 0
        %1186 = vmatpush1.bf16.xpose.msra.mxu0 0
        %1187 = vmatprep.subr.bf16.mxu0 0
        %1188 = vmatpush1.bf16.xpose.msra.mxu0 0
        %1189 = vmatprep.subr.bf16.mxu0 0
        %1190 = vmatpush1.bf16.xpose.msra.mxu0 0
        %1191 = vmatprep.mubr.bf16.mxu0 0
        %1192 = vmatmul.mubr.bf16.gmra.mrb[0].mxu0 %v944
        %v1193 = vpop.f32.mrb[0].mxu0
        %v1194 = vadd.f32 0.0, %v1193
        %v1195 = vpop.f32.mrb[0].mxu0
        %v1196 = vpop.f32.mrb[0].mxu0
        %v1197 = vpop.f32.mrb[0].mxu0
        %1198 = vdwg.mxu0
        %v1199 = vsel %vm990, %v1194, -inf
        %1200 = vmax.xlane.f32.xlu0 %v1199
        %v1201 = vpop.xlane.xlu0 %1200
        %v1202 = vsub.f32 %v1194, %v1201
        %v1203 = vmul.f32 %v1202, 1.442695
        %v1204 = vpow.pop %v1203
        %v1205 = vsel %vm990, %v1204, 0.0
        %1206 = vadd.xlane.f32.xlu0 %v1205
        %v1207 = vpop.xlane.xlu0 %1206
        %v1208 = vrcp.pop %v1207
        %v1209 = vmul.f32 %v1204, %v1208
        %v1210 = vpack.c.bf16 %v1209, %v1209
        %v1212 = vsel %vm990, %v1210, 0
        %v1215 = vsel %vm1006, %v949, 0
        %1217 = vmatprep.subr.bf16.mxu0 0
        %1218 = vmatpush1.bf16.msra.mxu0 %v1215
        %1219 = vmatprep.subr.bf16.mxu0 0
        %1220 = vmatpush1.bf16.msra.mxu0 0
        %1221 = vmatprep.subr.bf16.mxu0 0
        %1222 = vmatpush1.bf16.msra.mxu0 0
        %1223 = vmatprep.subr.bf16.mxu0 0
        %1224 = vmatpush1.bf16.msra.mxu0 0
        %1225 = vmatprep.subr.bf16.mxu0 0
        %1226 = vmatpush1.bf16.msra.mxu0 0
        %1227 = vmatprep.subr.bf16.mxu0 0
        %1228 = vmatpush1.bf16.msra.mxu0 0
        %1229 = vmatprep.subr.bf16.mxu0 0
        %1230 = vmatpush1.bf16.msra.mxu0 0
        %1231 = vmatprep.subr.bf16.mxu0 0
        %1232 = vmatpush1.bf16.msra.mxu0 0
        %1233 = vmatprep.subr.bf16.mxu0 0
        %1234 = vmatpush1.bf16.msra.mxu0 0
        %1235 = vmatprep.subr.bf16.mxu0 0
        %1236 = vmatpush1.bf16.msra.mxu0 0
        %1237 = vmatprep.subr.bf16.mxu0 0
        %1238 = vmatpush1.bf16.msra.mxu0 0
        %1239 = vmatprep.subr.bf16.mxu0 0
        %1240 = vmatpush1.bf16.msra.mxu0 0
        %1241 = vmatprep.subr.bf16.mxu0 0
        %1242 = vmatpush1.bf16.msra.mxu0 0
        %1243 = vmatprep.subr.bf16.mxu0 0
        %1244 = vmatpush1.bf16.msra.mxu0 0
        %1245 = vmatprep.subr.bf16.mxu0 0
        %1246 = vmatpush1.bf16.msra.mxu0 0
        %1247 = vmatprep.subr.bf16.mxu0 0
        %1248 = vmatpush1.bf16.msra.mxu0 0
        %1249 = vmatprep.mubr.bf16.mxu0 0
        %1250 = vmatmul.mubr.bf16.gmra.mrb[0].mxu0 %v1212
        %v1251 = vpop.f32.mrb[0].mxu0
        %v1252 = vadd.f32 0.0, %v1251
        %v1253 = vpop.f32.mrb[0].mxu0
        %v1254 = vpop.f32.mrb[0].mxu0
        %v1255 = vpop.f32.mrb[0].mxu0
        %1256 = vdwg.mxu0
        %v1257 = vpack.c.bf16 %v1252, %v1252
        %1258 = vst [vmem:[#allocation5 + $0x8] sm:$0xf] %v1257
        %v1260 = vunpack.c.h.b16 %v947
        %v1261 = vpack.c.b16 %v1260, %v1260
        %1263 = vmatprep.subr.bf16.mxu0 0
        %1264 = vmatpush1.bf16.xpose.msra.mxu0 %v1261
        %1265 = vmatprep.subr.bf16.mxu0 0
        %1266 = vmatpush1.bf16.xpose.msra.mxu0 0
        %1267 = vmatprep.subr.bf16.mxu0 0
        %1268 = vmatpush1.bf16.xpose.msra.mxu0 0
        %1269 = vmatprep.subr.bf16.mxu0 0
        %1270 = vmatpush1.bf16.xpose.msra.mxu0 0
        %1271 = vmatprep.subr.bf16.mxu0 0
        %1272 = vmatpush1.bf16.xpose.msra.mxu0 0
        %1273 = vmatprep.subr.bf16.mxu0 0
        %1274 = vmatpush1.bf16.xpose.msra.mxu0 0
        %1275 = vmatprep.subr.bf16.mxu0 0
        %1276 = vmatpush1.bf16.xpose.msra.mxu0 0
        %1277 = vmatprep.subr.bf16.mxu0 0
        %1278 = vmatpush1.bf16.xpose.msra.mxu0 0
        %1279 = vmatprep.subr.bf16.mxu0 0
        %1280 = vmatpush1.bf16.xpose.msra.mxu0 0
        %1281 = vmatprep.subr.bf16.mxu0 0
        %1282 = vmatpush1.bf16.xpose.msra.mxu0 0
        %1283 = vmatprep.subr.bf16.mxu0 0
        %1284 = vmatpush1.bf16.xpose.msra.mxu0 0
        %1285 = vmatprep.subr.bf16.mxu0 0
        %1286 = vmatpush1.bf16.xpose.msra.mxu0 0
        %1287 = vmatprep.subr.bf16.mxu0 0
        %1288 = vmatpush1.bf16.xpose.msra.mxu0 0
        %1289 = vmatprep.subr.bf16.mxu0 0
        %1290 = vmatpush1.bf16.xpose.msra.mxu0 0
        %1291 = vmatprep.subr.bf16.mxu0 0
        %1292 = vmatpush1.bf16.xpose.msra.mxu0 0
        %1293 = vmatprep.subr.bf16.mxu0 0
        %1294 = vmatpush1.bf16.xpose.msra.mxu0 0
        %1295 = vmatprep.mubr.bf16.mxu0 0
        %1296 = vmatmul.mubr.bf16.gmra.mrb[0].mxu0 %v945
        %v1297 = vpop.f32.mrb[0].mxu0
        %v1298 = vadd.f32 0.0, %v1297
        %v1299 = vpop.f32.mrb[0].mxu0
        %v1300 = vpop.f32.mrb[0].mxu0
        %v1301 = vpop.f32.mrb[0].mxu0
        %1302 = vdwg.mxu0
        %v1303 = vsel %vm990, %v1298, -inf
        %1304 = vmax.xlane.f32.xlu0 %v1303
        %v1305 = vpop.xlane.xlu0 %1304
        %v1306 = vsub.f32 %v1298, %v1305
        %v1307 = vmul.f32 %v1306, 1.442695
        %v1308 = vpow.pop %v1307
        %v1309 = vsel %vm990, %v1308, 0.0
        %1310 = vadd.xlane.f32.xlu0 %v1309
        %v1311 = vpop.xlane.xlu0 %1310
        %v1312 = vrcp.pop %v1311
        %v1313 = vmul.f32 %v1308, %v1312
        %v1314 = vpack.c.bf16 %v1313, %v1313
        %v1316 = vunpack.c.h.b16 %v949
        %v1317 = vpack.c.b16 %v1316, %v1316
        %v1319 = vsel %vm990, %v1314, 0
        %v1322 = vsel %vm1006, %v1317, 0
        %1324 = vmatprep.subr.bf16.mxu0 0
        %1325 = vmatpush1.bf16.msra.mxu0 %v1322
        %1326 = vmatprep.subr.bf16.mxu0 0
        %1327 = vmatpush1.bf16.msra.mxu0 0
        %1328 = vmatprep.subr.bf16.mxu0 0
        %1329 = vmatpush1.bf16.msra.mxu0 0
        %1330 = vmatprep.subr.bf16.mxu0 0
        %1331 = vmatpush1.bf16.msra.mxu0 0
        %1332 = vmatprep.subr.bf16.mxu0 0
        %1333 = vmatpush1.bf16.msra.mxu0 0
        %1334 = vmatprep.subr.bf16.mxu0 0
        %1335 = vmatpush1.bf16.msra.mxu0 0
        %1336 = vmatprep.subr.bf16.mxu0 0
        %1337 = vmatpush1.bf16.msra.mxu0 0
        %1338 = vmatprep.subr.bf16.mxu0 0
        %1339 = vmatpush1.bf16.msra.mxu0 0
        %1340 = vmatprep.subr.bf16.mxu0 0
        %1341 = vmatpush1.bf16.msra.mxu0 0
        %1342 = vmatprep.subr.bf16.mxu0 0
        %1343 = vmatpush1.bf16.msra.mxu0 0
        %1344 = vmatprep.subr.bf16.mxu0 0
        %1345 = vmatpush1.bf16.msra.mxu0 0
        %1346 = vmatprep.subr.bf16.mxu0 0
        %1347 = vmatpush1.bf16.msra.mxu0 0
        %1348 = vmatprep.subr.bf16.mxu0 0
        %1349 = vmatpush1.bf16.msra.mxu0 0
        %1350 = vmatprep.subr.bf16.mxu0 0
        %1351 = vmatpush1.bf16.msra.mxu0 0
        %1352 = vmatprep.subr.bf16.mxu0 0
        %1353 = vmatpush1.bf16.msra.mxu0 0
        %1354 = vmatprep.subr.bf16.mxu0 0
        %1355 = vmatpush1.bf16.msra.mxu0 0
        %1356 = vmatprep.mubr.bf16.mxu0 0
        %1357 = vmatmul.mubr.bf16.gmra.mrb[0].mxu0 %v1319
        %v1358 = vpop.f32.mrb[0].mxu0
        %v1359 = vadd.f32 0.0, %v1358
        %v1360 = vpop.f32.mrb[0].mxu0
        %v1361 = vpop.f32.mrb[0].mxu0
        %v1362 = vpop.f32.mrb[0].mxu0
        %1363 = vdwg.mxu0
        %v1364 = vpack.c.bf16 %v1359, %v1359
        %1365 = vst [vmem:[#allocation5 + $0xc] sm:$0xf] %v1364
        %v1366 = vld [vmem:[#allocation5] sm:$0xff]
        %v1367 = vld [vmem:[#allocation5 + $0x8] sm:$0xff]
        %v1368 = vld [vmem:[%s9] sm:$0xf]
        %v1369 = vld [vmem:[%s9 + $0x4] sm:$0xf]
        %v1370 = vld [vmem:[%s9 + $0x8] sm:$0xf]
        %v1371 = vld [vmem:[%s9 + $0xc] sm:$0xf]
        %v1372 = vld [vmem:[%s9 + $0x10] sm:$0xf]
        %v1373 = vld [vmem:[%s9 + $0x14] sm:$0xf]
        %v1374 = vld [vmem:[%s9 + $0x18] sm:$0xf]
        %v1375 = vld [vmem:[%s9 + $0x1c] sm:$0xf]
        %v1376 = vld [vmem:[%s9 + $0x20] sm:$0xf]
        %v1377 = vld [vmem:[%s9 + $0x24] sm:$0xf]
        %v1378 = vld [vmem:[%s9 + $0x28] sm:$0xf]
        %v1379 = vld [vmem:[%s9 + $0x2c] sm:$0xf]
        %v1380 = vld [vmem:[%s9 + $0x30] sm:$0xf]
        %v1381 = vld [vmem:[%s9 + $0x34] sm:$0xf]
        %v1382 = vld [vmem:[%s9 + $0x38] sm:$0xf]
        %v1383 = vld [vmem:[%s9 + $0x3c] sm:$0xf]
        %v1384 = vld [vmem:[%s9 + $0x40] sm:$0xf]
        %v1385 = vld [vmem:[%s9 + $0x44] sm:$0xf]
        %v1386 = vld [vmem:[%s9 + $0x48] sm:$0xf]
        %v1387 = vld [vmem:[%s9 + $0x4c] sm:$0xf]
        %v1388 = vld [vmem:[%s9 + $0x50] sm:$0xf]
        %v1389 = vld [vmem:[%s9 + $0x54] sm:$0xf]
        %v1390 = vld [vmem:[%s9 + $0x58] sm:$0xf]
        %v1391 = vld [vmem:[%s9 + $0x5c] sm:$0xf]
        %v1392 = vld [vmem:[%s9 + $0x60] sm:$0xf]
        %v1393 = vld [vmem:[%s9 + $0x64] sm:$0xf]
        %v1394 = vld [vmem:[%s9 + $0x68] sm:$0xf]
        %v1395 = vld [vmem:[%s9 + $0x6c] sm:$0xf]
        %v1396 = vld [vmem:[%s9 + $0x70] sm:$0xf]
        %v1397 = vld [vmem:[%s9 + $0x74] sm:$0xf]
        %v1398 = vld [vmem:[%s9 + $0x78] sm:$0xf]
        %v1399 = vld [vmem:[%s9 + $0x7c] sm:$0xf]
        %v1400 = vld [vmem:[%s9 + $0x80] sm:$0xf]
        %v1401 = vld [vmem:[%s9 + $0x84] sm:$0xf]
        %v1402 = vld [vmem:[%s9 + $0x88] sm:$0xf]
        %v1403 = vld [vmem:[%s9 + $0x8c] sm:$0xf]
        %v1404 = vld [vmem:[%s9 + $0x90] sm:$0xf]
        %v1405 = vld [vmem:[%s9 + $0x94] sm:$0xf]
        %v1406 = vld [vmem:[%s9 + $0x98] sm:$0xf]
        %v1407 = vld [vmem:[%s9 + $0x9c] sm:$0xf]
        %v1408 = vld [vmem:[%s9 + $0xa0] sm:$0xf]
        %v1409 = vld [vmem:[%s9 + $0xa4] sm:$0xf]
        %v1410 = vld [vmem:[%s9 + $0xa8] sm:$0xf]
        %v1411 = vld [vmem:[%s9 + $0xac] sm:$0xf]
        %v1412 = vld [vmem:[%s9 + $0xb0] sm:$0xf]
        %v1413 = vld [vmem:[%s9 + $0xb4] sm:$0xf]
        %v1414 = vld [vmem:[%s9 + $0xb8] sm:$0xf]
        %v1415 = vld [vmem:[%s9 + $0xbc] sm:$0xf]
        %v1416 = vld [vmem:[%s9 + $0xc0] sm:$0xf]
        %v1417 = vld [vmem:[%s9 + $0xc4] sm:$0xf]
        %v1418 = vld [vmem:[%s9 + $0xc8] sm:$0xf]
        %v1419 = vld [vmem:[%s9 + $0xcc] sm:$0xf]
        %v1420 = vld [vmem:[%s9 + $0xd0] sm:$0xf]
        %v1421 = vld [vmem:[%s9 + $0xd4] sm:$0xf]
        %v1422 = vld [vmem:[%s9 + $0xd8] sm:$0xf]
        %v1423 = vld [vmem:[%s9 + $0xdc] sm:$0xf]
        %v1424 = vld [vmem:[%s9 + $0xe0] sm:$0xf]
        %v1425 = vld [vmem:[%s9 + $0xe4] sm:$0xf]
        %v1426 = vld [vmem:[%s9 + $0xe8] sm:$0xf]
        %v1427 = vld [vmem:[%s9 + $0xec] sm:$0xf]
        %v1428 = vld [vmem:[%s9 + $0xf0] sm:$0xf]
        %v1429 = vld [vmem:[%s9 + $0xf4] sm:$0xf]
        %v1430 = vld [vmem:[%s9 + $0xf8] sm:$0xf]
        %v1431 = vld [vmem:[%s9 + $0xfc] sm:$0xf]
        %v1432 = vld [vmem:[%s10] sm:$0x1]
        %v1434 = vlaneseq
        %v1435 = vshrl.u32 %v1434, 7
        %v1436 = vsub.s32 0, %v1435
        %v1437 = vrot.slane %v1432, %v1436
        %v1441 = vunpack.c.l.b16 %v1366
        %v1442 = vunpack.c.h.b16 %v1366
        %v1443 = vunpack.c.l.b16 %v1367
        %v1444 = vunpack.c.h.b16 %v1367
        %v1445 = vpack.c.b16 %v1441, %v1441
        %v1446 = vpack.c.b16 %v1442, %v1442
        %v1447 = vpack.c.b16 %v1443, %v1443
        %v1448 = vpack.c.b16 %v1444, %v1444
        %v1517 = vunpack.c.l.b16 %v1368
        %v1518 = vunpack.c.l.b16 %v1369
        %v1519 = vunpack.c.l.b16 %v1370
        %v1520 = vunpack.c.l.b16 %v1371
        %v1521 = vunpack.c.l.b16 %v1372
        %v1522 = vunpack.c.l.b16 %v1373
        %v1523 = vunpack.c.l.b16 %v1374
        %v1524 = vunpack.c.l.b16 %v1375
        %v1525 = vunpack.c.l.b16 %v1376
        %v1526 = vunpack.c.l.b16 %v1377
        %v1527 = vunpack.c.l.b16 %v1378
        %v1528 = vunpack.c.l.b16 %v1379
        %v1529 = vunpack.c.l.b16 %v1380
        %v1530 = vunpack.c.l.b16 %v1381
        %v1531 = vunpack.c.l.b16 %v1382
        %v1532 = vunpack.c.l.b16 %v1383
        %v1533 = vunpack.c.l.b16 %v1384
        %v1534 = vunpack.c.l.b16 %v1385
        %v1535 = vunpack.c.l.b16 %v1386
        %v1536 = vunpack.c.l.b16 %v1387
        %v1537 = vunpack.c.l.b16 %v1388
        %v1538 = vunpack.c.l.b16 %v1389
        %v1539 = vunpack.c.l.b16 %v1390
        %v1540 = vunpack.c.l.b16 %v1391
        %v1541 = vunpack.c.l.b16 %v1392
        %v1542 = vunpack.c.l.b16 %v1393
        %v1543 = vunpack.c.l.b16 %v1394
        %v1544 = vunpack.c.l.b16 %v1395
        %v1545 = vunpack.c.l.b16 %v1396
        %v1546 = vunpack.c.l.b16 %v1397
        %v1547 = vunpack.c.l.b16 %v1398
        %v1548 = vunpack.c.l.b16 %v1399
        %v1549 = vunpack.c.l.b16 %v1400
        %v1550 = vunpack.c.l.b16 %v1401
        %v1551 = vunpack.c.l.b16 %v1402
        %v1552 = vunpack.c.l.b16 %v1403
        %v1553 = vunpack.c.l.b16 %v1404
        %v1554 = vunpack.c.l.b16 %v1405
        %v1555 = vunpack.c.l.b16 %v1406
        %v1556 = vunpack.c.l.b16 %v1407
        %v1557 = vunpack.c.l.b16 %v1408
        %v1558 = vunpack.c.l.b16 %v1409
        %v1559 = vunpack.c.l.b16 %v1410
        %v1560 = vunpack.c.l.b16 %v1411
        %v1561 = vunpack.c.l.b16 %v1412
        %v1562 = vunpack.c.l.b16 %v1413
        %v1563 = vunpack.c.l.b16 %v1414
        %v1564 = vunpack.c.l.b16 %v1415
        %v1565 = vunpack.c.l.b16 %v1416
        %v1566 = vunpack.c.l.b16 %v1417
        %v1567 = vunpack.c.l.b16 %v1418
        %v1568 = vunpack.c.l.b16 %v1419
        %v1569 = vunpack.c.l.b16 %v1420
        %v1570 = vunpack.c.l.b16 %v1421
        %v1571 = vunpack.c.l.b16 %v1422
        %v1572 = vunpack.c.l.b16 %v1423
        %v1573 = vunpack.c.l.b16 %v1424
        %v1574 = vunpack.c.l.b16 %v1425
        %v1575 = vunpack.c.l.b16 %v1426
        %v1576 = vunpack.c.l.b16 %v1427
        %v1577 = vunpack.c.l.b16 %v1428
        %v1578 = vunpack.c.l.b16 %v1429
        %v1579 = vunpack.c.l.b16 %v1430
        %v1580 = vunpack.c.l.b16 %v1431
        %v1581 = vpack.c.b16 %v1518, %v1517
        %v1582 = vpack.c.b16 %v1520, %v1519
        %v1583 = vpack.c.b16 %v1522, %v1521
        %v1584 = vpack.c.b16 %v1524, %v1523
        %v1585 = vpack.c.b16 %v1526, %v1525
        %v1586 = vpack.c.b16 %v1528, %v1527
        %v1587 = vpack.c.b16 %v1530, %v1529
        %v1588 = vpack.c.b16 %v1532, %v1531
        %v1589 = vpack.c.b16 %v1534, %v1533
        %v1590 = vpack.c.b16 %v1536, %v1535
        %v1591 = vpack.c.b16 %v1538, %v1537
        %v1592 = vpack.c.b16 %v1540, %v1539
        %v1593 = vpack.c.b16 %v1542, %v1541
        %v1594 = vpack.c.b16 %v1544, %v1543
        %v1595 = vpack.c.b16 %v1546, %v1545
        %v1596 = vpack.c.b16 %v1548, %v1547
        %v1597 = vpack.c.b16 %v1550, %v1549
        %v1598 = vpack.c.b16 %v1552, %v1551
        %v1599 = vpack.c.b16 %v1554, %v1553
        %v1600 = vpack.c.b16 %v1556, %v1555
        %v1601 = vpack.c.b16 %v1558, %v1557
        %v1602 = vpack.c.b16 %v1560, %v1559
        %v1603 = vpack.c.b16 %v1562, %v1561
        %v1604 = vpack.c.b16 %v1564, %v1563
        %v1605 = vpack.c.b16 %v1566, %v1565
        %v1606 = vpack.c.b16 %v1568, %v1567
        %v1607 = vpack.c.b16 %v1570, %v1569
        %v1608 = vpack.c.b16 %v1572, %v1571
        %v1609 = vpack.c.b16 %v1574, %v1573
        %v1610 = vpack.c.b16 %v1576, %v1575
        %v1611 = vpack.c.b16 %v1578, %v1577
        %v1612 = vpack.c.b16 %v1580, %v1579
        %1645 = vmatprep.subr.bf16.mxu0 0
        %1646 = vmatpush1.bf16.msra.mxu0 %v1581
        %1647 = vmatprep.subr.bf16.mxu0 0
        %1648 = vmatpush1.bf16.msra.mxu0 %v1582
        %1649 = vmatprep.subr.bf16.mxu0 0
        %1650 = vmatpush1.bf16.msra.mxu0 %v1583
        %1651 = vmatprep.subr.bf16.mxu0 0
        %1652 = vmatpush1.bf16.msra.mxu0 %v1584
        %1653 = vmatprep.subr.bf16.mxu0 0
        %1654 = vmatpush1.bf16.msra.mxu0 %v1585
        %1655 = vmatprep.subr.bf16.mxu0 0
        %1656 = vmatpush1.bf16.msra.mxu0 %v1586
        %1657 = vmatprep.subr.bf16.mxu0 0
        %1658 = vmatpush1.bf16.msra.mxu0 %v1587
        %1659 = vmatprep.subr.bf16.mxu0 0
        %1660 = vmatpush1.bf16.msra.mxu0 %v1588
        %1661 = vmatprep.subr.bf16.mxu0 0
        %1662 = vmatpush1.bf16.msra.mxu0 %v1589
        %1663 = vmatprep.subr.bf16.mxu0 0
        %1664 = vmatpush1.bf16.msra.mxu0 %v1590
        %1665 = vmatprep.subr.bf16.mxu0 0
        %1666 = vmatpush1.bf16.msra.mxu0 %v1591
        %1667 = vmatprep.subr.bf16.mxu0 0
        %1668 = vmatpush1.bf16.msra.mxu0 %v1592
        %1669 = vmatprep.subr.bf16.mxu0 0
        %1670 = vmatpush1.bf16.msra.mxu0 %v1593
        %1671 = vmatprep.subr.bf16.mxu0 0
        %1672 = vmatpush1.bf16.msra.mxu0 %v1594
        %1673 = vmatprep.subr.bf16.mxu0 0
        %1674 = vmatpush1.bf16.msra.mxu0 %v1595
        %1675 = vmatprep.subr.bf16.mxu0 0
        %1676 = vmatpush1.bf16.msra.mxu0 %v1596
        %1677 = vmatprep.mubr.bf16.mxu0 %v1446
        %1678 = vmatmul.mubr.bf16.gmra.mrb[0].mxu0 %v1445
        %v1679 = vpop.f32.mrb[0].mxu0
        %v1680 = vadd.f32 %v1437, %v1679
        %v1681 = vpop.f32.mrb[0].mxu0
        %v1682 = vpop.f32.mrb[0].mxu0
        %v1683 = vpop.f32.mrb[0].mxu0
        %1684 = vdwg.mxu0
        %1685 = vmatprep.subr.bf16.mxu0 0
        %1686 = vmatpush1.bf16.msra.mxu0 %v1597
        %1687 = vmatprep.subr.bf16.mxu0 0
        %1688 = vmatpush1.bf16.msra.mxu0 %v1598
        %1689 = vmatprep.subr.bf16.mxu0 0
        %1690 = vmatpush1.bf16.msra.mxu0 %v1599
        %1691 = vmatprep.subr.bf16.mxu0 0
        %1692 = vmatpush1.bf16.msra.mxu0 %v1600
        %1693 = vmatprep.subr.bf16.mxu0 0
        %1694 = vmatpush1.bf16.msra.mxu0 %v1601
        %1695 = vmatprep.subr.bf16.mxu0 0
        %1696 = vmatpush1.bf16.msra.mxu0 %v1602
        %1697 = vmatprep.subr.bf16.mxu0 0
        %1698 = vmatpush1.bf16.msra.mxu0 %v1603
        %1699 = vmatprep.subr.bf16.mxu0 0
        %1700 = vmatpush1.bf16.msra.mxu0 %v1604
        %1701 = vmatprep.subr.bf16.mxu0 0
        %1702 = vmatpush1.bf16.msra.mxu0 %v1605
        %1703 = vmatprep.subr.bf16.mxu0 0
        %1704 = vmatpush1.bf16.msra.mxu0 %v1606
        %1705 = vmatprep.subr.bf16.mxu0 0
        %1706 = vmatpush1.bf16.msra.mxu0 %v1607
        %1707 = vmatprep.subr.bf16.mxu0 0
        %1708 = vmatpush1.bf16.msra.mxu0 %v1608
        %1709 = vmatprep.subr.bf16.mxu0 0
        %1710 = vmatpush1.bf16.msra.mxu0 %v1609
        %1711 = vmatprep.subr.bf16.mxu0 0
        %1712 = vmatpush1.bf16.msra.mxu0 %v1610
        %1713 = vmatprep.subr.bf16.mxu0 0
        %1714 = vmatpush1.bf16.msra.mxu0 %v1611
        %1715 = vmatprep.subr.bf16.mxu0 0
        %1716 = vmatpush1.bf16.msra.mxu0 %v1612
        %1717 = vmatprep.mubr.bf16.mxu0 %v1448
        %1718 = vmatmul.mubr.bf16.gmra.mrb[0].mxu0 %v1447
        %v1719 = vpop.f32.mrb[0].mxu0
        %v1720 = vadd.f32 %v1680, %v1719
        %v1721 = vpop.f32.mrb[0].mxu0
        %v1722 = vpop.f32.mrb[0].mxu0
        %v1723 = vpop.f32.mrb[0].mxu0
        %1724 = vdwg.mxu0
        %1725 = vst.msk [vmem:[%s391] sm:$0xff] %vm856, %v1720
        %s1726 = sand.u32 %s283, 1
        %s1727 = scalar_lea.sflag [#allocation7], %s1726
        %s1728 = sand.u32 %s283, 1
        %s1729 = smul.addr %s1728, 8
        %s1730 = scalar_lea.vmem [#allocation6], %s1729
        // Predicated region
        $region69: #{tpu_custom_call.1} parent=63 // pred_check
          %p1731 = pneg %p293
        $region70: #{tpu_custom_call.1} parent=63 // pred_check_branch
          %1733 = sbr.rel (%p1731) target = $region72
        $region71: #{tpu_custom_call.1} parent=63 // pred_region
          %s1735 = ssub.s32 128, 128
          %1736 = vsyncadd %s1727, %s1735
          %s1737 = sadd.s32 %s30, %s29
          %s1738 = smul.addr %s1737, 128
          %s1739 = scalar_lea.hbm %s11, %s1738
          %s1741 = sshll.u32 %s1730, 4
          %s1742 = int_to_ptr.vmem [resolvable:$true] %s1741
          %1744 = dma.vmem_to_hbm [thread:$0]  %s1742, 128, %s1739, %s1727
        $region72: #{tpu_custom_call.1} parent=63 // pred_fallthru
          _
      $region64: #{tpu_custom_call.1} parent=5 // pred_fallthru
        _
      %p1745 = scmp.le.s32.totalorder 2, %s20
      // Predicated region
      $region73: #{tpu_custom_call.1} parent=5 // pred_check
        %p1746 = pneg %p1745
      $region74: #{tpu_custom_call.1} parent=5 // pred_check_branch
        %1748 = sbr.rel (%p1746) target = $region76
      $region75: #{tpu_custom_call.1} parent=5 // pred_region
        %s1749 = ssub.s32 %s20, 2
        // Predicated region
        $region77: #{tpu_custom_call.1} parent=75 // pred_check
          %p1750 = pneg %p299
        $region78: #{tpu_custom_call.1} parent=75 // pred_check_branch
          %1752 = sbr.rel (%p1750) target = $region80
        $region79: #{tpu_custom_call.1} parent=75 // pred_region
          %s1753 = sand.u32 %s284, 1
          %s1754 = scalar_lea.sflag [#allocation7], %s1753
          %s1755 = sand.u32 %s284, 1
          %s1756 = smul.addr %s1755, 8
          %s1757 = scalar_lea.vmem [#allocation6], %s1756
          %1758 = dma.done %s1754, 128
        $region80: #{tpu_custom_call.1} parent=75 // pred_fallthru
          _
      $region76: #{tpu_custom_call.1} parent=5 // pred_fallthru
        _
    $region6: #{tpu_custom_call.1} parent=1 // loop_footer
      %s24 = sadd.s32 1, %s20
    $region7: #{tpu_custom_call.1} parent=1 // loop_footer_branch
      %19 = sbr.rel target = $region3
    $region8: #{tpu_custom_call.1} parent=1 // loop_exit
      _
    %1759 = vsyncpa [#allocation7], 1
    %s1760 = scalar_lea.sflag [#allocation7], 1
    %1761 = vsyncpa %s1760, 1

</llo_original>
